<compile_context>
chip_gen: v6e
topology: v6e:2x2x1
jax: 0.10.0
libtpu: 0.0.40
codegen_flags: <defaults>
</compile_context>

<pallas_src>
import math

import jax
import jax.numpy as jnp
from jax import lax
from jax.experimental import pallas as pl
from jax.experimental.pallas import tpu as pltpu

# ----------------------------- config ---------------------------------------
B = 2
T = 16                 # context length (original 77)
VOCAB = 128            # original 49408
WIDTH = 128            # original 1024 (lane-dense: multiple of 128)
HEADS = 2              # original 16
HEAD_DIM = WIDTH // HEADS   # 64, same as the original
LAYERS = 3             # original 24
MLP = 4 * WIDTH
LN_EPS = 1e-5
NEG_INF = -1e30        # additive causal-mask value (exp underflows to exactly 0)
BT = B * T             # flattened (batch*seq) slab rows


# --------------------------- fused transformer kernel -----------------------
def _text_transformer_kernel(
    x_ref, mask_ref,
    ln1g_ref, ln1b_ref, qkvw_ref, qkvb_ref, outw_ref, outb_ref,
    ln2g_ref, ln2b_ref, fc1w_ref, fc1b_ref, fc2w_ref, fc2b_ref,
    lnfg_ref, lnfb_ref,
    o_ref, h_ref, attn_ref,
):
    l = pl.program_id(0)
    n_layers = pl.num_programs(0)

    # layer 0: seed the resident residual stream with (tok_emb + pos_emb), flattened (B*T, D)
    @pl.when(l == 0)
    def _():
        h_ref[...] = x_ref[...]

    h = h_ref[...]                                            # (B*T, D) f32 residual stream

    inv_d = 1.0 / WIDTH

    def _ln(x, g, b):
        # one-pass stats: sum and sum-of-squares -> mean / var
        s1 = jnp.sum(x, axis=-1, keepdims=True)
        s2 = jnp.sum(x * x, axis=-1, keepdims=True)
        mu = s1 * inv_d
        var = s2 * inv_d - mu * mu
        return (x - mu) * lax.rsqrt(var + LN_EPS) * g + b

    # ---- attention sublayer: LN -> fused QKV -> per-(batch,head) SDPA -> out-proj -> +res ----
    x = _ln(h, ln1g_ref[0], ln1b_ref[0])
    qkv = jnp.dot(x.astype(jnp.bfloat16), qkvw_ref[0],
                  preferred_element_type=jnp.float32) + qkvb_ref[0]       # (B*T, 3D)
    q = qkv[:, 0 * WIDTH:1 * WIDTH]       # 1/sqrt(Dh) already folded into W_q / b_q
    k = qkv[:, 1 * WIDTH:2 * WIDTH]
    v = qkv[:, 2 * WIDTH:3 * WIDTH]

    mask = mask_ref[...]                                      # (T, T) additive causal mask
    for b in range(B):                                        # static unrolled (batch, head) loops
        r0 = b * T
        for hh in range(HEADS):
            c0 = hh * HEAD_DIM
            qh = q[r0:r0 + T, c0:c0 + HEAD_DIM].astype(jnp.bfloat16)
            kh = k[r0:r0 + T, c0:c0 + HEAD_DIM].astype(jnp.bfloat16)
            vh = v[r0:r0 + T, c0:c0 + HEAD_DIM].astype(jnp.bfloat16)
            # contraction on last dim of both operands: no explicit kh.T transpose
            s = lax.dot_general(qh, kh, (((1,), (1,)), ((), ())),
                                preferred_element_type=jnp.float32) + mask
            s = s - jnp.max(s, axis=-1, keepdims=True)
            p = jnp.exp(s)
            inv = pl.reciprocal(jnp.sum(p, axis=-1, keepdims=True), approx=True)
            oh = jnp.dot(p.astype(jnp.bfloat16), vh,
                         preferred_element_type=jnp.float32) * inv        # (T, Dh)
            # write directly at the head's lane offset -> no concatenate, no extra vregs
            attn_ref[pl.ds(r0, T), pl.ds(c0, HEAD_DIM)] = oh

    attn = jnp.dot(attn_ref[...].astype(jnp.bfloat16), outw_ref[0],
                   preferred_element_type=jnp.float32) + outb_ref[0]      # (B*T, D)
    h = h + attn                                              # fused residual add

    # ---- MLP sublayer: LN -> fc1 + GELU(erf) -> fc2 -> +residual (all fused) ----
    x = _ln(h, ln2g_ref[0], ln2b_ref[0])
    y = jnp.dot(x.astype(jnp.bfloat16), fc1w_ref[0],
                preferred_element_type=jnp.float32) + fc1b_ref[0]
    y = 0.5 * y * (1.0 + lax.erf(y * (1.0 / math.sqrt(2.0))))             # exact nn.GELU
    y = jnp.dot(y.astype(jnp.bfloat16), fc2w_ref[0],
                preferred_element_type=jnp.float32) + fc2b_ref[0]
    h = h + y

    h_ref[...] = h

    # final grid step: fuse ln_final and emit the (B*T, D) lane-dense output slab
    @pl.when(l == n_layers - 1)
    def _():
        o_ref[...] = _ln(h, lnfg_ref[...], lnfb_ref[...]).astype(o_ref.dtype)


# ------------------------------ params --------------------------------------
def init_params(key):
    keys = iter(jax.random.split(key, 64))

    def nrm(shape, scale=0.02):
        return scale * jax.random.normal(next(keys), shape, dtype=jnp.float32)

    return {
        "tok_emb": nrm((VOCAB, WIDTH)),
        "pos_emb": nrm((T, WIDTH)),
        # stacked per-layer weights (leading layer axis, streamed via BlockSpec index maps);
        # matmul weights bf16, LN params / biases f32.
        "ln1_g": (1.0 + nrm((LAYERS, 1, WIDTH))).astype(jnp.float32),
        "ln1_b": nrm((LAYERS, 1, WIDTH)),
        "qkv_w": nrm((LAYERS, WIDTH, 3 * WIDTH)).astype(jnp.bfloat16),
        "qkv_b": nrm((LAYERS, 1, 3 * WIDTH)),
        "out_w": nrm((LAYERS, WIDTH, WIDTH)).astype(jnp.bfloat16),
        "out_b": nrm((LAYERS, 1, WIDTH)),
        "ln2_g": (1.0 + nrm((LAYERS, 1, WIDTH))).astype(jnp.float32),
        "ln2_b": nrm((LAYERS, 1, WIDTH)),
        "fc1_w": nrm((LAYERS, WIDTH, MLP)).astype(jnp.bfloat16),
        "fc1_b": nrm((LAYERS, 1, MLP)),
        "fc2_w": nrm((LAYERS, MLP, WIDTH)).astype(jnp.bfloat16),
        "fc2_b": nrm((LAYERS, 1, WIDTH)),
        "lnf_g": (1.0 + nrm((1, WIDTH))).astype(jnp.float32),
        "lnf_b": nrm((1, WIDTH)),
    }


def fold_attention_scale(params):
    """Fold the 1/sqrt(head_dim) attention scale into the q third of the frozen QKV
    weights/bias (done once at load time; exact in bf16 since Dh=64 -> scale=0.125)."""
    scale = HEAD_DIM ** -0.5
    m = jnp.concatenate([jnp.full((WIDTH,), scale, jnp.float32),
                         jnp.ones((2 * WIDTH,), jnp.float32)])
    p = dict(params)
    p["qkv_w"] = (params["qkv_w"].astype(jnp.float32) * m).astype(jnp.bfloat16)
    p["qkv_b"] = params["qkv_b"] * m
    return p


def build_attn_mask():
    # open_clip: upper-triangular additive -inf causal mask
    idx = jnp.arange(T)
    return jnp.where(idx[None, :] > idx[:, None], NEG_INF, 0.0).astype(jnp.float32)


# ------------------------------ forward -------------------------------------
def frozen_open_clip_embedder(params, tokens, layer="last"):
    """encode_with_transformer: embeddings -> causal transformer -> ln_final."""
    # token_embedding lookup + positional add: data-dependent gather, done in JAX glue.
    # TODO(synk): move the embedding gather into Pallas with scalar-prefetch + pl.Element rows.
    x = jnp.take(params["tok_emb"], tokens, axis=0) + params["pos_emb"][None]   # (B, T, D) f32
    x = x.reshape(BT, WIDTH)                       # flattened (B*T, D) slab for the kernel
    mask = build_attn_mask()

    fp = fold_attention_scale(params)

    layer_idx = 0 if layer == "last" else 1        # 'penultimate' drops the last resblock
    n_active = LAYERS - layer_idx

    grid_spec = pltpu.PrefetchScalarGridSpec(
        num_scalar_prefetch=0,
        grid=(n_active,),                          # single sequential layer axis
        in_specs=[
            pl.BlockSpec((BT, WIDTH), lambda l: (0, 0)),                  # x (tok+pos emb)
            pl.BlockSpec((T, T), lambda l: (0, 0)),                       # attn_mask
            pl.BlockSpec((1, 1, WIDTH), lambda l: (l, 0, 0)),             # ln1_g
            pl.BlockSpec((1, 1, WIDTH), lambda l: (l, 0, 0)),             # ln1_b
            pl.BlockSpec((1, WIDTH, 3 * WIDTH), lambda l: (l, 0, 0)),     # qkv_w
            pl.BlockSpec((1, 1, 3 * WIDTH), lambda l: (l, 0, 0)),         # qkv_b
            pl.BlockSpec((1, WIDTH, WIDTH), lambda l: (l, 0, 0)),         # out_w
            pl.BlockSpec((1, 1, WIDTH), lambda l: (l, 0, 0)),             # out_b
            pl.BlockSpec((1, 1, WIDTH), lambda l: (l, 0, 0)),             # ln2_g
            pl.BlockSpec((1, 1, WIDTH), lambda l: (l, 0, 0)),             # ln2_b
            pl.BlockSpec((1, WIDTH, MLP), lambda l: (l, 0, 0)),           # fc1_w
            pl.BlockSpec((1, 1, MLP), lambda l: (l, 0, 0)),               # fc1_b
            pl.BlockSpec((1, MLP, WIDTH), lambda l: (l, 0, 0)),           # fc2_w
            pl.BlockSpec((1, 1, WIDTH), lambda l: (l, 0, 0)),             # fc2_b
            pl.BlockSpec((1, WIDTH), lambda l: (0, 0)),                   # lnf_g
            pl.BlockSpec((1, WIDTH), lambda l: (0, 0)),                   # lnf_b
        ],
        out_specs=pl.BlockSpec((BT, WIDTH), lambda l: (0, 0)),
        scratch_shapes=[
            pltpu.VMEM((BT, WIDTH), jnp.float32),   # resident residual stream
            pltpu.VMEM((BT, WIDTH), jnp.float32),   # merged-head attention output slab
        ],
    )

    out = pl.pallas_call(
        _text_transformer_kernel,
        out_shape=jax.ShapeDtypeStruct((BT, WIDTH), jnp.float32),
        grid_spec=grid_spec,
        compiler_params=pltpu.CompilerParams(
            dimension_semantics=("arbitrary",),
            vmem_limit_bytes=48 << 20,              # above v5e/v6e default scoped limits
        ),
    )(
        x, mask,
        fp["ln1_g"], fp["ln1_b"], fp["qkv_w"], fp["qkv_b"],
        fp["out_w"], fp["out_b"], fp["ln2_g"], fp["ln2_b"],
        fp["fc1_w"], fp["fc1_b"], fp["fc2_w"], fp["fc2_b"],
        fp["lnf_g"], fp["lnf_b"],
    )
    return out.reshape(B, T, WIDTH)


# --------------------------- pure-JAX reference ------------------------------
def reference_forward(params, tokens, layer="last"):
    x = jnp.take(params["tok_emb"], tokens, axis=0) + params["pos_emb"][None]
    mask = build_attn_mask()
    n_active = LAYERS - (0 if layer == "last" else 1)
    scale = HEAD_DIM ** -0.5

    def ln(v, g, b):
        mu = jnp.mean(v, -1, keepdims=True)
        var = jnp.mean(jnp.square(v - mu), -1, keepdims=True)
        return (v - mu) / jnp.sqrt(var + LN_EPS) * g + b

    def split_heads(t):
        return t.reshape(B, T, HEADS, HEAD_DIM).transpose(0, 2, 1, 3)

    for l in range(n_active):
        xin = ln(x, params["ln1_g"][l, 0], params["ln1_b"][l, 0])
        qkv = xin @ params["qkv_w"][l].astype(jnp.float32) + params["qkv_b"][l, 0]
        q, k, v = jnp.split(qkv, 3, axis=-1)
        q, k, v = split_heads(q) * scale, split_heads(k), split_heads(v)
        s = jnp.einsum("bhqd,bhkd->bhqk", q, k) + mask
        p = jax.nn.softmax(s, axis=-1)
        o = jnp.einsum("bhqk,bhkd->bhqd", p, v)
        o = o.transpose(0, 2, 1, 3).reshape(B, T, WIDTH)
        o = o @ params["out_w"][l].astype(jnp.float32) + params["out_b"][l, 0]
        x = x + o
        xin = ln(x, params["ln2_g"][l, 0], params["ln2_b"][l, 0])
        y = xin @ params["fc1_w"][l].astype(jnp.float32) + params["fc1_b"][l, 0]
        y = 0.5 * y * (1.0 + lax.erf(y * (1.0 / math.sqrt(2.0))))
        y = y @ params["fc2_w"][l].astype(jnp.float32) + params["fc2_b"][l, 0]
        x = x + y
    return ln(x, params["lnf_g"][0], params["lnf_b"][0])


# ------------------------------- main ----------------------------------------
if __name__ == "__main__":
    key = jax.random.PRNGKey(0)
    k_tok, k_par = jax.random.split(key)
    # synthetic integer tokens stand in for open_clip.tokenize(text)
    tokens = jax.random.randint(k_tok, (B, T), 0, VOCAB, dtype=jnp.int32)
    params = init_params(k_par)

    out = frozen_open_clip_embedder(params, tokens, layer="last")
    out = jax.block_until_ready(out)

    assert out.shape == (B, T, WIDTH), out.shape
    assert out.dtype == jnp.float32
    assert bool(jnp.all(jnp.isfinite(out)))

    # end-to-end semantic check vs. a pure-JAX reference (cosine similarity, since bf16
    # MXU operands + approx softmax reciprocal preclude tight elementwise tolerances)
    ref = reference_forward(params, tokens, layer="last")
    a = out.reshape(-1).astype(jnp.float32)
    b = ref.reshape(-1).astype(jnp.float32)
    cos = jnp.dot(a, b) / (jnp.linalg.norm(a) * jnp.linalg.norm(b) + 1e-12)
    assert float(cos) > 0.99, float(cos)

    print("KERNEL_OK")
</pallas_src>

<mosaic_0001>
module attributes {stable_mosaic.version = 11 : i64} {
  func.func @_text_transformer_kernel(%arg0: i32, %arg1: memref<32x128xf32, #tpu.memory_space<vmem>>, %arg2: memref<16x16xf32, #tpu.memory_space<vmem>>, %arg3: memref<1x1x128xf32, #tpu.memory_space<vmem>>, %arg4: memref<1x1x128xf32, #tpu.memory_space<vmem>>, %arg5: memref<1x128x384xbf16, #tpu.memory_space<vmem>>, %arg6: memref<1x1x384xf32, #tpu.memory_space<vmem>>, %arg7: memref<1x128x128xbf16, #tpu.memory_space<vmem>>, %arg8: memref<1x1x128xf32, #tpu.memory_space<vmem>>, %arg9: memref<1x1x128xf32, #tpu.memory_space<vmem>>, %arg10: memref<1x1x128xf32, #tpu.memory_space<vmem>>, %arg11: memref<1x128x512xbf16, #tpu.memory_space<vmem>>, %arg12: memref<1x1x512xf32, #tpu.memory_space<vmem>>, %arg13: memref<1x512x128xbf16, #tpu.memory_space<vmem>>, %arg14: memref<1x1x128xf32, #tpu.memory_space<vmem>>, %arg15: memref<1x128xf32, #tpu.memory_space<vmem>>, %arg16: memref<1x128xf32, #tpu.memory_space<vmem>>, %arg17: memref<32x128xf32, #tpu.memory_space<vmem>>, %arg18: memref<32x128xf32, #tpu.memory_space<vmem>>, %arg19: memref<32x128xf32, #tpu.memory_space<vmem>>) attributes {dimension_semantics = [#tpu.dimension_semantics<arbitrary>], iteration_bounds = array<i64: 3>, scalar_prefetch = 0 : i64, scratch_operands = 2 : i64, tpu.core_type = #tpu.core_type<tc>, window_params = [{pipeline_mode = #tpu.pipeline_mode<synchronous>, transform_indices = @transform_0, window_bounds = array<i64: 32, 128>}, {pipeline_mode = #tpu.pipeline_mode<synchronous>, transform_indices = @transform_1, window_bounds = array<i64: 16, 16>}, {transform_indices = @transform_2, window_bounds = array<i64: 1, 1, 128>}, {transform_indices = @transform_3, window_bounds = array<i64: 1, 1, 128>}, {transform_indices = @transform_4, window_bounds = array<i64: 1, 128, 384>}, {transform_indices = @transform_5, window_bounds = array<i64: 1, 1, 384>}, {transform_indices = @transform_6, window_bounds = array<i64: 1, 128, 128>}, {transform_indices = @transform_7, window_bounds = array<i64: 1, 1, 128>}, {transform_indices = @transform_8, window_bounds = array<i64: 1, 1, 128>}, {transform_indices = @transform_9, window_bounds = array<i64: 1, 1, 128>}, {transform_indices = @transform_10, window_bounds = array<i64: 1, 128, 512>}, {transform_indices = @transform_11, window_bounds = array<i64: 1, 1, 512>}, {transform_indices = @transform_12, window_bounds = array<i64: 1, 512, 128>}, {transform_indices = @transform_13, window_bounds = array<i64: 1, 1, 128>}, {pipeline_mode = #tpu.pipeline_mode<synchronous>, transform_indices = @transform_14, window_bounds = array<i64: 1, 128>}, {pipeline_mode = #tpu.pipeline_mode<synchronous>, transform_indices = @transform_15, window_bounds = array<i64: 1, 128>}, {pipeline_mode = #tpu.pipeline_mode<synchronous>, transform_indices = @transform_16, window_bounds = array<i64: 32, 128>}]} {
    %c0_i32 = arith.constant 0 : i32
    %0 = arith.cmpi eq, %arg0, %c0_i32 : i32
    %1 = arith.extui %0 : i1 to i32
    %c0_i32_0 = arith.constant 0 : i32
    %2 = arith.cmpi ne, %1, %c0_i32_0 : i32
    scf.if %2 {
      %c0_83 = arith.constant 0 : index
      %c0_84 = arith.constant 0 : index
      %191 = vector.load %arg1[%c0_83, %c0_84] : memref<32x128xf32, #tpu.memory_space<vmem>>, vector<32x128xf32>
      %c0_85 = arith.constant 0 : index
      %c0_86 = arith.constant 0 : index
      %192 = vector.load %arg18[%c0_85, %c0_86] : memref<32x128xf32, #tpu.memory_space<vmem>>, vector<32x128xf32>
      tpu.vector_store %arg18[%c0_85, %c0_86], %191 {strides = array<i32>} : memref<32x128xf32, #tpu.memory_space<vmem>>, vector<32x128xf32>,
    } else {
    }
    %c0 = arith.constant 0 : index
    %c0_1 = arith.constant 0 : index
    %3 = vector.load %arg18[%c0, %c0_1] : memref<32x128xf32, #tpu.memory_space<vmem>>, vector<32x128xf32>
    %c0_2 = arith.constant 0 : index
    %c0_3 = arith.constant 0 : index
    %c0_4 = arith.constant 0 : index
    %4 = vector.load %arg3[%c0_2, %c0_3, %c0_4] : memref<1x1x128xf32, #tpu.memory_space<vmem>>, vector<1x1x128xf32>
    %5 = vector.shape_cast %4 : vector<1x1x128xf32> to vector<1x128xf32>
    %c0_5 = arith.constant 0 : index
    %c0_6 = arith.constant 0 : index
    %c0_7 = arith.constant 0 : index
    %6 = vector.load %arg4[%c0_5, %c0_6, %c0_7] : memref<1x1x128xf32, #tpu.memory_space<vmem>>, vector<1x1x128xf32>
    %7 = vector.shape_cast %6 : vector<1x1x128xf32> to vector<1x128xf32>
    %cst = arith.constant dense<0.000000e+00> : vector<32xf32>
    %8 = vector.multi_reduction <add>, %3, %cst [1] : vector<32x128xf32> to vector<32xf32>
    %9 = vector.shape_cast %8 : vector<32xf32> to vector<32x1xf32>
    %10 = arith.mulf %3, %3 : vector<32x128xf32>
    %cst_8 = arith.constant dense<0.000000e+00> : vector<32xf32>
    %11 = vector.multi_reduction <add>, %10, %cst_8 [1] : vector<32x128xf32> to vector<32xf32>
    %12 = vector.shape_cast %11 : vector<32xf32> to vector<32x1xf32>
    %cst_9 = arith.constant 7.812500e-03 : f32
    %13 = vector.broadcast %cst_9 : f32 to vector<32x1xf32>
    %14 = arith.mulf %9, %13 : vector<32x1xf32>
    %cst_10 = arith.constant 7.812500e-03 : f32
    %15 = vector.broadcast %cst_10 : f32 to vector<32x1xf32>
    %16 = arith.mulf %12, %15 : vector<32x1xf32>
    %17 = arith.mulf %14, %14 : vector<32x1xf32>
    %18 = arith.subf %16, %17 : vector<32x1xf32>
    %19 = vector.broadcast %14 : vector<32x1xf32> to vector<32x128xf32>
    %20 = arith.subf %3, %19 : vector<32x128xf32>
    %cst_11 = arith.constant 9.99999974E-6 : f32
    %21 = vector.broadcast %cst_11 : f32 to vector<32x1xf32>
    %22 = arith.addf %18, %21 : vector<32x1xf32>
    %23 = math.rsqrt %22 : vector<32x1xf32>
    %24 = vector.broadcast %23 : vector<32x1xf32> to vector<32x128xf32>
    %25 = arith.mulf %20, %24 : vector<32x128xf32>
    %26 = vector.broadcast %5 : vector<1x128xf32> to vector<32x128xf32>
    %27 = arith.mulf %25, %26 : vector<32x128xf32>
    %28 = vector.broadcast %7 : vector<1x128xf32> to vector<32x128xf32>
    %29 = arith.addf %27, %28 : vector<32x128xf32>
    %30 = arith.truncf %29 : vector<32x128xf32> to vector<32x128xbf16>
    %c0_12 = arith.constant 0 : index
    %c0_13 = arith.constant 0 : index
    %c0_14 = arith.constant 0 : index
    %31 = vector.load %arg5[%c0_12, %c0_13, %c0_14] : memref<1x128x384xbf16, #tpu.memory_space<vmem>>, vector<1x128x384xbf16>
    %32 = vector.shape_cast %31 : vector<1x128x384xbf16> to vector<128x384xbf16>
    %cst_15 = arith.constant dense<0.000000e+00> : vector<32x384xf32>
    %33 = tpu.matmul %30, %32, %cst_15 {dimension_numbers = #tpu.dot_dimension_numbers<[1], [0], [0], [1], [0, 0, 1, 1], [], []>} : vector<32x128xbf16>, vector<128x384xbf16>, vector<32x384xf32> -> vector<32x384xf32>
    %c0_16 = arith.constant 0 : index
    %c0_17 = arith.constant 0 : index
    %c0_18 = arith.constant 0 : index
    %34 = vector.load %arg6[%c0_16, %c0_17, %c0_18] : memref<1x1x384xf32, #tpu.memory_space<vmem>>, vector<1x1x384xf32>
    %35 = vector.shape_cast %34 : vector<1x1x384xf32> to vector<1x384xf32>
    %36 = vector.broadcast %35 : vector<1x384xf32> to vector<32x384xf32>
    %37 = arith.addf %33, %36 : vector<32x384xf32>
    %38 = vector.extract_strided_slice %37 {offsets = [0, 0], sizes = [32, 128], strides = [1, 1]} : vector<32x384xf32> to vector<32x128xf32>
    %39 = vector.extract_strided_slice %37 {offsets = [0, 128], sizes = [32, 128], strides = [1, 1]} : vector<32x384xf32> to vector<32x128xf32>
    %40 = vector.extract_strided_slice %37 {offsets = [0, 256], sizes = [32, 128], strides = [1, 1]} : vector<32x384xf32> to vector<32x128xf32>
    %c0_19 = arith.constant 0 : index
    %c0_20 = arith.constant 0 : index
    %41 = vector.load %arg2[%c0_19, %c0_20] : memref<16x16xf32, #tpu.memory_space<vmem>>, vector<16x16xf32>
    %42 = vector.extract_strided_slice %38 {offsets = [0, 0], sizes = [16, 64], strides = [1, 1]} : vector<32x128xf32> to vector<16x64xf32>
    %43 = arith.truncf %42 : vector<16x64xf32> to vector<16x64xbf16>
    %44 = vector.extract_strided_slice %39 {offsets = [0, 0], sizes = [16, 64], strides = [1, 1]} : vector<32x128xf32> to vector<16x64xf32>
    %45 = arith.truncf %44 : vector<16x64xf32> to vector<16x64xbf16>
    %46 = vector.extract_strided_slice %40 {offsets = [0, 0], sizes = [16, 64], strides = [1, 1]} : vector<32x128xf32> to vector<16x64xf32>
    %47 = arith.truncf %46 : vector<16x64xf32> to vector<16x64xbf16>
    %cst_21 = arith.constant dense<0.000000e+00> : vector<16x16xf32>
    %48 = tpu.matmul %43, %45, %cst_21 {dimension_numbers = #tpu.dot_dimension_numbers<[1], [1], [0], [0], [0, 0, 1, 0], [], []>} : vector<16x64xbf16>, vector<16x64xbf16>, vector<16x16xf32> -> vector<16x16xf32>
    %49 = arith.addf %48, %41 : vector<16x16xf32>
    %cst_22 = arith.constant dense<0xFF800000> : vector<16xf32>
    %50 = vector.multi_reduction <maximumf>, %49, %cst_22 [1] : vector<16x16xf32> to vector<16xf32>
    %51 = vector.shape_cast %50 : vector<16xf32> to vector<16x1xf32>
    %52 = vector.broadcast %51 : vector<16x1xf32> to vector<16x16xf32>
    %53 = arith.subf %49, %52 : vector<16x16xf32>
    %54 = math.exp %53 : vector<16x16xf32>
    %cst_23 = arith.constant dense<0.000000e+00> : vector<16xf32>
    %55 = vector.multi_reduction <add>, %54, %cst_23 [1] : vector<16x16xf32> to vector<16xf32>
    %56 = vector.shape_cast %55 : vector<16xf32> to vector<16x1xf32>
    %57 = tpu.reciprocal %56 {approx = true} : vector<16x1xf32> -> vector<16x1xf32>
    %58 = arith.truncf %54 : vector<16x16xf32> to vector<16x16xbf16>
    %cst_24 = arith.constant dense<0.000000e+00> : vector<16x64xf32>
    %59 = tpu.matmul %58, %47, %cst_24 {dimension_numbers = #tpu.dot_dimension_numbers<[1], [0], [0], [1], [0, 0, 1, 1], [], []>} : vector<16x16xbf16>, vector<16x64xbf16>, vector<16x64xf32> -> vector<16x64xf32>
    %60 = vector.broadcast %57 : vector<16x1xf32> to vector<16x64xf32>
    %61 = arith.mulf %59, %60 : vector<16x64xf32>
    %c0_25 = arith.constant 0 : index
    %c0_26 = arith.constant 0 : index
    %62 = vector.load %arg19[%c0_25, %c0_26] : memref<32x128xf32, #tpu.memory_space<vmem>>, vector<16x64xf32>
    tpu.vector_store %arg19[%c0_25, %c0_26], %61 {strides = array<i32>} : memref<32x128xf32, #tpu.memory_space<vmem>>, vector<16x64xf32>,
    %63 = vector.extract_strided_slice %38 {offsets = [0, 64], sizes = [16, 64], strides = [1, 1]} : vector<32x128xf32> to vector<16x64xf32>
    %64 = arith.truncf %63 : vector<16x64xf32> to vector<16x64xbf16>
    %65 = vector.extract_strided_slice %39 {offsets = [0, 64], sizes = [16, 64], strides = [1, 1]} : vector<32x128xf32> to vector<16x64xf32>
    %66 = arith.truncf %65 : vector<16x64xf32> to vector<16x64xbf16>
    %67 = vector.extract_strided_slice %40 {offsets = [0, 64], sizes = [16, 64], strides = [1, 1]} : vector<32x128xf32> to vector<16x64xf32>
    %68 = arith.truncf %67 : vector<16x64xf32> to vector<16x64xbf16>
    %cst_27 = arith.constant dense<0.000000e+00> : vector<16x16xf32>
    %69 = tpu.matmul %64, %66, %cst_27 {dimension_numbers = #tpu.dot_dimension_numbers<[1], [1], [0], [0], [0, 0, 1, 0], [], []>} : vector<16x64xbf16>, vector<16x64xbf16>, vector<16x16xf32> -> vector<16x16xf32>
    %70 = arith.addf %69, %41 : vector<16x16xf32>
    %cst_28 = arith.constant dense<0xFF800000> : vector<16xf32>
    %71 = vector.multi_reduction <maximumf>, %70, %cst_28 [1] : vector<16x16xf32> to vector<16xf32>
    %72 = vector.shape_cast %71 : vector<16xf32> to vector<16x1xf32>
    %73 = vector.broadcast %72 : vector<16x1xf32> to vector<16x16xf32>
    %74 = arith.subf %70, %73 : vector<16x16xf32>
    %75 = math.exp %74 : vector<16x16xf32>
    %cst_29 = arith.constant dense<0.000000e+00> : vector<16xf32>
    %76 = vector.multi_reduction <add>, %75, %cst_29 [1] : vector<16x16xf32> to vector<16xf32>
    %77 = vector.shape_cast %76 : vector<16xf32> to vector<16x1xf32>
    %78 = tpu.reciprocal %77 {approx = true} : vector<16x1xf32> -> vector<16x1xf32>
    %79 = arith.truncf %75 : vector<16x16xf32> to vector<16x16xbf16>
    %cst_30 = arith.constant dense<0.000000e+00> : vector<16x64xf32>
    %80 = tpu.matmul %79, %68, %cst_30 {dimension_numbers = #tpu.dot_dimension_numbers<[1], [0], [0], [1], [0, 0, 1, 1], [], []>} : vector<16x16xbf16>, vector<16x64xbf16>, vector<16x64xf32> -> vector<16x64xf32>
    %81 = vector.broadcast %78 : vector<16x1xf32> to vector<16x64xf32>
    %82 = arith.mulf %80, %81 : vector<16x64xf32>
    %c0_31 = arith.constant 0 : index
    %c64 = arith.constant 64 : index
    %83 = vector.load %arg19[%c0_31, %c64] : memref<32x128xf32, #tpu.memory_space<vmem>>, vector<16x64xf32>
    tpu.vector_store %arg19[%c0_31, %c64], %82 {strides = array<i32>} : memref<32x128xf32, #tpu.memory_space<vmem>>, vector<16x64xf32>,
    %84 = vector.extract_strided_slice %38 {offsets = [16, 0], sizes = [16, 64], strides = [1, 1]} : vector<32x128xf32> to vector<16x64xf32>
    %85 = arith.truncf %84 : vector<16x64xf32> to vector<16x64xbf16>
    %86 = vector.extract_strided_slice %39 {offsets = [16, 0], sizes = [16, 64], strides = [1, 1]} : vector<32x128xf32> to vector<16x64xf32>
    %87 = arith.truncf %86 : vector<16x64xf32> to vector<16x64xbf16>
    %88 = vector.extract_strided_slice %40 {offsets = [16, 0], sizes = [16, 64], strides = [1, 1]} : vector<32x128xf32> to vector<16x64xf32>
    %89 = arith.truncf %88 : vector<16x64xf32> to vector<16x64xbf16>
    %cst_32 = arith.constant dense<0.000000e+00> : vector<16x16xf32>
    %90 = tpu.matmul %85, %87, %cst_32 {dimension_numbers = #tpu.dot_dimension_numbers<[1], [1], [0], [0], [0, 0, 1, 0], [], []>} : vector<16x64xbf16>, vector<16x64xbf16>, vector<16x16xf32> -> vector<16x16xf32>
    %91 = arith.addf %90, %41 : vector<16x16xf32>
    %cst_33 = arith.constant dense<0xFF800000> : vector<16xf32>
    %92 = vector.multi_reduction <maximumf>, %91, %cst_33 [1] : vector<16x16xf32> to vector<16xf32>
    %93 = vector.shape_cast %92 : vector<16xf32> to vector<16x1xf32>
    %94 = vector.broadcast %93 : vector<16x1xf32> to vector<16x16xf32>
    %95 = arith.subf %91, %94 : vector<16x16xf32>
    %96 = math.exp %95 : vector<16x16xf32>
    %cst_34 = arith.constant dense<0.000000e+00> : vector<16xf32>
    %97 = vector.multi_reduction <add>, %96, %cst_34 [1] : vector<16x16xf32> to vector<16xf32>
    %98 = vector.shape_cast %97 : vector<16xf32> to vector<16x1xf32>
    %99 = tpu.reciprocal %98 {approx = true} : vector<16x1xf32> -> vector<16x1xf32>
    %100 = arith.truncf %96 : vector<16x16xf32> to vector<16x16xbf16>
    %cst_35 = arith.constant dense<0.000000e+00> : vector<16x64xf32>
    %101 = tpu.matmul %100, %89, %cst_35 {dimension_numbers = #tpu.dot_dimension_numbers<[1], [0], [0], [1], [0, 0, 1, 1], [], []>} : vector<16x16xbf16>, vector<16x64xbf16>, vector<16x64xf32> -> vector<16x64xf32>
    %102 = vector.broadcast %99 : vector<16x1xf32> to vector<16x64xf32>
    %103 = arith.mulf %101, %102 : vector<16x64xf32>
    %c16 = arith.constant 16 : index
    %c0_36 = arith.constant 0 : index
    %104 = vector.load %arg19[%c16, %c0_36] : memref<32x128xf32, #tpu.memory_space<vmem>>, vector<16x64xf32>
    tpu.vector_store %arg19[%c16, %c0_36], %103 {strides = array<i32>} : memref<32x128xf32, #tpu.memory_space<vmem>>, vector<16x64xf32>,
    %105 = vector.extract_strided_slice %38 {offsets = [16, 64], sizes = [16, 64], strides = [1, 1]} : vector<32x128xf32> to vector<16x64xf32>
    %106 = arith.truncf %105 : vector<16x64xf32> to vector<16x64xbf16>
    %107 = vector.extract_strided_slice %39 {offsets = [16, 64], sizes = [16, 64], strides = [1, 1]} : vector<32x128xf32> to vector<16x64xf32>
    %108 = arith.truncf %107 : vector<16x64xf32> to vector<16x64xbf16>
    %109 = vector.extract_strided_slice %40 {offsets = [16, 64], sizes = [16, 64], strides = [1, 1]} : vector<32x128xf32> to vector<16x64xf32>
    %110 = arith.truncf %109 : vector<16x64xf32> to vector<16x64xbf16>
    %cst_37 = arith.constant dense<0.000000e+00> : vector<16x16xf32>
    %111 = tpu.matmul %106, %108, %cst_37 {dimension_numbers = #tpu.dot_dimension_numbers<[1], [1], [0], [0], [0, 0, 1, 0], [], []>} : vector<16x64xbf16>, vector<16x64xbf16>, vector<16x16xf32> -> vector<16x16xf32>
    %112 = arith.addf %111, %41 : vector<16x16xf32>
    %cst_38 = arith.constant dense<0xFF800000> : vector<16xf32>
    %113 = vector.multi_reduction <maximumf>, %112, %cst_38 [1] : vector<16x16xf32> to vector<16xf32>
    %114 = vector.shape_cast %113 : vector<16xf32> to vector<16x1xf32>
    %115 = vector.broadcast %114 : vector<16x1xf32> to vector<16x16xf32>
    %116 = arith.subf %112, %115 : vector<16x16xf32>
    %117 = math.exp %116 : vector<16x16xf32>
    %cst_39 = arith.constant dense<0.000000e+00> : vector<16xf32>
    %118 = vector.multi_reduction <add>, %117, %cst_39 [1] : vector<16x16xf32> to vector<16xf32>
    %119 = vector.shape_cast %118 : vector<16xf32> to vector<16x1xf32>
    %120 = tpu.reciprocal %119 {approx = true} : vector<16x1xf32> -> vector<16x1xf32>
    %121 = arith.truncf %117 : vector<16x16xf32> to vector<16x16xbf16>
    %cst_40 = arith.constant dense<0.000000e+00> : vector<16x64xf32>
    %122 = tpu.matmul %121, %110, %cst_40 {dimension_numbers = #tpu.dot_dimension_numbers<[1], [0], [0], [1], [0, 0, 1, 1], [], []>} : vector<16x16xbf16>, vector<16x64xbf16>, vector<16x64xf32> -> vector<16x64xf32>
    %123 = vector.broadcast %120 : vector<16x1xf32> to vector<16x64xf32>
    %124 = arith.mulf %122, %123 : vector<16x64xf32>
    %c16_41 = arith.constant 16 : index
    %c64_42 = arith.constant 64 : index
    %125 = vector.load %arg19[%c16_41, %c64_42] : memref<32x128xf32, #tpu.memory_space<vmem>>, vector<16x64xf32>
    tpu.vector_store %arg19[%c16_41, %c64_42], %124 {strides = array<i32>} : memref<32x128xf32, #tpu.memory_space<vmem>>, vector<16x64xf32>,
    %c0_43 = arith.constant 0 : index
    %c0_44 = arith.constant 0 : index
    %126 = vector.load %arg19[%c0_43, %c0_44] : memref<32x128xf32, #tpu.memory_space<vmem>>, vector<32x128xf32>
    %127 = arith.truncf %126 : vector<32x128xf32> to vector<32x128xbf16>
    %c0_45 = arith.constant 0 : index
    %c0_46 = arith.constant 0 : index
    %c0_47 = arith.constant 0 : index
    %128 = vector.load %arg7[%c0_45, %c0_46, %c0_47] : memref<1x128x128xbf16, #tpu.memory_space<vmem>>, vector<1x128x128xbf16>
    %129 = vector.shape_cast %128 : vector<1x128x128xbf16> to vector<128x128xbf16>
    %cst_48 = arith.constant dense<0.000000e+00> : vector<32x128xf32>
    %130 = tpu.matmul %127, %129, %cst_48 {dimension_numbers = #tpu.dot_dimension_numbers<[1], [0], [0], [1], [0, 0, 1, 1], [], []>} : vector<32x128xbf16>, vector<128x128xbf16>, vector<32x128xf32> -> vector<32x128xf32>
    %c0_49 = arith.constant 0 : index
    %c0_50 = arith.constant 0 : index
    %c0_51 = arith.constant 0 : index
    %131 = vector.load %arg8[%c0_49, %c0_50, %c0_51] : memref<1x1x128xf32, #tpu.memory_space<vmem>>, vector<1x1x128xf32>
    %132 = vector.shape_cast %131 : vector<1x1x128xf32> to vector<1x128xf32>
    %133 = vector.broadcast %132 : vector<1x128xf32> to vector<32x128xf32>
    %134 = arith.addf %130, %133 : vector<32x128xf32>
    %135 = arith.addf %3, %134 : vector<32x128xf32>
    %c0_52 = arith.constant 0 : index
    %c0_53 = arith.constant 0 : index
    %c0_54 = arith.constant 0 : index
    %136 = vector.load %arg9[%c0_52, %c0_53, %c0_54] : memref<1x1x128xf32, #tpu.memory_space<vmem>>, vector<1x1x128xf32>
    %137 = vector.shape_cast %136 : vector<1x1x128xf32> to vector<1x128xf32>
    %c0_55 = arith.constant 0 : index
    %c0_56 = arith.constant 0 : index
    %c0_57 = arith.constant 0 : index
    %138 = vector.load %arg10[%c0_55, %c0_56, %c0_57] : memref<1x1x128xf32, #tpu.memory_space<vmem>>, vector<1x1x128xf32>
    %139 = vector.shape_cast %138 : vector<1x1x128xf32> to vector<1x128xf32>
    %cst_58 = arith.constant dense<0.000000e+00> : vector<32xf32>
    %140 = vector.multi_reduction <add>, %135, %cst_58 [1] : vector<32x128xf32> to vector<32xf32>
    %141 = vector.shape_cast %140 : vector<32xf32> to vector<32x1xf32>
    %142 = arith.mulf %135, %135 : vector<32x128xf32>
    %cst_59 = arith.constant dense<0.000000e+00> : vector<32xf32>
    %143 = vector.multi_reduction <add>, %142, %cst_59 [1] : vector<32x128xf32> to vector<32xf32>
    %144 = vector.shape_cast %143 : vector<32xf32> to vector<32x1xf32>
    %cst_60 = arith.constant 7.812500e-03 : f32
    %145 = vector.broadcast %cst_60 : f32 to vector<32x1xf32>
    %146 = arith.mulf %141, %145 : vector<32x1xf32>
    %cst_61 = arith.constant 7.812500e-03 : f32
    %147 = vector.broadcast %cst_61 : f32 to vector<32x1xf32>
    %148 = arith.mulf %144, %147 : vector<32x1xf32>
    %149 = arith.mulf %146, %146 : vector<32x1xf32>
    %150 = arith.subf %148, %149 : vector<32x1xf32>
    %151 = vector.broadcast %146 : vector<32x1xf32> to vector<32x128xf32>
    %152 = arith.subf %135, %151 : vector<32x128xf32>
    %cst_62 = arith.constant 9.99999974E-6 : f32
    %153 = vector.broadcast %cst_62 : f32 to vector<32x1xf32>
    %154 = arith.addf %150, %153 : vector<32x1xf32>
    %155 = math.rsqrt %154 : vector<32x1xf32>
    %156 = vector.broadcast %155 : vector<32x1xf32> to vector<32x128xf32>
    %157 = arith.mulf %152, %156 : vector<32x128xf32>
    %158 = vector.broadcast %137 : vector<1x128xf32> to vector<32x128xf32>
    %159 = arith.mulf %157, %158 : vector<32x128xf32>
    %160 = vector.broadcast %139 : vector<1x128xf32> to vector<32x128xf32>
    %161 = arith.addf %159, %160 : vector<32x128xf32>
    %162 = arith.truncf %161 : vector<32x128xf32> to vector<32x128xbf16>
    %c0_63 = arith.constant 0 : index
    %c0_64 = arith.constant 0 : index
    %c0_65 = arith.constant 0 : index
    %163 = vector.load %arg11[%c0_63, %c0_64, %c0_65] : memref<1x128x512xbf16, #tpu.memory_space<vmem>>, vector<1x128x512xbf16>
    %164 = vector.shape_cast %163 : vector<1x128x512xbf16> to vector<128x512xbf16>
    %cst_66 = arith.constant dense<0.000000e+00> : vector<32x512xf32>
    %165 = tpu.matmul %162, %164, %cst_66 {dimension_numbers = #tpu.dot_dimension_numbers<[1], [0], [0], [1], [0, 0, 1, 1], [], []>} : vector<32x128xbf16>, vector<128x512xbf16>, vector<32x512xf32> -> vector<32x512xf32>
    %c0_67 = arith.constant 0 : index
    %c0_68 = arith.constant 0 : index
    %c0_69 = arith.constant 0 : index
    %166 = vector.load %arg12[%c0_67, %c0_68, %c0_69] : memref<1x1x512xf32, #tpu.memory_space<vmem>>, vector<1x1x512xf32>
    %167 = vector.shape_cast %166 : vector<1x1x512xf32> to vector<1x512xf32>
    %168 = vector.broadcast %167 : vector<1x512xf32> to vector<32x512xf32>
    %169 = arith.addf %165, %168 : vector<32x512xf32>
    %cst_70 = arith.constant 5.000000e-01 : f32
    %170 = vector.broadcast %cst_70 : f32 to vector<32x512xf32>
    %171 = arith.mulf %170, %169 : vector<32x512xf32>
    %cst_71 = arith.constant 0.707106769 : f32
    %172 = vector.broadcast %cst_71 : f32 to vector<32x512xf32>
    %173 = arith.mulf %169, %172 : vector<32x512xf32>
    %174 = math.erf %173 : vector<32x512xf32>
    %cst_72 = arith.constant 1.000000e+00 : f32
    %175 = vector.broadcast %cst_72 : f32 to vector<32x512xf32>
    %176 = arith.addf %175, %174 : vector<32x512xf32>
    %177 = arith.mulf %171, %176 : vector<32x512xf32>
    %178 = arith.truncf %177 : vector<32x512xf32> to vector<32x512xbf16>
    %c0_73 = arith.constant 0 : index
    %c0_74 = arith.constant 0 : index
    %c0_75 = arith.constant 0 : index
    %179 = vector.load %arg13[%c0_73, %c0_74, %c0_75] : memref<1x512x128xbf16, #tpu.memory_space<vmem>>, vector<1x512x128xbf16>
    %180 = vector.shape_cast %179 : vector<1x512x128xbf16> to vector<512x128xbf16>
    %cst_76 = arith.constant dense<0.000000e+00> : vector<32x128xf32>
    %181 = tpu.matmul %178, %180, %cst_76 {dimension_numbers = #tpu.dot_dimension_numbers<[1], [0], [0], [1], [0, 0, 1, 1], [], []>} : vector<32x512xbf16>, vector<512x128xbf16>, vector<32x128xf32> -> vector<32x128xf32>
    %c0_77 = arith.constant 0 : index
    %c0_78 = arith.constant 0 : index
    %c0_79 = arith.constant 0 : index
    %182 = vector.load %arg14[%c0_77, %c0_78, %c0_79] : memref<1x1x128xf32, #tpu.memory_space<vmem>>, vector<1x1x128xf32>
    %183 = vector.shape_cast %182 : vector<1x1x128xf32> to vector<1x128xf32>
    %184 = vector.broadcast %183 : vector<1x128xf32> to vector<32x128xf32>
    %185 = arith.addf %181, %184 : vector<32x128xf32>
    %186 = arith.addf %135, %185 : vector<32x128xf32>
    %c0_80 = arith.constant 0 : index
    %c0_81 = arith.constant 0 : index
    %187 = vector.load %arg18[%c0_80, %c0_81] : memref<32x128xf32, #tpu.memory_space<vmem>>, vector<32x128xf32>
    tpu.vector_store %arg18[%c0_80, %c0_81], %186 {strides = array<i32>} : memref<32x128xf32, #tpu.memory_space<vmem>>, vector<32x128xf32>,
    %c2_i32 = arith.constant 2 : i32
    %188 = arith.cmpi eq, %arg0, %c2_i32 : i32
    %189 = arith.extui %188 : i1 to i32
    %c0_i32_82 = arith.constant 0 : i32
    %190 = arith.cmpi ne, %189, %c0_i32_82 : i32
    scf.if %190 {
      %c0_83 = arith.constant 0 : index
      %c0_84 = arith.constant 0 : index
      %191 = vector.load %arg15[%c0_83, %c0_84] : memref<1x128xf32, #tpu.memory_space<vmem>>, vector<1x128xf32>
      %c0_85 = arith.constant 0 : index
      %c0_86 = arith.constant 0 : index
      %192 = vector.load %arg16[%c0_85, %c0_86] : memref<1x128xf32, #tpu.memory_space<vmem>>, vector<1x128xf32>
      %cst_87 = arith.constant dense<0.000000e+00> : vector<32xf32>
      %193 = vector.multi_reduction <add>, %186, %cst_87 [1] : vector<32x128xf32> to vector<32xf32>
      %194 = vector.shape_cast %193 : vector<32xf32> to vector<32x1xf32>
      %195 = arith.mulf %186, %186 : vector<32x128xf32>
      %cst_88 = arith.constant dense<0.000000e+00> : vector<32xf32>
      %196 = vector.multi_reduction <add>, %195, %cst_88 [1] : vector<32x128xf32> to vector<32xf32>
      %197 = vector.shape_cast %196 : vector<32xf32> to vector<32x1xf32>
      %cst_89 = arith.constant 7.812500e-03 : f32
      %198 = vector.broadcast %cst_89 : f32 to vector<32x1xf32>
      %199 = arith.mulf %194, %198 : vector<32x1xf32>
      %cst_90 = arith.constant 7.812500e-03 : f32
      %200 = vector.broadcast %cst_90 : f32 to vector<32x1xf32>
      %201 = arith.mulf %197, %200 : vector<32x1xf32>
      %202 = arith.mulf %199, %199 : vector<32x1xf32>
      %203 = arith.subf %201, %202 : vector<32x1xf32>
      %204 = vector.broadcast %199 : vector<32x1xf32> to vector<32x128xf32>
      %205 = arith.subf %186, %204 : vector<32x128xf32>
      %cst_91 = arith.constant 9.99999974E-6 : f32
      %206 = vector.broadcast %cst_91 : f32 to vector<32x1xf32>
      %207 = arith.addf %203, %206 : vector<32x1xf32>
      %208 = math.rsqrt %207 : vector<32x1xf32>
      %209 = vector.broadcast %208 : vector<32x1xf32> to vector<32x128xf32>
      %210 = arith.mulf %205, %209 : vector<32x128xf32>
      %211 = vector.broadcast %191 : vector<1x128xf32> to vector<32x128xf32>
      %212 = arith.mulf %210, %211 : vector<32x128xf32>
      %213 = vector.broadcast %192 : vector<1x128xf32> to vector<32x128xf32>
      %214 = arith.addf %212, %213 : vector<32x128xf32>
      %c0_92 = arith.constant 0 : index
      %c0_93 = arith.constant 0 : index
      %215 = vector.load %arg17[%c0_92, %c0_93] : memref<32x128xf32, #tpu.memory_space<vmem>>, vector<32x128xf32>
      tpu.vector_store %arg17[%c0_92, %c0_93], %214 {strides = array<i32>} : memref<32x128xf32, #tpu.memory_space<vmem>>, vector<32x128xf32>,
    } else {
    }
    return
  }
  func.func @transform_0(%arg0: i32) -> (i32, i32) {
    %c0_i32 = arith.constant 0 : i32
    %c0_i32_0 = arith.constant 0 : i32
    %c0_i32_1 = arith.constant 0 : i32
    return %c0_i32, %c0_i32_0 : i32, i32
  }
  func.func @transform_1(%arg0: i32) -> (i32, i32) {
    %c0_i32 = arith.constant 0 : i32
    %c0_i32_0 = arith.constant 0 : i32
    %c0_i32_1 = arith.constant 0 : i32
    return %c0_i32, %c0_i32_0 : i32, i32
  }
  func.func @transform_2(%arg0: i32) -> (i32, i32, i32) {
    %c0_i32 = arith.constant 0 : i32
    %c0_i32_0 = arith.constant 0 : i32
    %c0_i32_1 = arith.constant 0 : i32
    return %arg0, %c0_i32, %c0_i32_0 : i32, i32, i32
  }
  func.func @transform_3(%arg0: i32) -> (i32, i32, i32) {
    %c0_i32 = arith.constant 0 : i32
    %c0_i32_0 = arith.constant 0 : i32
    %c0_i32_1 = arith.constant 0 : i32
    return %arg0, %c0_i32, %c0_i32_0 : i32, i32, i32
  }
  func.func @transform_4(%arg0: i32) -> (i32, i32, i32) {
    %c0_i32 = arith.constant 0 : i32
    %c0_i32_0 = arith.constant 0 : i32
    %c0_i32_1 = arith.constant 0 : i32
    return %arg0, %c0_i32, %c0_i32_0 : i32, i32, i32
  }
  func.func @transform_5(%arg0: i32) -> (i32, i32, i32) {
    %c0_i32 = arith.constant 0 : i32
    %c0_i32_0 = arith.constant 0 : i32
    %c0_i32_1 = arith.constant 0 : i32
    return %arg0, %c0_i32, %c0_i32_0 : i32, i32, i32
  }
  func.func @transform_6(%arg0: i32) -> (i32, i32, i32) {
    %c0_i32 = arith.constant 0 : i32
    %c0_i32_0 = arith.constant 0 : i32
    %c0_i32_1 = arith.constant 0 : i32
    return %arg0, %c0_i32, %c0_i32_0 : i32, i32, i32
  }
  func.func @transform_7(%arg0: i32) -> (i32, i32, i32) {
    %c0_i32 = arith.constant 0 : i32
    %c0_i32_0 = arith.constant 0 : i32
    %c0_i32_1 = arith.constant 0 : i32
    return %arg0, %c0_i32, %c0_i32_0 : i32, i32, i32
  }
  func.func @transform_8(%arg0: i32) -> (i32, i32, i32) {
    %c0_i32 = arith.constant 0 : i32
    %c0_i32_0 = arith.constant 0 : i32
    %c0_i32_1 = arith.constant 0 : i32
    return %arg0, %c0_i32, %c0_i32_0 : i32, i32, i32
  }
  func.func @transform_9(%arg0: i32) -> (i32, i32, i32) {
    %c0_i32 = arith.constant 0 : i32
    %c0_i32_0 = arith.constant 0 : i32
    %c0_i32_1 = arith.constant 0 : i32
    return %arg0, %c0_i32, %c0_i32_0 : i32, i32, i32
  }
  func.func @transform_10(%arg0: i32) -> (i32, i32, i32) {
    %c0_i32 = arith.constant 0 : i32
    %c0_i32_0 = arith.constant 0 : i32
    %c0_i32_1 = arith.constant 0 : i32
    return %arg0, %c0_i32, %c0_i32_0 : i32, i32, i32
  }
  func.func @transform_11(%arg0: i32) -> (i32, i32, i32) {
    %c0_i32 = arith.constant 0 : i32
    %c0_i32_0 = arith.constant 0 : i32
    %c0_i32_1 = arith.constant 0 : i32
    return %arg0, %c0_i32, %c0_i32_0 : i32, i32, i32
  }
  func.func @transform_12(%arg0: i32) -> (i32, i32, i32) {
    %c0_i32 = arith.constant 0 : i32
    %c0_i32_0 = arith.constant 0 : i32
    %c0_i32_1 = arith.constant 0 : i32
    return %arg0, %c0_i32, %c0_i32_0 : i32, i32, i32
  }
  func.func @transform_13(%arg0: i32) -> (i32, i32, i32) {
    %c0_i32 = arith.constant 0 : i32
    %c0_i32_0 = arith.constant 0 : i32
    %c0_i32_1 = arith.constant 0 : i32
    return %arg0, %c0_i32, %c0_i32_0 : i32, i32, i32
  }
  func.func @transform_14(%arg0: i32) -> (i32, i32) {
    %c0_i32 = arith.constant 0 : i32
    %c0_i32_0 = arith.constant 0 : i32
    %c0_i32_1 = arith.constant 0 : i32
    return %c0_i32, %c0_i32_0 : i32, i32
  }
  func.func @transform_15(%arg0: i32) -> (i32, i32) {
    %c0_i32 = arith.constant 0 : i32
    %c0_i32_0 = arith.constant 0 : i32
    %c0_i32_1 = arith.constant 0 : i32
    return %c0_i32, %c0_i32_0 : i32, i32
  }
  func.func @transform_16(%arg0: i32) -> (i32, i32) {
    %c0_i32 = arith.constant 0 : i32
    %c0_i32_0 = arith.constant 0 : i32
    %c0_i32_1 = arith.constant 0 : i32
    return %c0_i32, %c0_i32_0 : i32, i32
  }
}

</mosaic_0001>

<llo_original>
// kernel: tpu_custom_call.1
$region0: #{tpu_custom_call.1}
  #allocation0 [shape = 'u32[]', space=smem, size = 0x4, offset = 0x4, fixed_abs, tag = 'smem constant byte address 0x4 - core index']
  #allocation1 [shape = 'u32[144,128]{1,0:T(1,128)}', space=vmem, size = 0x12000, scoped, tag = 'internal scratch']
  #allocation2 [shape = 'f32[32,128]{1,0:T(8,128)}', space=vmem, size = 0x4000, scoped, tag = 'scratch operand']
  #allocation3 [shape = 'f32[32,128]{1,0:T(8,128)}', space=vmem, size = 0x4000, scoped, tag = 'scratch operand']
  %s0 = inlined_call_operand.hbm [shape: f32[32,128], index: 0, kind: input, shape index: {}]
  %s1 = inlined_call_operand.hbm [shape: f32[16,16], index: 1, kind: input, shape index: {}]
  %s2 = inlined_call_operand.vmem [shape: f32[3,1,128], index: 2, kind: input, shape index: {}]
  %s3 = inlined_call_operand.hbm [shape: f32[3,1,128], index: 3, kind: input, shape index: {}]
  %s4 = inlined_call_operand.hbm [shape: bf16[3,128,384], index: 4, kind: input, shape index: {}]
  %s5 = inlined_call_operand.hbm [shape: f32[3,1,384], index: 5, kind: input, shape index: {}]
  %s6 = inlined_call_operand.hbm [shape: bf16[3,128,128], index: 6, kind: input, shape index: {}]
  %s7 = inlined_call_operand.vmem [shape: f32[3,1,128], index: 7, kind: input, shape index: {}]
  %s8 = inlined_call_operand.hbm [shape: f32[3,1,128], index: 8, kind: input, shape index: {}]
  %s9 = inlined_call_operand.hbm [shape: f32[3,1,128], index: 9, kind: input, shape index: {}]
  %s10 = inlined_call_operand.hbm [shape: bf16[3,128,512], index: 10, kind: input, shape index: {}]
  %s11 = inlined_call_operand.vmem [shape: f32[3,1,512], index: 11, kind: input, shape index: {}]
  %s12 = inlined_call_operand.hbm [shape: bf16[3,512,128], index: 12, kind: input, shape index: {}]
  %s13 = inlined_call_operand.vmem [shape: f32[3,1,128], index: 13, kind: input, shape index: {}]
  %s14 = inlined_call_operand.vmem [shape: f32[1,128], index: 14, kind: input, shape index: {}]
  %s15 = inlined_call_operand.vmem [shape: f32[1,128], index: 15, kind: input, shape index: {}]
  %s16 = inlined_call_operand.hbm [shape: f32[32,128], index: 16, kind: output, shape index: {}]
  %s17 = sld [smem:[#allocation0]]
  $region145: #{tpu_custom_call.1} parent=0
    _
  %s19 = ssub.s32 1, %s17
  %s20 = scalar_select 0, %s19, %s17
  $region1: #{tpu_custom_call.1} parent=0
    #allocation4 [shape = 'u8[16384]{0}', space=vmem, size = 0x4000, scoped, tag = 'input window, operand 0, single buffered']
    #allocation5 [shape = 's32[2]{0}', space=sflag, size = 0x8, scoped, tag = 'scoped memory for tpu_custom_call.1']
    #allocation6 [shape = 's32[2]{0}', space=sflag, size = 0x8, scoped, tag = 'scoped memory for tpu_custom_call.1']
    #allocation7 [shape = 'u8[8192]{0}', space=vmem, size = 0x2000, scoped, tag = 'input window, operand 1, single buffered']
    #allocation8 [shape = 's32[1]{0}', space=sflag, size = 0x4, scoped, tag = 'scoped memory for tpu_custom_call.1']
    #allocation9 [shape = 'u8[1024]{0}', space=vmem, size = 0x400, scoped, tag = 'input window, operand 3']
    #allocation10 [shape = 'u8[196608]{0}', space=vmem, size = 0x30000, scoped, tag = 'input window, operand 4']
    #allocation11 [shape = 'u8[3072]{0}', space=vmem, size = 0xc00, scoped, tag = 'input window, operand 5']
    #allocation12 [shape = 'u8[65536]{0}', space=vmem, size = 0x10000, scoped, tag = 'input window, operand 6']
    #allocation13 [shape = 'u8[1024]{0}', space=vmem, size = 0x400, scoped, tag = 'input window, operand 8']
    #allocation14 [shape = 'u8[1024]{0}', space=vmem, size = 0x400, scoped, tag = 'input window, operand 9']
    #allocation15 [shape = 'u8[262144]{0}', space=vmem, size = 0x40000, scoped, tag = 'input window, operand 10']
    #allocation16 [shape = 'u8[262144]{0}', space=vmem, size = 0x40000, scoped, tag = 'input window, operand 12']
    #allocation17 [shape = 'u8[16384]{0}', space=vmem, size = 0x4000, scoped, tag = 'output window, operand 0, single buffered']
    %21 = vsyncpa [#allocation5], 0
    %22 = vsyncpa [#allocation8], 0
    %23 = vsyncpa [#allocation6], 0
    loop: start=0, step=1, limit=5
    $region2: #{tpu_custom_call.1} parent=1 // loop_pre_header
      _
    $region3: #{tpu_custom_call.1} parent=1 // loop_header
      %s25 = sphi 0, %s29
      %p26 = scmp.ge.s32.totalorder %s25, 5
      %s33 = sphi 0, %s33
      %s35 = sphi 0, %s33
      %s36 = sphi 0, %s35
      %s50 = sphi 0, %s36
      %s54 = sphi 0, %s54
      %s56 = sphi 0, %s54
      %s57 = sphi 0, %s56
      %s71 = sphi 0, %s57
      %s77 = sphi 0, %s79
      %s80 = sphi 0, %s77
      %s81 = sphi 0, %s80
      %s97 = sphi 0, %s81
      %s103 = sphi 0, %s105
      %s106 = sphi 0, %s103
      %s107 = sphi 0, %s106
      %s123 = sphi 0, %s107
      %s129 = sphi 0, %s131
      %s132 = sphi 0, %s129
      %s133 = sphi 0, %s132
      %s149 = sphi 0, %s133
      %s155 = sphi 0, %s157
      %s158 = sphi 0, %s155
      %s159 = sphi 0, %s158
      %s175 = sphi 0, %s159
      %s181 = sphi 0, %s183
      %s184 = sphi 0, %s181
      %s185 = sphi 0, %s184
      %s201 = sphi 0, %s185
      %s207 = sphi 0, %s209
      %s210 = sphi 0, %s207
      %s211 = sphi 0, %s210
      %s227 = sphi 0, %s211
      %s233 = sphi 0, %s235
      %s236 = sphi 0, %s233
      %s237 = sphi 0, %s236
      %s253 = sphi 0, %s237
      %s259 = sphi 0, %s261
      %s262 = sphi 0, %s259
      %s263 = sphi 0, %s262
      %s279 = sphi 0, %s263
      %s285 = sphi 0, %s287
      %s288 = sphi 0, %s285
      %s289 = sphi 0, %s288
      %s305 = sphi 0, %s289
      %s311 = sphi 0, %s313
      %s314 = sphi 0, %s311
      %s315 = sphi 0, %s314
      %s331 = sphi 0, %s315
      %s337 = sphi 0, %s339
      %s340 = sphi 0, %s337
      %s341 = sphi 0, %s340
      %s357 = sphi 0, %s341
      %s363 = sphi 0, %s365
      %s366 = sphi 0, %s363
      %s367 = sphi 0, %s366
      %s383 = sphi 0, %s367
      %s387 = sphi 0, %s387
      %s389 = sphi 0, %s387
      %s390 = sphi 0, %s389
      %s404 = sphi 0, %s390
      %s408 = sphi 0, %s408
      %s410 = sphi 0, %s408
      %s411 = sphi 0, %s410
      %s425 = sphi 0, %s411
      %s429 = sphi 0, %s429
      %s431 = sphi 0, %s429
      %s432 = sphi 0, %s431
      %s446 = sphi 0, %s432
    $region4: #{tpu_custom_call.1} parent=1 // loop_header_branch
      %28 = sbr.rel (%p26) target = $region8
    $region5: #{tpu_custom_call.1} parent=1 // loop_body
      %s30 = ssub.s32 %s25, 1
      %s31 = ssub.s32 %s25, 2
      %s32 = sadd.s32 %s25, 1
      %s34 = sadd.s32 %s33, 1
      %p37 = scmp.eq.s32.totalorder %s25, 2
      %p38 = scmp.ne.s32.totalorder %s33, %s35
      %p39 = scmp.eq.s32.totalorder %s25, 0
      %p40 = por %p38, %p39
      %p41 = scmp.ne.s32.totalorder %s33, %s35
      %p42 = scmp.eq.s32.totalorder %s30, 2
      %p43 = por %p41, %p42
      %p44 = scmp.ne.s32.totalorder %s35, %s36
      %p45 = scmp.eq.s32.totalorder %s30, 0
      %p46 = por %p44, %p45
      %p47 = scmp.ne.s32.totalorder %s35, %s36
      %p48 = scmp.eq.s32.totalorder %s31, 2
      %p49 = por %p47, %p48
      %p51 = scmp.ne.s32.totalorder %s36, %s50
      %p52 = scmp.eq.s32.totalorder %s31, 0
      %p53 = por %p51, %p52
      %s55 = sadd.s32 %s54, 1
      %p58 = scmp.eq.s32.totalorder %s25, 2
      %p59 = scmp.ne.s32.totalorder %s54, %s56
      %p60 = scmp.eq.s32.totalorder %s25, 0
      %p61 = por %p59, %p60
      %p62 = scmp.ne.s32.totalorder %s54, %s56
      %p63 = scmp.eq.s32.totalorder %s30, 2
      %p64 = por %p62, %p63
      %p65 = scmp.ne.s32.totalorder %s56, %s57
      %p66 = scmp.eq.s32.totalorder %s30, 0
      %p67 = por %p65, %p66
      %p68 = scmp.ne.s32.totalorder %s56, %s57
      %p69 = scmp.eq.s32.totalorder %s31, 2
      %p70 = por %p68, %p69
      %p72 = scmp.ne.s32.totalorder %s57, %s71
      %p73 = scmp.eq.s32.totalorder %s31, 0
      %p74 = por %p72, %p73
      %s75 = ssub.s32 %s25, %s32
      %p76 = scmp.eq.s32.totalorder %s75, 0
      %s78 = sadd.s32 %s77, 1
      %s79 = scalar_select %p76, %s77, %s78
      %p82 = pneg %p76
      %p83 = scmp.eq.s32.totalorder %s25, 2
      %p84 = por %p82, %p83
      %p85 = scmp.ne.s32.totalorder %s77, %s80
      %p86 = scmp.eq.s32.totalorder %s25, 0
      %p87 = por %p85, %p86
      %p88 = scmp.ne.s32.totalorder %s77, %s80
      %p89 = scmp.eq.s32.totalorder %s30, 2
      %p90 = por %p88, %p89
      %p91 = scmp.ne.s32.totalorder %s80, %s81
      %p92 = scmp.eq.s32.totalorder %s30, 0
      %p93 = por %p91, %p92
      %p94 = scmp.ne.s32.totalorder %s80, %s81
      %p95 = scmp.eq.s32.totalorder %s31, 2
      %p96 = por %p94, %p95
      %p98 = scmp.ne.s32.totalorder %s81, %s97
      %p99 = scmp.eq.s32.totalorder %s31, 0
      %p100 = por %p98, %p99
      %s101 = ssub.s32 %s25, %s32
      %p102 = scmp.eq.s32.totalorder %s101, 0
      %s104 = sadd.s32 %s103, 1
      %s105 = scalar_select %p102, %s103, %s104
      %p108 = pneg %p102
      %p109 = scmp.eq.s32.totalorder %s25, 2
      %p110 = por %p108, %p109
      %p111 = scmp.ne.s32.totalorder %s103, %s106
      %p112 = scmp.eq.s32.totalorder %s25, 0
      %p113 = por %p111, %p112
      %p114 = scmp.ne.s32.totalorder %s103, %s106
      %p115 = scmp.eq.s32.totalorder %s30, 2
      %p116 = por %p114, %p115
      %p117 = scmp.ne.s32.totalorder %s106, %s107
      %p118 = scmp.eq.s32.totalorder %s30, 0
      %p119 = por %p117, %p118
      %p120 = scmp.ne.s32.totalorder %s106, %s107
      %p121 = scmp.eq.s32.totalorder %s31, 2
      %p122 = por %p120, %p121
      %p124 = scmp.ne.s32.totalorder %s107, %s123
      %p125 = scmp.eq.s32.totalorder %s31, 0
      %p126 = por %p124, %p125
      %s127 = ssub.s32 %s25, %s32
      %p128 = scmp.eq.s32.totalorder %s127, 0
      %s130 = sadd.s32 %s129, 1
      %s131 = scalar_select %p128, %s129, %s130
      %p134 = pneg %p128
      %p135 = scmp.eq.s32.totalorder %s25, 2
      %p136 = por %p134, %p135
      %p137 = scmp.ne.s32.totalorder %s129, %s132
      %p138 = scmp.eq.s32.totalorder %s25, 0
      %p139 = por %p137, %p138
      %p140 = scmp.ne.s32.totalorder %s129, %s132
      %p141 = scmp.eq.s32.totalorder %s30, 2
      %p142 = por %p140, %p141
      %p143 = scmp.ne.s32.totalorder %s132, %s133
      %p144 = scmp.eq.s32.totalorder %s30, 0
      %p145 = por %p143, %p144
      %p146 = scmp.ne.s32.totalorder %s132, %s133
      %p147 = scmp.eq.s32.totalorder %s31, 2
      %p148 = por %p146, %p147
      %p150 = scmp.ne.s32.totalorder %s133, %s149
      %p151 = scmp.eq.s32.totalorder %s31, 0
      %p152 = por %p150, %p151
      %s153 = ssub.s32 %s25, %s32
      %p154 = scmp.eq.s32.totalorder %s153, 0
      %s156 = sadd.s32 %s155, 1
      %s157 = scalar_select %p154, %s155, %s156
      %p160 = pneg %p154
      %p161 = scmp.eq.s32.totalorder %s25, 2
      %p162 = por %p160, %p161
      %p163 = scmp.ne.s32.totalorder %s155, %s158
      %p164 = scmp.eq.s32.totalorder %s25, 0
      %p165 = por %p163, %p164
      %p166 = scmp.ne.s32.totalorder %s155, %s158
      %p167 = scmp.eq.s32.totalorder %s30, 2
      %p168 = por %p166, %p167
      %p169 = scmp.ne.s32.totalorder %s158, %s159
      %p170 = scmp.eq.s32.totalorder %s30, 0
      %p171 = por %p169, %p170
      %p172 = scmp.ne.s32.totalorder %s158, %s159
      %p173 = scmp.eq.s32.totalorder %s31, 2
      %p174 = por %p172, %p173
      %p176 = scmp.ne.s32.totalorder %s159, %s175
      %p177 = scmp.eq.s32.totalorder %s31, 0
      %p178 = por %p176, %p177
      %s179 = ssub.s32 %s25, %s32
      %p180 = scmp.eq.s32.totalorder %s179, 0
      %s182 = sadd.s32 %s181, 1
      %s183 = scalar_select %p180, %s181, %s182
      %p186 = pneg %p180
      %p187 = scmp.eq.s32.totalorder %s25, 2
      %p188 = por %p186, %p187
      %p189 = scmp.ne.s32.totalorder %s181, %s184
      %p190 = scmp.eq.s32.totalorder %s25, 0
      %p191 = por %p189, %p190
      %p192 = scmp.ne.s32.totalorder %s181, %s184
      %p193 = scmp.eq.s32.totalorder %s30, 2
      %p194 = por %p192, %p193
      %p195 = scmp.ne.s32.totalorder %s184, %s185
      %p196 = scmp.eq.s32.totalorder %s30, 0
      %p197 = por %p195, %p196
      %p198 = scmp.ne.s32.totalorder %s184, %s185
      %p199 = scmp.eq.s32.totalorder %s31, 2
      %p200 = por %p198, %p199
      %p202 = scmp.ne.s32.totalorder %s185, %s201
      %p203 = scmp.eq.s32.totalorder %s31, 0
      %p204 = por %p202, %p203
      %s205 = ssub.s32 %s25, %s32
      %p206 = scmp.eq.s32.totalorder %s205, 0
      %s208 = sadd.s32 %s207, 1
      %s209 = scalar_select %p206, %s207, %s208
      %p212 = pneg %p206
      %p213 = scmp.eq.s32.totalorder %s25, 2
      %p214 = por %p212, %p213
      %p215 = scmp.ne.s32.totalorder %s207, %s210
      %p216 = scmp.eq.s32.totalorder %s25, 0
      %p217 = por %p215, %p216
      %p218 = scmp.ne.s32.totalorder %s207, %s210
      %p219 = scmp.eq.s32.totalorder %s30, 2
      %p220 = por %p218, %p219
      %p221 = scmp.ne.s32.totalorder %s210, %s211
      %p222 = scmp.eq.s32.totalorder %s30, 0
      %p223 = por %p221, %p222
      %p224 = scmp.ne.s32.totalorder %s210, %s211
      %p225 = scmp.eq.s32.totalorder %s31, 2
      %p226 = por %p224, %p225
      %p228 = scmp.ne.s32.totalorder %s211, %s227
      %p229 = scmp.eq.s32.totalorder %s31, 0
      %p230 = por %p228, %p229
      %s231 = ssub.s32 %s25, %s32
      %p232 = scmp.eq.s32.totalorder %s231, 0
      %s234 = sadd.s32 %s233, 1
      %s235 = scalar_select %p232, %s233, %s234
      %p238 = pneg %p232
      %p239 = scmp.eq.s32.totalorder %s25, 2
      %p240 = por %p238, %p239
      %p241 = scmp.ne.s32.totalorder %s233, %s236
      %p242 = scmp.eq.s32.totalorder %s25, 0
      %p243 = por %p241, %p242
      %p244 = scmp.ne.s32.totalorder %s233, %s236
      %p245 = scmp.eq.s32.totalorder %s30, 2
      %p246 = por %p244, %p245
      %p247 = scmp.ne.s32.totalorder %s236, %s237
      %p248 = scmp.eq.s32.totalorder %s30, 0
      %p249 = por %p247, %p248
      %p250 = scmp.ne.s32.totalorder %s236, %s237
      %p251 = scmp.eq.s32.totalorder %s31, 2
      %p252 = por %p250, %p251
      %p254 = scmp.ne.s32.totalorder %s237, %s253
      %p255 = scmp.eq.s32.totalorder %s31, 0
      %p256 = por %p254, %p255
      %s257 = ssub.s32 %s25, %s32
      %p258 = scmp.eq.s32.totalorder %s257, 0
      %s260 = sadd.s32 %s259, 1
      %s261 = scalar_select %p258, %s259, %s260
      %p264 = pneg %p258
      %p265 = scmp.eq.s32.totalorder %s25, 2
      %p266 = por %p264, %p265
      %p267 = scmp.ne.s32.totalorder %s259, %s262
      %p268 = scmp.eq.s32.totalorder %s25, 0
      %p269 = por %p267, %p268
      %p270 = scmp.ne.s32.totalorder %s259, %s262
      %p271 = scmp.eq.s32.totalorder %s30, 2
      %p272 = por %p270, %p271
      %p273 = scmp.ne.s32.totalorder %s262, %s263
      %p274 = scmp.eq.s32.totalorder %s30, 0
      %p275 = por %p273, %p274
      %p276 = scmp.ne.s32.totalorder %s262, %s263
      %p277 = scmp.eq.s32.totalorder %s31, 2
      %p278 = por %p276, %p277
      %p280 = scmp.ne.s32.totalorder %s263, %s279
      %p281 = scmp.eq.s32.totalorder %s31, 0
      %p282 = por %p280, %p281
      %s283 = ssub.s32 %s25, %s32
      %p284 = scmp.eq.s32.totalorder %s283, 0
      %s286 = sadd.s32 %s285, 1
      %s287 = scalar_select %p284, %s285, %s286
      %p290 = pneg %p284
      %p291 = scmp.eq.s32.totalorder %s25, 2
      %p292 = por %p290, %p291
      %p293 = scmp.ne.s32.totalorder %s285, %s288
      %p294 = scmp.eq.s32.totalorder %s25, 0
      %p295 = por %p293, %p294
      %p296 = scmp.ne.s32.totalorder %s285, %s288
      %p297 = scmp.eq.s32.totalorder %s30, 2
      %p298 = por %p296, %p297
      %p299 = scmp.ne.s32.totalorder %s288, %s289
      %p300 = scmp.eq.s32.totalorder %s30, 0
      %p301 = por %p299, %p300
      %p302 = scmp.ne.s32.totalorder %s288, %s289
      %p303 = scmp.eq.s32.totalorder %s31, 2
      %p304 = por %p302, %p303
      %p306 = scmp.ne.s32.totalorder %s289, %s305
      %p307 = scmp.eq.s32.totalorder %s31, 0
      %p308 = por %p306, %p307
      %s309 = ssub.s32 %s25, %s32
      %p310 = scmp.eq.s32.totalorder %s309, 0
      %s312 = sadd.s32 %s311, 1
      %s313 = scalar_select %p310, %s311, %s312
      %p316 = pneg %p310
      %p317 = scmp.eq.s32.totalorder %s25, 2
      %p318 = por %p316, %p317
      %p319 = scmp.ne.s32.totalorder %s311, %s314
      %p320 = scmp.eq.s32.totalorder %s25, 0
      %p321 = por %p319, %p320
      %p322 = scmp.ne.s32.totalorder %s311, %s314
      %p323 = scmp.eq.s32.totalorder %s30, 2
      %p324 = por %p322, %p323
      %p325 = scmp.ne.s32.totalorder %s314, %s315
      %p326 = scmp.eq.s32.totalorder %s30, 0
      %p327 = por %p325, %p326
      %p328 = scmp.ne.s32.totalorder %s314, %s315
      %p329 = scmp.eq.s32.totalorder %s31, 2
      %p330 = por %p328, %p329
      %p332 = scmp.ne.s32.totalorder %s315, %s331
      %p333 = scmp.eq.s32.totalorder %s31, 0
      %p334 = por %p332, %p333
      %s335 = ssub.s32 %s25, %s32
      %p336 = scmp.eq.s32.totalorder %s335, 0
      %s338 = sadd.s32 %s337, 1
      %s339 = scalar_select %p336, %s337, %s338
      %p342 = pneg %p336
      %p343 = scmp.eq.s32.totalorder %s25, 2
      %p344 = por %p342, %p343
      %p345 = scmp.ne.s32.totalorder %s337, %s340
      %p346 = scmp.eq.s32.totalorder %s25, 0
      %p347 = por %p345, %p346
      %p348 = scmp.ne.s32.totalorder %s337, %s340
      %p349 = scmp.eq.s32.totalorder %s30, 2
      %p350 = por %p348, %p349
      %p351 = scmp.ne.s32.totalorder %s340, %s341
      %p352 = scmp.eq.s32.totalorder %s30, 0
      %p353 = por %p351, %p352
      %p354 = scmp.ne.s32.totalorder %s340, %s341
      %p355 = scmp.eq.s32.totalorder %s31, 2
      %p356 = por %p354, %p355
      %p358 = scmp.ne.s32.totalorder %s341, %s357
      %p359 = scmp.eq.s32.totalorder %s31, 0
      %p360 = por %p358, %p359
      %s361 = ssub.s32 %s25, %s32
      %p362 = scmp.eq.s32.totalorder %s361, 0
      %s364 = sadd.s32 %s363, 1
      %s365 = scalar_select %p362, %s363, %s364
      %p368 = pneg %p362
      %p369 = scmp.eq.s32.totalorder %s25, 2
      %p370 = por %p368, %p369
      %p371 = scmp.ne.s32.totalorder %s363, %s366
      %p372 = scmp.eq.s32.totalorder %s25, 0
      %p373 = por %p371, %p372
      %p374 = scmp.ne.s32.totalorder %s363, %s366
      %p375 = scmp.eq.s32.totalorder %s30, 2
      %p376 = por %p374, %p375
      %p377 = scmp.ne.s32.totalorder %s366, %s367
      %p378 = scmp.eq.s32.totalorder %s30, 0
      %p379 = por %p377, %p378
      %p380 = scmp.ne.s32.totalorder %s366, %s367
      %p381 = scmp.eq.s32.totalorder %s31, 2
      %p382 = por %p380, %p381
      %p384 = scmp.ne.s32.totalorder %s367, %s383
      %p385 = scmp.eq.s32.totalorder %s31, 0
      %p386 = por %p384, %p385
      %s388 = sadd.s32 %s387, 1
      %p391 = scmp.eq.s32.totalorder %s25, 2
      %p392 = scmp.ne.s32.totalorder %s387, %s389
      %p393 = scmp.eq.s32.totalorder %s25, 0
      %p394 = por %p392, %p393
      %p395 = scmp.ne.s32.totalorder %s387, %s389
      %p396 = scmp.eq.s32.totalorder %s30, 2
      %p397 = por %p395, %p396
      %p398 = scmp.ne.s32.totalorder %s389, %s390
      %p399 = scmp.eq.s32.totalorder %s30, 0
      %p400 = por %p398, %p399
      %p401 = scmp.ne.s32.totalorder %s389, %s390
      %p402 = scmp.eq.s32.totalorder %s31, 2
      %p403 = por %p401, %p402
      %p405 = scmp.ne.s32.totalorder %s390, %s404
      %p406 = scmp.eq.s32.totalorder %s31, 0
      %p407 = por %p405, %p406
      %s409 = sadd.s32 %s408, 1
      %p412 = scmp.eq.s32.totalorder %s25, 2
      %p413 = scmp.ne.s32.totalorder %s408, %s410
      %p414 = scmp.eq.s32.totalorder %s25, 0
      %p415 = por %p413, %p414
      %p416 = scmp.ne.s32.totalorder %s408, %s410
      %p417 = scmp.eq.s32.totalorder %s30, 2
      %p418 = por %p416, %p417
      %p419 = scmp.ne.s32.totalorder %s410, %s411
      %p420 = scmp.eq.s32.totalorder %s30, 0
      %p421 = por %p419, %p420
      %p422 = scmp.ne.s32.totalorder %s410, %s411
      %p423 = scmp.eq.s32.totalorder %s31, 2
      %p424 = por %p422, %p423
      %p426 = scmp.ne.s32.totalorder %s411, %s425
      %p427 = scmp.eq.s32.totalorder %s31, 0
      %p428 = por %p426, %p427
      %s430 = sadd.s32 %s429, 1
      %p433 = scmp.eq.s32.totalorder %s25, 2
      %p434 = scmp.ne.s32.totalorder %s429, %s431
      %p435 = scmp.eq.s32.totalorder %s25, 0
      %p436 = por %p434, %p435
      %p437 = scmp.ne.s32.totalorder %s429, %s431
      %p438 = scmp.eq.s32.totalorder %s30, 2
      %p439 = por %p437, %p438
      %p440 = scmp.ne.s32.totalorder %s431, %s432
      %p441 = scmp.eq.s32.totalorder %s30, 0
      %p442 = por %p440, %p441
      %p443 = scmp.ne.s32.totalorder %s431, %s432
      %p444 = scmp.eq.s32.totalorder %s31, 2
      %p445 = por %p443, %p444
      %p447 = scmp.ne.s32.totalorder %s432, %s446
      %p448 = scmp.eq.s32.totalorder %s31, 0
      %p449 = por %p447, %p448
      %p450 = scmp.le.s32.totalorder 1, %s25
      %p451 = scmp.lt.s32.totalorder %s25, 4
      %p452 = pnand %p450, %p451
      %p453 = pneg %p452
      // Predicated region
      $region9: #{tpu_custom_call.1} parent=5 // pred_check
        _
      $region10: #{tpu_custom_call.1} parent=5 // pred_check_branch
        %455 = sbr.rel (%p452) target = $region12
      $region11: #{tpu_custom_call.1} parent=5 // pred_region
        %s456 = ssub.s32 %s25, 1
        // Predicated region
        $region13: #{tpu_custom_call.1} parent=11 // pred_check
          %p457 = pneg %p46
        $region14: #{tpu_custom_call.1} parent=11 // pred_check_branch
          %459 = sbr.rel (%p457) target = $region16
        $region15: #{tpu_custom_call.1} parent=11 // pred_region
          %s461 = ssub.s32 512, 512
          %462 = vsyncadd [#allocation5], %s461
          %s463 = sshll.u32 [#allocation4], 4
          %s464 = int_to_ptr.vmem [resolvable:$true] %s463
          %469 = dma.hbm_to_vmem [thread:$0]  %s0, 512, %s464, [#allocation5], 128, 128, 8
        $region16: #{tpu_custom_call.1} parent=11 // pred_fallthru
          _
        // Predicated region
        $region17: #{tpu_custom_call.1} parent=11 // pred_check
          %p470 = pneg %p67
        $region18: #{tpu_custom_call.1} parent=11 // pred_check_branch
          %472 = sbr.rel (%p470) target = $region20
        $region19: #{tpu_custom_call.1} parent=11 // pred_region
          %s474 = ssub.s32 256, 256
          %475 = vsyncadd [#allocation8], %s474
          %s476 = sshll.u32 [#allocation7], 4
          %s477 = int_to_ptr.vmem [resolvable:$true] %s476
          %482 = dma.hbm_to_vmem [thread:$0]  %s1, 256, %s477, [#allocation8], 128, 128, 8
        $region20: #{tpu_custom_call.1} parent=11 // pred_fallthru
          _
        // Predicated region
        $region21: #{tpu_custom_call.1} parent=11 // pred_check
          %p483 = pneg %p400
        $region22: #{tpu_custom_call.1} parent=11 // pred_check_branch
          %485 = sbr.rel (%p483) target = $region24
        $region23: #{tpu_custom_call.1} parent=11 // pred_region
          _
        $region24: #{tpu_custom_call.1} parent=11 // pred_fallthru
          _
        // Predicated region
        $region25: #{tpu_custom_call.1} parent=11 // pred_check
          %p486 = pneg %p421
        $region26: #{tpu_custom_call.1} parent=11 // pred_check_branch
          %488 = sbr.rel (%p486) target = $region28
        $region27: #{tpu_custom_call.1} parent=11 // pred_region
          _
        $region28: #{tpu_custom_call.1} parent=11 // pred_fallthru
          _
      $region12: #{tpu_custom_call.1} parent=5 // pred_fallthru
        _
      %p489 = scmp.lt.s32.totalorder %s25, 3
      // Predicated region
      $region29: #{tpu_custom_call.1} parent=5 // pred_check
        %p490 = pneg %p489
      $region30: #{tpu_custom_call.1} parent=5 // pred_check_branch
        %492 = sbr.rel (%p490) target = $region32
      $region31: #{tpu_custom_call.1} parent=5 // pred_region
        // Predicated region
        $region33: #{tpu_custom_call.1} parent=31 // pred_check
          %p493 = pneg %p87
        $region34: #{tpu_custom_call.1} parent=31 // pred_check_branch
          %495 = sbr.rel (%p493) target = $region36
        $region35: #{tpu_custom_call.1} parent=31 // pred_region
          %p496 = scmp.lt.s32.totalorder %s25, 2
          %s497 = scalar_select %p496, %s25, 2
          %s498 = scalar_lea.vmem %s2, %s497
        $region36: #{tpu_custom_call.1} parent=31 // pred_fallthru
          _
        // Predicated region
        $region37: #{tpu_custom_call.1} parent=31 // pred_check
          %p499 = pneg %p113
        $region38: #{tpu_custom_call.1} parent=31 // pred_check_branch
          %501 = sbr.rel (%p499) target = $region40
        $region39: #{tpu_custom_call.1} parent=31 // pred_region
          %s502 = sand.u32 %s25, 1
          %s503 = scalar_lea.sflag [#allocation5], %s502
          %s504 = sand.u32 %s103, 1
          %s505 = scalar_lea.vmem [#allocation9], %s504
          %s507 = ssub.s32 16, 16
          %508 = vsyncadd %s503, %s507
          %s509 = smul.addr %s25, 16
          %s510 = scalar_lea.hbm %s3, %s509
          %s512 = sshll.u32 %s505, 4
          %s513 = int_to_ptr.vmem [resolvable:$true] %s512
          %515 = dma.hbm_to_vmem [thread:$0]  %s510, 16, %s513, %s503
        $region40: #{tpu_custom_call.1} parent=31 // pred_fallthru
          _
        // Predicated region
        $region41: #{tpu_custom_call.1} parent=31 // pred_check
          %p516 = pneg %p139
        $region42: #{tpu_custom_call.1} parent=31 // pred_check_branch
          %518 = sbr.rel (%p516) target = $region44
        $region43: #{tpu_custom_call.1} parent=31 // pred_region
          %s519 = sand.u32 %s25, 1
          %s520 = scalar_lea.sflag [#allocation5], %s519
          %s521 = sand.u32 %s129, 1
          %s522 = smul.addr %s521, 192
          %s523 = scalar_lea.vmem [#allocation10], %s522
          %s525 = ssub.s32 3072, 3072
          %526 = vsyncadd %s520, %s525
          %s527 = smul.addr %s25, 48
          %s528 = smul.addr %s527, 64
          %s529 = scalar_lea.hbm %s4, %s528
          %s530 = sshll.u32 %s523, 4
          %s531 = int_to_ptr.vmem [resolvable:$true] %s530
          %536 = dma.hbm_to_vmem [thread:$0]  %s529, 3072, %s531, %s520, 192, 192, 12
        $region44: #{tpu_custom_call.1} parent=31 // pred_fallthru
          _
        // Predicated region
        $region45: #{tpu_custom_call.1} parent=31 // pred_check
          %p537 = pneg %p165
        $region46: #{tpu_custom_call.1} parent=31 // pred_check_branch
          %539 = sbr.rel (%p537) target = $region48
        $region47: #{tpu_custom_call.1} parent=31 // pred_region
          %s540 = sand.u32 %s25, 1
          %s541 = scalar_lea.sflag [#allocation5], %s540
          %s542 = sand.u32 %s155, 1
          %s543 = smul.addr %s542, 3
          %s544 = scalar_lea.vmem [#allocation11], %s543
          %s546 = ssub.s32 48, 48
          %547 = vsyncadd %s541, %s546
          %s548 = smul.addr %s25, 3
          %s549 = smul.addr %s548, 16
          %s550 = scalar_lea.hbm %s5, %s549
          %s552 = sshll.u32 %s544, 4
          %s553 = int_to_ptr.vmem [resolvable:$true] %s552
          %555 = dma.hbm_to_vmem [thread:$0]  %s550, 48, %s553, %s541
        $region48: #{tpu_custom_call.1} parent=31 // pred_fallthru
          _
        // Predicated region
        $region49: #{tpu_custom_call.1} parent=31 // pred_check
          %p556 = pneg %p191
        $region50: #{tpu_custom_call.1} parent=31 // pred_check_branch
          %558 = sbr.rel (%p556) target = $region52
        $region51: #{tpu_custom_call.1} parent=31 // pred_region
          %s559 = sand.u32 %s25, 1
          %s560 = scalar_lea.sflag [#allocation5], %s559
          %s561 = sand.u32 %s181, 1
          %s562 = smul.addr %s561, 64
          %s563 = scalar_lea.vmem [#allocation12], %s562
          %s565 = ssub.s32 1024, 1024
          %566 = vsyncadd %s560, %s565
          %s567 = smul.addr %s25, 16
          %s568 = smul.addr %s567, 64
          %s569 = scalar_lea.hbm %s6, %s568
          %s570 = sshll.u32 %s563, 4
          %s571 = int_to_ptr.vmem [resolvable:$true] %s570
          %576 = dma.hbm_to_vmem [thread:$0]  %s569, 1024, %s571, %s560, 64, 64, 4
        $region52: #{tpu_custom_call.1} parent=31 // pred_fallthru
          _
        // Predicated region
        $region53: #{tpu_custom_call.1} parent=31 // pred_check
          %p577 = pneg %p217
        $region54: #{tpu_custom_call.1} parent=31 // pred_check_branch
          %579 = sbr.rel (%p577) target = $region56
        $region55: #{tpu_custom_call.1} parent=31 // pred_region
          %p580 = scmp.lt.s32.totalorder %s25, 2
          %s581 = scalar_select %p580, %s25, 2
          %s582 = scalar_lea.vmem %s7, %s581
        $region56: #{tpu_custom_call.1} parent=31 // pred_fallthru
          _
        // Predicated region
        $region57: #{tpu_custom_call.1} parent=31 // pred_check
          %p583 = pneg %p243
        $region58: #{tpu_custom_call.1} parent=31 // pred_check_branch
          %585 = sbr.rel (%p583) target = $region60
        $region59: #{tpu_custom_call.1} parent=31 // pred_region
          %s586 = sand.u32 %s25, 1
          %s587 = scalar_lea.sflag [#allocation5], %s586
          %s588 = sand.u32 %s233, 1
          %s589 = scalar_lea.vmem [#allocation13], %s588
          %s591 = ssub.s32 16, 16
          %592 = vsyncadd %s587, %s591
          %s593 = smul.addr %s25, 16
          %s594 = scalar_lea.hbm %s8, %s593
          %s596 = sshll.u32 %s589, 4
          %s597 = int_to_ptr.vmem [resolvable:$true] %s596
          %599 = dma.hbm_to_vmem [thread:$0]  %s594, 16, %s597, %s587
        $region60: #{tpu_custom_call.1} parent=31 // pred_fallthru
          _
        // Predicated region
        $region61: #{tpu_custom_call.1} parent=31 // pred_check
          %p600 = pneg %p269
        $region62: #{tpu_custom_call.1} parent=31 // pred_check_branch
          %602 = sbr.rel (%p600) target = $region64
        $region63: #{tpu_custom_call.1} parent=31 // pred_region
          %s603 = sand.u32 %s25, 1
          %s604 = scalar_lea.sflag [#allocation5], %s603
          %s605 = sand.u32 %s259, 1
          %s606 = scalar_lea.vmem [#allocation14], %s605
          %s608 = ssub.s32 16, 16
          %609 = vsyncadd %s604, %s608
          %s610 = smul.addr %s25, 16
          %s611 = scalar_lea.hbm %s9, %s610
          %s613 = sshll.u32 %s606, 4
          %s614 = int_to_ptr.vmem [resolvable:$true] %s613
          %616 = dma.hbm_to_vmem [thread:$0]  %s611, 16, %s614, %s604
        $region64: #{tpu_custom_call.1} parent=31 // pred_fallthru
          _
        // Predicated region
        $region65: #{tpu_custom_call.1} parent=31 // pred_check
          %p617 = pneg %p295
        $region66: #{tpu_custom_call.1} parent=31 // pred_check_branch
          %619 = sbr.rel (%p617) target = $region68
        $region67: #{tpu_custom_call.1} parent=31 // pred_region
          %s620 = sand.u32 %s25, 1
          %s621 = scalar_lea.sflag [#allocation5], %s620
          %s622 = sand.u32 %s285, 1
          %s623 = smul.addr %s622, 256
          %s624 = scalar_lea.vmem [#allocation15], %s623
          %s626 = ssub.s32 4096, 4096
          %627 = vsyncadd %s621, %s626
          %s628 = smul.addr %s25, 64
          %s629 = smul.addr %s628, 64
          %s630 = scalar_lea.hbm %s10, %s629
          %s631 = sshll.u32 %s624, 4
          %s632 = int_to_ptr.vmem [resolvable:$true] %s631
          %637 = dma.hbm_to_vmem [thread:$0]  %s630, 4096, %s632, %s621, 256, 256, 16
        $region68: #{tpu_custom_call.1} parent=31 // pred_fallthru
          _
        // Predicated region
        $region69: #{tpu_custom_call.1} parent=31 // pred_check
          %p638 = pneg %p321
        $region70: #{tpu_custom_call.1} parent=31 // pred_check_branch
          %640 = sbr.rel (%p638) target = $region72
        $region71: #{tpu_custom_call.1} parent=31 // pred_region
          %p641 = scmp.lt.s32.totalorder %s25, 2
          %s642 = scalar_select %p641, %s25, 2
          %s643 = smul.addr %s642, 4
          %s644 = scalar_lea.vmem %s11, %s643
        $region72: #{tpu_custom_call.1} parent=31 // pred_fallthru
          _
        // Predicated region
        $region73: #{tpu_custom_call.1} parent=31 // pred_check
          %p645 = pneg %p347
        $region74: #{tpu_custom_call.1} parent=31 // pred_check_branch
          %647 = sbr.rel (%p645) target = $region76
        $region75: #{tpu_custom_call.1} parent=31 // pred_region
          %s648 = sand.u32 %s25, 1
          %s649 = scalar_lea.sflag [#allocation5], %s648
          %s650 = sand.u32 %s337, 1
          %s651 = smul.addr %s650, 256
          %s652 = scalar_lea.vmem [#allocation16], %s651
          %s654 = ssub.s32 4096, 4096
          %655 = vsyncadd %s649, %s654
          %s656 = smul.addr %s25, 64
          %s657 = smul.addr %s656, 64
          %s658 = scalar_lea.hbm %s12, %s657
          %s659 = sshll.u32 %s652, 4
          %s660 = int_to_ptr.vmem [resolvable:$true] %s659
          %665 = dma.hbm_to_vmem [thread:$0]  %s658, 4096, %s660, %s649, 64, 64, 4
        $region76: #{tpu_custom_call.1} parent=31 // pred_fallthru
          _
        // Predicated region
        $region77: #{tpu_custom_call.1} parent=31 // pred_check
          %p666 = pneg %p373
        $region78: #{tpu_custom_call.1} parent=31 // pred_check_branch
          %668 = sbr.rel (%p666) target = $region80
        $region79: #{tpu_custom_call.1} parent=31 // pred_region
          %p669 = scmp.lt.s32.totalorder %s25, 2
          %s670 = scalar_select %p669, %s25, 2
          %s671 = scalar_lea.vmem %s13, %s670
        $region80: #{tpu_custom_call.1} parent=31 // pred_fallthru
          _
      $region32: #{tpu_custom_call.1} parent=5 // pred_fallthru
        _
      %p672 = scmp.le.s32.totalorder 1, %s25
      %p673 = scmp.lt.s32.totalorder %s25, 4
      %p674 = pnand %p672, %p673
      %p675 = pneg %p674
      // Predicated region
      $region81: #{tpu_custom_call.1} parent=5 // pred_check
        _
      $region82: #{tpu_custom_call.1} parent=5 // pred_check_branch
        %677 = sbr.rel (%p674) target = $region84
      $region83: #{tpu_custom_call.1} parent=5 // pred_region
        %s678 = ssub.s32 %s25, 1
        // Predicated region
        $region85: #{tpu_custom_call.1} parent=83 // pred_check
          %p679 = pneg %p46
        $region86: #{tpu_custom_call.1} parent=83 // pred_check_branch
          %681 = sbr.rel (%p679) target = $region88
        $region87: #{tpu_custom_call.1} parent=83 // pred_region
          %682 = dma.done [#allocation5], 512
        $region88: #{tpu_custom_call.1} parent=83 // pred_fallthru
          _
        // Predicated region
        $region89: #{tpu_custom_call.1} parent=83 // pred_check
          %p683 = pneg %p67
        $region90: #{tpu_custom_call.1} parent=83 // pred_check_branch
          %685 = sbr.rel (%p683) target = $region92
        $region91: #{tpu_custom_call.1} parent=83 // pred_region
          %686 = dma.done [#allocation8], 256
        $region92: #{tpu_custom_call.1} parent=83 // pred_fallthru
          _
        %s687 = sand.u32 %s30, 1
        %s688 = scalar_lea.sflag [#allocation5], %s687
        %s689 = sand.u32 %s106, 1
        %s690 = scalar_lea.vmem [#allocation9], %s689
        // Predicated region
        $region93: #{tpu_custom_call.1} parent=83 // pred_check
          %p691 = pneg %p119
        $region94: #{tpu_custom_call.1} parent=83 // pred_check_branch
          %693 = sbr.rel (%p691) target = $region96
        $region95: #{tpu_custom_call.1} parent=83 // pred_region
          %694 = dma.done %s688, 16
        $region96: #{tpu_custom_call.1} parent=83 // pred_fallthru
          _
        %s695 = sand.u32 %s30, 1
        %s696 = scalar_lea.sflag [#allocation5], %s695
        %s697 = sand.u32 %s132, 1
        %s698 = smul.addr %s697, 192
        %s699 = scalar_lea.vmem [#allocation10], %s698
        // Predicated region
        $region97: #{tpu_custom_call.1} parent=83 // pred_check
          %p700 = pneg %p145
        $region98: #{tpu_custom_call.1} parent=83 // pred_check_branch
          %702 = sbr.rel (%p700) target = $region100
        $region99: #{tpu_custom_call.1} parent=83 // pred_region
          %703 = dma.done %s696, 3072
        $region100: #{tpu_custom_call.1} parent=83 // pred_fallthru
          _
        %s704 = sand.u32 %s30, 1
        %s705 = scalar_lea.sflag [#allocation5], %s704
        %s706 = sand.u32 %s158, 1
        %s707 = smul.addr %s706, 3
        %s708 = scalar_lea.vmem [#allocation11], %s707
        // Predicated region
        $region101: #{tpu_custom_call.1} parent=83 // pred_check
          %p709 = pneg %p171
        $region102: #{tpu_custom_call.1} parent=83 // pred_check_branch
          %711 = sbr.rel (%p709) target = $region104
        $region103: #{tpu_custom_call.1} parent=83 // pred_region
          %712 = dma.done %s705, 48
        $region104: #{tpu_custom_call.1} parent=83 // pred_fallthru
          _
        %s713 = sand.u32 %s30, 1
        %s714 = scalar_lea.sflag [#allocation5], %s713
        %s715 = sand.u32 %s184, 1
        %s716 = smul.addr %s715, 64
        %s717 = scalar_lea.vmem [#allocation12], %s716
        // Predicated region
        $region105: #{tpu_custom_call.1} parent=83 // pred_check
          %p718 = pneg %p197
        $region106: #{tpu_custom_call.1} parent=83 // pred_check_branch
          %720 = sbr.rel (%p718) target = $region108
        $region107: #{tpu_custom_call.1} parent=83 // pred_region
          %721 = dma.done %s714, 1024
        $region108: #{tpu_custom_call.1} parent=83 // pred_fallthru
          _
        %s722 = sand.u32 %s30, 1
        %s723 = scalar_lea.sflag [#allocation5], %s722
        %s724 = sand.u32 %s236, 1
        %s725 = scalar_lea.vmem [#allocation13], %s724
        // Predicated region
        $region109: #{tpu_custom_call.1} parent=83 // pred_check
          %p726 = pneg %p249
        $region110: #{tpu_custom_call.1} parent=83 // pred_check_branch
          %728 = sbr.rel (%p726) target = $region112
        $region111: #{tpu_custom_call.1} parent=83 // pred_region
          %729 = dma.done %s723, 16
        $region112: #{tpu_custom_call.1} parent=83 // pred_fallthru
          _
        %s730 = sand.u32 %s30, 1
        %s731 = scalar_lea.sflag [#allocation5], %s730
        %s732 = sand.u32 %s262, 1
        %s733 = scalar_lea.vmem [#allocation14], %s732
        // Predicated region
        $region113: #{tpu_custom_call.1} parent=83 // pred_check
          %p734 = pneg %p275
        $region114: #{tpu_custom_call.1} parent=83 // pred_check_branch
          %736 = sbr.rel (%p734) target = $region116
        $region115: #{tpu_custom_call.1} parent=83 // pred_region
          %737 = dma.done %s731, 16
        $region116: #{tpu_custom_call.1} parent=83 // pred_fallthru
          _
        %s738 = sand.u32 %s30, 1
        %s739 = scalar_lea.sflag [#allocation5], %s738
        %s740 = sand.u32 %s288, 1
        %s741 = smul.addr %s740, 256
        %s742 = scalar_lea.vmem [#allocation15], %s741
        // Predicated region
        $region117: #{tpu_custom_call.1} parent=83 // pred_check
          %p743 = pneg %p301
        $region118: #{tpu_custom_call.1} parent=83 // pred_check_branch
          %745 = sbr.rel (%p743) target = $region120
        $region119: #{tpu_custom_call.1} parent=83 // pred_region
          %746 = dma.done %s739, 4096
        $region120: #{tpu_custom_call.1} parent=83 // pred_fallthru
          _
        %s747 = sand.u32 %s30, 1
        %s748 = scalar_lea.sflag [#allocation5], %s747
        %s749 = sand.u32 %s340, 1
        %s750 = smul.addr %s749, 256
        %s751 = scalar_lea.vmem [#allocation16], %s750
        // Predicated region
        $region121: #{tpu_custom_call.1} parent=83 // pred_check
          %p752 = pneg %p353
        $region122: #{tpu_custom_call.1} parent=83 // pred_check_branch
          %754 = sbr.rel (%p752) target = $region124
        $region123: #{tpu_custom_call.1} parent=83 // pred_region
          %755 = dma.done %s748, 4096
        $region124: #{tpu_custom_call.1} parent=83 // pred_fallthru
          _
        %p756 = pneg %p46
        %p757 = pneg %p43
        %p758 = pneg %p67
        %p759 = pneg %p64
        %p760 = scmp.lt.s32.totalorder %s30, 2
        %s761 = scalar_select %p760, %s30, 2
        %s762 = scalar_lea.vmem %s2, %s761
        %p763 = pneg %p93
        %p764 = pneg %p90
        %s765 = sand.u32 %s30, 1
        %s766 = scalar_lea.sflag [#allocation5], %s765
        %s767 = sand.u32 %s106, 1
        %s768 = scalar_lea.vmem [#allocation9], %s767
        %p769 = pneg %p119
        %p770 = pneg %p116
        %s771 = sand.u32 %s30, 1
        %s772 = scalar_lea.sflag [#allocation5], %s771
        %s773 = sand.u32 %s132, 1
        %s774 = smul.addr %s773, 192
        %s775 = scalar_lea.vmem [#allocation10], %s774
        %p776 = pneg %p145
        %p777 = pneg %p142
        %s778 = sand.u32 %s30, 1
        %s779 = scalar_lea.sflag [#allocation5], %s778
        %s780 = sand.u32 %s158, 1
        %s781 = smul.addr %s780, 3
        %s782 = scalar_lea.vmem [#allocation11], %s781
        %p783 = pneg %p171
        %p784 = pneg %p168
        %s785 = sand.u32 %s30, 1
        %s786 = scalar_lea.sflag [#allocation5], %s785
        %s787 = sand.u32 %s184, 1
        %s788 = smul.addr %s787, 64
        %s789 = scalar_lea.vmem [#allocation12], %s788
        %p790 = pneg %p197
        %p791 = pneg %p194
        %p792 = scmp.lt.s32.totalorder %s30, 2
        %s793 = scalar_select %p792, %s30, 2
        %s794 = scalar_lea.vmem %s7, %s793
        %p795 = pneg %p223
        %p796 = pneg %p220
        %s797 = sand.u32 %s30, 1
        %s798 = scalar_lea.sflag [#allocation5], %s797
        %s799 = sand.u32 %s236, 1
        %s800 = scalar_lea.vmem [#allocation13], %s799
        %p801 = pneg %p249
        %p802 = pneg %p246
        %s803 = sand.u32 %s30, 1
        %s804 = scalar_lea.sflag [#allocation5], %s803
        %s805 = sand.u32 %s262, 1
        %s806 = scalar_lea.vmem [#allocation14], %s805
        %p807 = pneg %p275
        %p808 = pneg %p272
        %s809 = sand.u32 %s30, 1
        %s810 = scalar_lea.sflag [#allocation5], %s809
        %s811 = sand.u32 %s288, 1
        %s812 = smul.addr %s811, 256
        %s813 = scalar_lea.vmem [#allocation15], %s812
        %p814 = pneg %p301
        %p815 = pneg %p298
        %p816 = scmp.lt.s32.totalorder %s30, 2
        %s817 = scalar_select %p816, %s30, 2
        %s818 = smul.addr %s817, 4
        %s819 = scalar_lea.vmem %s11, %s818
        %p820 = pneg %p327
        %p821 = pneg %p324
        %s822 = sand.u32 %s30, 1
        %s823 = scalar_lea.sflag [#allocation5], %s822
        %s824 = sand.u32 %s340, 1
        %s825 = smul.addr %s824, 256
        %s826 = scalar_lea.vmem [#allocation16], %s825
        %p827 = pneg %p353
        %p828 = pneg %p350
        %p829 = scmp.lt.s32.totalorder %s30, 2
        %s830 = scalar_select %p829, %s30, 2
        %s831 = scalar_lea.vmem %s13, %s830
        %p832 = pneg %p379
        %p833 = pneg %p376
        %p834 = pneg %p400
        %p835 = pneg %p397
        %p836 = pneg %p421
        %p837 = pneg %p418
        %p838 = pneg %p442
        %p839 = pneg %p439
        %p840 = scmp.lt.s32.totalorder %s30, 2
        %s841 = scalar_select %p840, %s30, 2
        %s842 = scalar_lea.vmem %s2, %s841
        %p843 = scmp.lt.s32.totalorder %s30, 2
        %s844 = scalar_select %p843, %s30, 2
        %s845 = scalar_lea.vmem %s7, %s844
        %p846 = scmp.lt.s32.totalorder %s30, 2
        %s847 = scalar_select %p846, %s30, 2
        %s848 = smul.addr %s847, 4
        %s849 = scalar_lea.vmem %s11, %s848
        %p850 = scmp.lt.s32.totalorder %s30, 2
        %s851 = scalar_select %p850, %s30, 2
        %s852 = scalar_lea.vmem %s13, %s851
        %p854 = scmp.eq.s32.totalorder %s30, 0
        // Predicated region
        $region125: #{tpu_custom_call.1} parent=83 // pred_check
          %p855 = pneg %p854
        $region126: #{tpu_custom_call.1} parent=83 // pred_check_branch
          %857 = sbr.rel (%p855) target = $region128
        $region127: #{tpu_custom_call.1} parent=83 // pred_region
          %v858 = vld [vmem:[#allocation4] sm:$0xff]
          %v859 = vld [vmem:[#allocation4 + $0x8] sm:$0xff]
          %v860 = vld [vmem:[#allocation4 + $0x10] sm:$0xff]
          %v861 = vld [vmem:[#allocation4 + $0x18] sm:$0xff]
          %862 = vst [vmem:[#allocation2] sm:$0xff] %v858
          %863 = vst [vmem:[#allocation2 + $0x8] sm:$0xff] %v859
          %864 = vst [vmem:[#allocation2 + $0x10] sm:$0xff] %v860
          %865 = vst [vmem:[#allocation2 + $0x18] sm:$0xff] %v861
        $region128: #{tpu_custom_call.1} parent=83 // pred_fallthru
          _
        %v866 = vld [vmem:[#allocation2] sm:$0xff]
        %v867 = vld [vmem:[#allocation2 + $0x8] sm:$0xff]
        %v868 = vld [vmem:[#allocation2 + $0x10] sm:$0xff]
        %v869 = vld [vmem:[#allocation2 + $0x18] sm:$0xff]
        %v870 = vld [vmem:[%s842] sm:$0x1]
        %v871 = vld [vmem:[%s690] sm:$0x1]
        %872 = vadd.xlane.f32.xlu0 %v866
        %v873 = vpop.xlane.xlu0 %872
        %874 = vadd.xlane.f32.xlu0 %v867
        %v875 = vpop.xlane.xlu0 %874
        %876 = vadd.xlane.f32.xlu0 %v868
        %v877 = vpop.xlane.xlu0 %876
        %878 = vadd.xlane.f32.xlu0 %v869
        %v879 = vpop.xlane.xlu0 %878
        %v880 = vmul.f32 %v866, %v866
        %v881 = vmul.f32 %v867, %v867
        %v882 = vmul.f32 %v868, %v868
        %v883 = vmul.f32 %v869, %v869
        %884 = vadd.xlane.f32.xlu0 %v880
        %v885 = vpop.xlane.xlu0 %884
        %886 = vadd.xlane.f32.xlu0 %v881
        %v887 = vpop.xlane.xlu0 %886
        %888 = vadd.xlane.f32.xlu0 %v882
        %v889 = vpop.xlane.xlu0 %888
        %890 = vadd.xlane.f32.xlu0 %v883
        %v891 = vpop.xlane.xlu0 %890
        %v892 = vmul.f32 %v873, 0.0078125
        %v893 = vmul.f32 %v875, 0.0078125
        %v894 = vmul.f32 %v877, 0.0078125
        %v895 = vmul.f32 %v879, 0.0078125
        %v896 = vmul.f32 %v885, 0.0078125
        %v897 = vmul.f32 %v887, 0.0078125
        %v898 = vmul.f32 %v889, 0.0078125
        %v899 = vmul.f32 %v891, 0.0078125
        %v900 = vmul.f32 %v892, %v892
        %v901 = vmul.f32 %v893, %v893
        %v902 = vmul.f32 %v894, %v894
        %v903 = vmul.f32 %v895, %v895
        %v904 = vsub.f32 %v896, %v900
        %v905 = vsub.f32 %v897, %v901
        %v906 = vsub.f32 %v898, %v902
        %v907 = vsub.f32 %v899, %v903
        %v908 = vsub.f32 %v866, %v892
        %v909 = vsub.f32 %v867, %v893
        %v910 = vsub.f32 %v868, %v894
        %v911 = vsub.f32 %v869, %v895
        %v912 = vadd.f32 %v904, 1e-05
        %v913 = vadd.f32 %v905, 1e-05
        %v914 = vadd.f32 %v906, 1e-05
        %v915 = vadd.f32 %v907, 1e-05
        %v916 = vrsqrt.pop %v912
        %v917 = vrsqrt.pop %v913
        %v918 = vrsqrt.pop %v914
        %v919 = vrsqrt.pop %v915
        %v920 = vmul.f32 %v908, %v916
        %v921 = vmul.f32 %v909, %v917
        %v922 = vmul.f32 %v910, %v918
        %v923 = vmul.f32 %v911, %v919
        %v925 = vlaneseq
        %v926 = vshrl.u32 %v925, 7
        %v927 = vsub.s32 0, %v926
        %v928 = vrot.slane %v870, %v927
        %v930 = vmul.f32 %v920, %v928
        %v931 = vmul.f32 %v921, %v928
        %v932 = vmul.f32 %v922, %v928
        %v933 = vmul.f32 %v923, %v928
        %v935 = vlaneseq
        %v936 = vshrl.u32 %v935, 7
        %v937 = vsub.s32 0, %v936
        %v938 = vrot.slane %v871, %v937
        %v940 = vadd.f32 %v930, %v938
        %v941 = vadd.f32 %v931, %v938
        %v942 = vadd.f32 %v932, %v938
        %v943 = vadd.f32 %v933, %v938
        %v944 = vpack.c.bf16 %v941, %v940
        %v945 = vpack.c.bf16 %v943, %v942
        %v946 = vld [vmem:[%s699] sm:$0xff]
        %v947 = vld [vmem:[%s699 + $0x8] sm:$0xf]
        %v948 = vld [vmem:[%s699 + $0xc] sm:$0xff]
        %v949 = vld [vmem:[%s699 + $0x14] sm:$0xf]
        %v950 = vld [vmem:[%s699 + $0x18] sm:$0xff]
        %v951 = vld [vmem:[%s699 + $0x20] sm:$0xf]
        %v952 = vld [vmem:[%s699 + $0x24] sm:$0xff]
        %v953 = vld [vmem:[%s699 + $0x2c] sm:$0xf]
        %v954 = vld [vmem:[%s699 + $0x30] sm:$0xff]
        %v955 = vld [vmem:[%s699 + $0x38] sm:$0xf]
        %v956 = vld [vmem:[%s699 + $0x3c] sm:$0xff]
        %v957 = vld [vmem:[%s699 + $0x44] sm:$0xf]
        %v958 = vld [vmem:[%s699 + $0x48] sm:$0xff]
        %v959 = vld [vmem:[%s699 + $0x50] sm:$0xf]
        %v960 = vld [vmem:[%s699 + $0x54] sm:$0xff]
        %v961 = vld [vmem:[%s699 + $0x5c] sm:$0xf]
        %v962 = vld [vmem:[%s699 + $0x60] sm:$0xff]
        %v963 = vld [vmem:[%s699 + $0x68] sm:$0xf]
        %v964 = vld [vmem:[%s699 + $0x6c] sm:$0xff]
        %v965 = vld [vmem:[%s699 + $0x74] sm:$0xf]
        %v966 = vld [vmem:[%s699 + $0x78] sm:$0xff]
        %v967 = vld [vmem:[%s699 + $0x80] sm:$0xf]
        %v968 = vld [vmem:[%s699 + $0x84] sm:$0xff]
        %v969 = vld [vmem:[%s699 + $0x8c] sm:$0xf]
        %v970 = vld [vmem:[%s699 + $0x90] sm:$0xff]
        %v971 = vld [vmem:[%s699 + $0x98] sm:$0xf]
        %v972 = vld [vmem:[%s699 + $0x9c] sm:$0xff]
        %v973 = vld [vmem:[%s699 + $0xa4] sm:$0xf]
        %v974 = vld [vmem:[%s699 + $0xa8] sm:$0xff]
        %v975 = vld [vmem:[%s699 + $0xb0] sm:$0xf]
        %v976 = vld [vmem:[%s699 + $0xb4] sm:$0xff]
        %v977 = vld [vmem:[%s699 + $0xbc] sm:$0xf]
        %v978 = vld [vmem:[%s708] sm:$0x7]
        %v980 = vlaneseq
        %v981 = vshrl.u32 %v980, 7
        %v982 = vsub.s32 0, %v981
        %v983 = vrot.slane %v978, %v982
        %v984 = vlaneseq
        %v985 = vshrl.u32 %v984, 7
        %v986 = vsub.s32 1, %v985
        %v987 = vrot.slane %v978, %v986
        %v988 = vlaneseq
        %v989 = vshrl.u32 %v988, 7
        %v990 = vsub.s32 2, %v989
        %v991 = vrot.slane %v978, %v990
        %v1027 = vunpack.c.l.b16 %v946
        %v1028 = vunpack.c.h.b16 %v946
        %v1029 = vunpack.c.l.b16 %v947
        %v1030 = vunpack.c.l.b16 %v948
        %v1031 = vunpack.c.h.b16 %v948
        %v1032 = vunpack.c.l.b16 %v949
        %v1033 = vunpack.c.l.b16 %v950
        %v1034 = vunpack.c.h.b16 %v950
        %v1035 = vunpack.c.l.b16 %v951
        %v1036 = vunpack.c.l.b16 %v952
        %v1037 = vunpack.c.h.b16 %v952
        %v1038 = vunpack.c.l.b16 %v953
        %v1039 = vunpack.c.l.b16 %v954
        %v1040 = vunpack.c.h.b16 %v954
        %v1041 = vunpack.c.l.b16 %v955
        %v1042 = vunpack.c.l.b16 %v956
        %v1043 = vunpack.c.h.b16 %v956
        %v1044 = vunpack.c.l.b16 %v957
        %v1045 = vunpack.c.l.b16 %v958
        %v1046 = vunpack.c.h.b16 %v958
        %v1047 = vunpack.c.l.b16 %v959
        %v1048 = vunpack.c.l.b16 %v960
        %v1049 = vunpack.c.h.b16 %v960
        %v1050 = vunpack.c.l.b16 %v961
        %v1051 = vunpack.c.l.b16 %v962
        %v1052 = vunpack.c.h.b16 %v962
        %v1053 = vunpack.c.l.b16 %v963
        %v1054 = vunpack.c.l.b16 %v964
        %v1055 = vunpack.c.h.b16 %v964
        %v1056 = vunpack.c.l.b16 %v965
        %v1057 = vunpack.c.l.b16 %v966
        %v1058 = vunpack.c.h.b16 %v966
        %v1059 = vunpack.c.l.b16 %v967
        %v1060 = vunpack.c.l.b16 %v968
        %v1061 = vunpack.c.h.b16 %v968
        %v1062 = vunpack.c.l.b16 %v969
        %v1063 = vunpack.c.l.b16 %v970
        %v1064 = vunpack.c.h.b16 %v970
        %v1065 = vunpack.c.l.b16 %v971
        %v1066 = vunpack.c.l.b16 %v972
        %v1067 = vunpack.c.h.b16 %v972
        %v1068 = vunpack.c.l.b16 %v973
        %v1069 = vunpack.c.l.b16 %v974
        %v1070 = vunpack.c.h.b16 %v974
        %v1071 = vunpack.c.l.b16 %v975
        %v1072 = vunpack.c.l.b16 %v976
        %v1073 = vunpack.c.h.b16 %v976
        %v1074 = vunpack.c.l.b16 %v977
        %v1075 = vpack.c.b16 %v1030, %v1027
        %v1076 = vpack.c.b16 %v1031, %v1028
        %v1077 = vpack.c.b16 %v1032, %v1029
        %v1078 = vpack.c.b16 %v1036, %v1033
        %v1079 = vpack.c.b16 %v1037, %v1034
        %v1080 = vpack.c.b16 %v1038, %v1035
        %v1081 = vpack.c.b16 %v1042, %v1039
        %v1082 = vpack.c.b16 %v1043, %v1040
        %v1083 = vpack.c.b16 %v1044, %v1041
        %v1084 = vpack.c.b16 %v1048, %v1045
        %v1085 = vpack.c.b16 %v1049, %v1046
        %v1086 = vpack.c.b16 %v1050, %v1047
        %v1087 = vpack.c.b16 %v1054, %v1051
        %v1088 = vpack.c.b16 %v1055, %v1052
        %v1089 = vpack.c.b16 %v1056, %v1053
        %v1090 = vpack.c.b16 %v1060, %v1057
        %v1091 = vpack.c.b16 %v1061, %v1058
        %v1092 = vpack.c.b16 %v1062, %v1059
        %v1093 = vpack.c.b16 %v1066, %v1063
        %v1094 = vpack.c.b16 %v1067, %v1064
        %v1095 = vpack.c.b16 %v1068, %v1065
        %v1096 = vpack.c.b16 %v1072, %v1069
        %v1097 = vpack.c.b16 %v1073, %v1070
        %v1098 = vpack.c.b16 %v1074, %v1071
        %1123 = vmatprep.subr.bf16.mxu0 %v1097
        %1124 = vmatpush1.bf16.msra.mxu0 %v1096
        %1125 = vmatprep.subr.bf16.mxu0 %v1094
        %1126 = vmatpush1.bf16.msra.mxu0 %v1093
        %1127 = vmatprep.subr.bf16.mxu0 %v1091
        %1128 = vmatpush1.bf16.msra.mxu0 %v1090
        %1129 = vmatprep.subr.bf16.mxu0 %v1088
        %1130 = vmatpush1.bf16.msra.mxu0 %v1087
        %1131 = vmatprep.subr.bf16.mxu0 %v1085
        %1132 = vmatpush1.bf16.msra.mxu0 %v1084
        %1133 = vmatprep.subr.bf16.mxu0 %v1082
        %1134 = vmatpush1.bf16.msra.mxu0 %v1081
        %1135 = vmatprep.subr.bf16.mxu0 %v1079
        %1136 = vmatpush1.bf16.msra.mxu0 %v1078
        %1137 = vmatprep.subr.bf16.mxu0 %v1076
        %1138 = vmatpush1.bf16.msra.mxu0 %v1075
        %1139 = vmatprep.subr.bf16.mxu0 0
        %1140 = vmatpush2.bf16.msra.mxu0 0
        %1141 = vmatprep.subr.bf16.mxu0 0
        %1142 = vmatpush2.bf16.msra.mxu0 0
        %1143 = vmatprep.subr.bf16.mxu0 0
        %1144 = vmatpush2.bf16.msra.mxu0 0
        %1145 = vmatprep.subr.bf16.mxu0 0
        %1146 = vmatpush2.bf16.msra.mxu0 0
        %1147 = vmatprep.subr.bf16.mxu0 0
        %1148 = vmatpush2.bf16.msra.mxu0 0
        %1149 = vmatprep.subr.bf16.mxu0 0
        %1150 = vmatpush2.bf16.msra.mxu0 0
        %1151 = vmatprep.subr.bf16.mxu0 0
        %1152 = vmatpush2.bf16.msra.mxu0 0
        %1153 = vmatprep.subr.bf16.mxu0 0
        %1154 = vmatpush2.bf16.msra.mxu0 0
        %1155 = vmatprep.mubr.bf16.mxu0 0
        %1156 = vmatmul.mubr.bf16.gmra.mxu0 %v944
        %v1157 = vpop.f32.mrf.mxu0
        %v1158 = vadd.f32 %v983, %v1157
        %v1159 = vpop.f32.mrf.mxu0
        %v1160 = vadd.f32 %v987, %v1159
        %v1161 = vpop.f32.mrf.mxu0
        %v1162 = vadd.f32 %v983, %v1161
        %v1163 = vpop.f32.mrf.mxu0
        %v1164 = vadd.f32 %v987, %v1163
        %1165 = vmatprep.mubr.bf16.mxu0 0
        %1166 = vmatmul.mubr.bf16.gmra.mxu0 %v945
        %v1167 = vpop.f32.mrf.mxu0
        %v1168 = vadd.f32 %v983, %v1167
        %v1169 = vpop.f32.mrf.mxu0
        %v1170 = vadd.f32 %v987, %v1169
        %v1171 = vpop.f32.mrf.mxu0
        %v1172 = vadd.f32 %v983, %v1171
        %v1173 = vpop.f32.mrf.mxu0
        %v1174 = vadd.f32 %v987, %v1173
        %1175 = vdwg.mxu0
        %1176 = vmatprep.subr.bf16.mxu0 0
        %1177 = vmatpush1.bf16.msra.mxu0 %v1098
        %1178 = vmatprep.subr.bf16.mxu0 0
        %1179 = vmatpush1.bf16.msra.mxu0 %v1095
        %1180 = vmatprep.subr.bf16.mxu0 0
        %1181 = vmatpush1.bf16.msra.mxu0 %v1092
        %1182 = vmatprep.subr.bf16.mxu0 0
        %1183 = vmatpush1.bf16.msra.mxu0 %v1089
        %1184 = vmatprep.subr.bf16.mxu0 0
        %1185 = vmatpush1.bf16.msra.mxu0 %v1086
        %1186 = vmatprep.subr.bf16.mxu0 0
        %1187 = vmatpush1.bf16.msra.mxu0 %v1083
        %1188 = vmatprep.subr.bf16.mxu0 0
        %1189 = vmatpush1.bf16.msra.mxu0 %v1080
        %1190 = vmatprep.subr.bf16.mxu0 0
        %1191 = vmatpush1.bf16.msra.mxu0 %v1077
        %1192 = vmatprep.subr.bf16.mxu0 0
        %1193 = vmatpush2.bf16.msra.mxu0 0
        %1194 = vmatprep.subr.bf16.mxu0 0
        %1195 = vmatpush2.bf16.msra.mxu0 0
        %1196 = vmatprep.subr.bf16.mxu0 0
        %1197 = vmatpush2.bf16.msra.mxu0 0
        %1198 = vmatprep.subr.bf16.mxu0 0
        %1199 = vmatpush2.bf16.msra.mxu0 0
        %1200 = vmatprep.subr.bf16.mxu0 0
        %1201 = vmatpush2.bf16.msra.mxu0 0
        %1202 = vmatprep.subr.bf16.mxu0 0
        %1203 = vmatpush2.bf16.msra.mxu0 0
        %1204 = vmatprep.subr.bf16.mxu0 0
        %1205 = vmatpush2.bf16.msra.mxu0 0
        %1206 = vmatprep.subr.bf16.mxu0 0
        %1207 = vmatpush2.bf16.msra.mxu0 0
        %1208 = vmatprep.mubr.bf16.mxu0 0
        %1209 = vmatmul.mubr.bf16.gmra.mxu0 %v944
        %v1210 = vpop.f32.mrf.mxu0
        %v1211 = vadd.f32 %v991, %v1210
        %v1212 = vpop.f32.mrf.mxu0
        %v1213 = vpop.f32.mrf.mxu0
        %v1214 = vadd.f32 %v991, %v1213
        %v1215 = vpop.f32.mrf.mxu0
        %1216 = vmatprep.mubr.bf16.mxu0 0
        %1217 = vmatmul.mubr.bf16.gmra.mxu0 %v945
        %v1218 = vpop.f32.mrf.mxu0
        %v1219 = vadd.f32 %v991, %v1218
        %v1220 = vpop.f32.mrf.mxu0
        %v1221 = vpop.f32.mrf.mxu0
        %v1222 = vadd.f32 %v991, %v1221
        %v1223 = vpop.f32.mrf.mxu0
        %1224 = vdwg.mxu0
        %v1225 = vld [vmem:[#allocation7] sm:$0xff]
        %v1226 = vld [vmem:[#allocation7 + $0x8] sm:$0xff]
        %v1227 = vpack.c.bf16 %v1162, %v1158
        %v1228 = vpack.c.bf16 %v1164, %v1160
        %v1229 = vpack.c.bf16 %v1214, %v1211
        %vm1230 = vcmask 523264
        %v1232 = vsel %vm1230, %v1227, 0
        %v1235 = vsel %vm1230, %v1228, 0
        %1237 = vmatprep.subr.bf16.mxu0 0
        %1238 = vmatpush1.bf16.xpose.msra.mxu0 0
        %1239 = vmatprep.subr.bf16.mxu0 0
        %1240 = vmatpush1.bf16.xpose.msra.mxu0 0
        %1241 = vmatprep.subr.bf16.mxu0 0
        %1242 = vmatpush1.bf16.xpose.msra.mxu0 0
        %1243 = vmatprep.subr.bf16.mxu0 0
        %1244 = vmatpush1.bf16.xpose.msra.mxu0 0
        %1245 = vmatprep.subr.bf16.mxu0 0
        %1246 = vmatpush1.bf16.xpose.msra.mxu0 0
        %1247 = vmatprep.subr.bf16.mxu0 0
        %1248 = vmatpush1.bf16.xpose.msra.mxu0 0
        %1249 = vmatprep.subr.bf16.mxu0 0
        %1250 = vmatpush1.bf16.xpose.msra.mxu0 0
        %1251 = vmatprep.subr.bf16.mxu0 0
        %1252 = vmatpush1.bf16.xpose.msra.mxu0 %v1235
        %1253 = vmatprep.subr.bf16.mxu0 0
        %1254 = vmatpush2.bf16.xpose.msra.mxu0 0
        %1255 = vmatprep.subr.bf16.mxu0 0
        %1256 = vmatpush2.bf16.xpose.msra.mxu0 0
        %1257 = vmatprep.subr.bf16.mxu0 0
        %1258 = vmatpush2.bf16.xpose.msra.mxu0 0
        %1259 = vmatprep.subr.bf16.mxu0 0
        %1260 = vmatpush2.bf16.xpose.msra.mxu0 0
        %1261 = vmatprep.subr.bf16.mxu0 0
        %1262 = vmatpush2.bf16.xpose.msra.mxu0 0
        %1263 = vmatprep.subr.bf16.mxu0 0
        %1264 = vmatpush2.bf16.xpose.msra.mxu0 0
        %1265 = vmatprep.subr.bf16.mxu0 0
        %1266 = vmatpush2.bf16.xpose.msra.mxu0 0
        %1267 = vmatprep.subr.bf16.mxu0 0
        %1268 = vmatpush2.bf16.xpose.msra.mxu0 0
        %1269 = vmatprep.mubr.bf16.mxu0 0
        %1270 = vmatmul.mubr.bf16.gmra.mxu0 %v1232
        %v1271 = vpop.f32.mrf.mxu0
        %v1272 = vadd.f32 %v1225, %v1271
        %v1273 = vpop.f32.mrf.mxu0
        %v1274 = vpop.f32.mrf.mxu0
        %v1275 = vadd.f32 %v1226, %v1274
        %v1276 = vpop.f32.mrf.mxu0
        %1277 = vdwg.mxu0
        %vm1278 = vcmask 130048
        %v1279 = vsel %vm1278, %v1272, -inf
        %1280 = vmax.xlane.f32.xlu0 %v1279
        %v1281 = vpop.xlane.xlu0 %1280
        %v1282 = vsel %vm1278, %v1275, -inf
        %1283 = vmax.xlane.f32.xlu0 %v1282
        %v1284 = vpop.xlane.xlu0 %1283
        %v1285 = vsub.f32 %v1272, %v1281
        %v1286 = vsub.f32 %v1275, %v1284
        %v1287 = vmul.f32 %v1285, 1.442695
        %v1288 = vpow.pop %v1287
        %v1289 = vmul.f32 %v1286, 1.442695
        %v1290 = vpow.pop %v1289
        %v1291 = vsel %vm1278, %v1288, 0.0
        %1292 = vadd.xlane.f32.xlu0 %v1291
        %v1293 = vpop.xlane.xlu0 %1292
        %v1294 = vsel %vm1278, %v1290, 0.0
        %1295 = vadd.xlane.f32.xlu0 %v1294
        %v1296 = vpop.xlane.xlu0 %1295
        %v1297 = vrcp.pop %v1293
        %v1298 = vrcp.pop %v1296
        %v1299 = vpack.c.bf16 %v1290, %v1288
        %v1301 = vsel %vm1278, %v1299, 0
        %1303 = vmatprep.subr.bf16.mxu0 0
        %1304 = vmatpush1.bf16.msra.mxu0 0
        %1305 = vmatprep.subr.bf16.mxu0 0
        %1306 = vmatpush1.bf16.msra.mxu0 0
        %1307 = vmatprep.subr.bf16.mxu0 0
        %1308 = vmatpush1.bf16.msra.mxu0 0
        %1309 = vmatprep.subr.bf16.mxu0 0
        %1310 = vmatpush1.bf16.msra.mxu0 0
        %1311 = vmatprep.subr.bf16.mxu0 0
        %1312 = vmatpush1.bf16.msra.mxu0 0
        %1313 = vmatprep.subr.bf16.mxu0 0
        %1314 = vmatpush1.bf16.msra.mxu0 0
        %1315 = vmatprep.subr.bf16.mxu0 0
        %1316 = vmatpush1.bf16.msra.mxu0 0
        %1317 = vmatprep.subr.bf16.mxu0 0
        %1318 = vmatpush1.bf16.msra.mxu0 %v1229
        %1319 = vmatprep.subr.bf16.mxu0 0
        %1320 = vmatpush2.bf16.msra.mxu0 0
        %1321 = vmatprep.subr.bf16.mxu0 0
        %1322 = vmatpush2.bf16.msra.mxu0 0
        %1323 = vmatprep.subr.bf16.mxu0 0
        %1324 = vmatpush2.bf16.msra.mxu0 0
        %1325 = vmatprep.subr.bf16.mxu0 0
        %1326 = vmatpush2.bf16.msra.mxu0 0
        %1327 = vmatprep.subr.bf16.mxu0 0
        %1328 = vmatpush2.bf16.msra.mxu0 0
        %1329 = vmatprep.subr.bf16.mxu0 0
        %1330 = vmatpush2.bf16.msra.mxu0 0
        %1331 = vmatprep.subr.bf16.mxu0 0
        %1332 = vmatpush2.bf16.msra.mxu0 0
        %1333 = vmatprep.subr.bf16.mxu0 0
        %1334 = vmatpush2.bf16.msra.mxu0 0
        %1335 = vmatprep.mubr.bf16.mxu0 0
        %1336 = vmatmul.mubr.bf16.gmra.mxu0 %v1301
        %v1337 = vpop.f32.mrf.mxu0
        %v1338 = vadd.f32 0.0, %v1337
        %v1339 = vpop.f32.mrf.mxu0
        %v1340 = vpop.f32.mrf.mxu0
        %v1341 = vadd.f32 0.0, %v1340
        %v1342 = vpop.f32.mrf.mxu0
        %1343 = vdwg.mxu0
        %v1344 = vmul.f32 %v1338, %v1297
        %v1345 = vmul.f32 %v1341, %v1298
        %1346 = vst.msk [vmem:[#allocation3] sm:$0xff] %vm1230, %v1344
        %1347 = vst.msk [vmem:[#allocation3 + $0x8] sm:$0xff] %vm1230, %v1345
        %1349 = vrot.lane.b32.xlu0 %v1227, 64
        %v1350 = vpop.permute.xlu0 %1349
        %1352 = vrot.lane.b32.xlu0 %v1228, 64
        %v1353 = vpop.permute.xlu0 %1352
        %v1355 = vsel %vm1230, %v1350, 0
        %v1358 = vsel %vm1230, %v1353, 0
        %1360 = vmatprep.subr.bf16.mxu0 0
        %1361 = vmatpush1.bf16.xpose.msra.mxu0 0
        %1362 = vmatprep.subr.bf16.mxu0 0
        %1363 = vmatpush1.bf16.xpose.msra.mxu0 0
        %1364 = vmatprep.subr.bf16.mxu0 0
        %1365 = vmatpush1.bf16.xpose.msra.mxu0 0
        %1366 = vmatprep.subr.bf16.mxu0 0
        %1367 = vmatpush1.bf16.xpose.msra.mxu0 0
        %1368 = vmatprep.subr.bf16.mxu0 0
        %1369 = vmatpush1.bf16.xpose.msra.mxu0 0
        %1370 = vmatprep.subr.bf16.mxu0 0
        %1371 = vmatpush1.bf16.xpose.msra.mxu0 0
        %1372 = vmatprep.subr.bf16.mxu0 0
        %1373 = vmatpush1.bf16.xpose.msra.mxu0 0
        %1374 = vmatprep.subr.bf16.mxu0 0
        %1375 = vmatpush1.bf16.xpose.msra.mxu0 %v1358
        %1376 = vmatprep.subr.bf16.mxu0 0
        %1377 = vmatpush2.bf16.xpose.msra.mxu0 0
        %1378 = vmatprep.subr.bf16.mxu0 0
        %1379 = vmatpush2.bf16.xpose.msra.mxu0 0
        %1380 = vmatprep.subr.bf16.mxu0 0
        %1381 = vmatpush2.bf16.xpose.msra.mxu0 0
        %1382 = vmatprep.subr.bf16.mxu0 0
        %1383 = vmatpush2.bf16.xpose.msra.mxu0 0
        %1384 = vmatprep.subr.bf16.mxu0 0
        %1385 = vmatpush2.bf16.xpose.msra.mxu0 0
        %1386 = vmatprep.subr.bf16.mxu0 0
        %1387 = vmatpush2.bf16.xpose.msra.mxu0 0
        %1388 = vmatprep.subr.bf16.mxu0 0
        %1389 = vmatpush2.bf16.xpose.msra.mxu0 0
        %1390 = vmatprep.subr.bf16.mxu0 0
        %1391 = vmatpush2.bf16.xpose.msra.mxu0 0
        %1392 = vmatprep.mubr.bf16.mxu0 0
        %1393 = vmatmul.mubr.bf16.gmra.mxu0 %v1355
        %v1394 = vpop.f32.mrf.mxu0
        %v1395 = vadd.f32 %v1225, %v1394
        %v1396 = vpop.f32.mrf.mxu0
        %v1397 = vpop.f32.mrf.mxu0
        %v1398 = vadd.f32 %v1226, %v1397
        %v1399 = vpop.f32.mrf.mxu0
        %1400 = vdwg.mxu0
        %v1401 = vsel %vm1278, %v1395, -inf
        %1402 = vmax.xlane.f32.xlu0 %v1401
        %v1403 = vpop.xlane.xlu0 %1402
        %v1404 = vsel %vm1278, %v1398, -inf
        %1405 = vmax.xlane.f32.xlu0 %v1404
        %v1406 = vpop.xlane.xlu0 %1405
        %v1407 = vsub.f32 %v1395, %v1403
        %v1408 = vsub.f32 %v1398, %v1406
        %v1409 = vmul.f32 %v1407, 1.442695
        %v1410 = vpow.pop %v1409
        %v1411 = vmul.f32 %v1408, 1.442695
        %v1412 = vpow.pop %v1411
        %v1413 = vsel %vm1278, %v1410, 0.0
        %1414 = vadd.xlane.f32.xlu0 %v1413
        %v1415 = vpop.xlane.xlu0 %1414
        %v1416 = vsel %vm1278, %v1412, 0.0
        %1417 = vadd.xlane.f32.xlu0 %v1416
        %v1418 = vpop.xlane.xlu0 %1417
        %v1419 = vrcp.pop %v1415
        %v1420 = vrcp.pop %v1418
        %v1421 = vpack.c.bf16 %v1412, %v1410
        %1423 = vrot.lane.b32.xlu0 %v1229, 64
        %v1424 = vpop.permute.xlu0 %1423
        %v1427 = vsel %vm1278, %v1421, 0
        %1429 = vmatprep.subr.bf16.mxu0 0
        %1430 = vmatpush1.bf16.msra.mxu0 0
        %1431 = vmatprep.subr.bf16.mxu0 0
        %1432 = vmatpush1.bf16.msra.mxu0 0
        %1433 = vmatprep.subr.bf16.mxu0 0
        %1434 = vmatpush1.bf16.msra.mxu0 0
        %1435 = vmatprep.subr.bf16.mxu0 0
        %1436 = vmatpush1.bf16.msra.mxu0 0
        %1437 = vmatprep.subr.bf16.mxu0 0
        %1438 = vmatpush1.bf16.msra.mxu0 0
        %1439 = vmatprep.subr.bf16.mxu0 0
        %1440 = vmatpush1.bf16.msra.mxu0 0
        %1441 = vmatprep.subr.bf16.mxu0 0
        %1442 = vmatpush1.bf16.msra.mxu0 0
        %1443 = vmatprep.subr.bf16.mxu0 0
        %1444 = vmatpush1.bf16.msra.mxu0 %v1424
        %1445 = vmatprep.subr.bf16.mxu0 0
        %1446 = vmatpush2.bf16.msra.mxu0 0
        %1447 = vmatprep.subr.bf16.mxu0 0
        %1448 = vmatpush2.bf16.msra.mxu0 0
        %1449 = vmatprep.subr.bf16.mxu0 0
        %1450 = vmatpush2.bf16.msra.mxu0 0
        %1451 = vmatprep.subr.bf16.mxu0 0
        %1452 = vmatpush2.bf16.msra.mxu0 0
        %1453 = vmatprep.subr.bf16.mxu0 0
        %1454 = vmatpush2.bf16.msra.mxu0 0
        %1455 = vmatprep.subr.bf16.mxu0 0
        %1456 = vmatpush2.bf16.msra.mxu0 0
        %1457 = vmatprep.subr.bf16.mxu0 0
        %1458 = vmatpush2.bf16.msra.mxu0 0
        %1459 = vmatprep.subr.bf16.mxu0 0
        %1460 = vmatpush2.bf16.msra.mxu0 0
        %1461 = vmatprep.mubr.bf16.mxu0 0
        %1462 = vmatmul.mubr.bf16.gmra.mxu0 %v1427
        %v1463 = vpop.f32.mrf.mxu0
        %v1464 = vadd.f32 0.0, %v1463
        %v1465 = vpop.f32.mrf.mxu0
        %v1466 = vpop.f32.mrf.mxu0
        %v1467 = vadd.f32 0.0, %v1466
        %v1468 = vpop.f32.mrf.mxu0
        %1469 = vdwg.mxu0
        %v1470 = vmul.f32 %v1464, %v1419
        %v1471 = vmul.f32 %v1467, %v1420
        %1474 = vrot.lane.b32.xlu0 %v1470, 64
        %v1475 = vpop.permute.xlu0 %1474
        %1476 = vrot.lane.b32.xlu0 %v1471, 64
        %v1477 = vpop.permute.xlu0 %1476
        %vm1480 = vcmask 1048064
        %1481 = vst.msk [vmem:[#allocation3] sm:$0xff] %vm1480, %v1475
        %1482 = vst.msk [vmem:[#allocation3 + $0x8] sm:$0xff] %vm1480, %v1477
        %v1483 = vpack.c.bf16 %v1172, %v1168
        %v1484 = vpack.c.bf16 %v1174, %v1170
        %v1485 = vpack.c.bf16 %v1222, %v1219
        %v1487 = vsel %vm1230, %v1483, 0
        %v1490 = vsel %vm1230, %v1484, 0
        %1492 = vmatprep.subr.bf16.mxu0 0
        %1493 = vmatpush1.bf16.xpose.msra.mxu0 0
        %1494 = vmatprep.subr.bf16.mxu0 0
        %1495 = vmatpush1.bf16.xpose.msra.mxu0 0
        %1496 = vmatprep.subr.bf16.mxu0 0
        %1497 = vmatpush1.bf16.xpose.msra.mxu0 0
        %1498 = vmatprep.subr.bf16.mxu0 0
        %1499 = vmatpush1.bf16.xpose.msra.mxu0 0
        %1500 = vmatprep.subr.bf16.mxu0 0
        %1501 = vmatpush1.bf16.xpose.msra.mxu0 0
        %1502 = vmatprep.subr.bf16.mxu0 0
        %1503 = vmatpush1.bf16.xpose.msra.mxu0 0
        %1504 = vmatprep.subr.bf16.mxu0 0
        %1505 = vmatpush1.bf16.xpose.msra.mxu0 0
        %1506 = vmatprep.subr.bf16.mxu0 0
        %1507 = vmatpush1.bf16.xpose.msra.mxu0 %v1490
        %1508 = vmatprep.subr.bf16.mxu0 0
        %1509 = vmatpush2.bf16.xpose.msra.mxu0 0
        %1510 = vmatprep.subr.bf16.mxu0 0
        %1511 = vmatpush2.bf16.xpose.msra.mxu0 0
        %1512 = vmatprep.subr.bf16.mxu0 0
        %1513 = vmatpush2.bf16.xpose.msra.mxu0 0
        %1514 = vmatprep.subr.bf16.mxu0 0
        %1515 = vmatpush2.bf16.xpose.msra.mxu0 0
        %1516 = vmatprep.subr.bf16.mxu0 0
        %1517 = vmatpush2.bf16.xpose.msra.mxu0 0
        %1518 = vmatprep.subr.bf16.mxu0 0
        %1519 = vmatpush2.bf16.xpose.msra.mxu0 0
        %1520 = vmatprep.subr.bf16.mxu0 0
        %1521 = vmatpush2.bf16.xpose.msra.mxu0 0
        %1522 = vmatprep.subr.bf16.mxu0 0
        %1523 = vmatpush2.bf16.xpose.msra.mxu0 0
        %1524 = vmatprep.mubr.bf16.mxu0 0
        %1525 = vmatmul.mubr.bf16.gmra.mxu0 %v1487
        %v1526 = vpop.f32.mrf.mxu0
        %v1527 = vadd.f32 %v1225, %v1526
        %v1528 = vpop.f32.mrf.mxu0
        %v1529 = vpop.f32.mrf.mxu0
        %v1530 = vadd.f32 %v1226, %v1529
        %v1531 = vpop.f32.mrf.mxu0
        %1532 = vdwg.mxu0
        %v1533 = vsel %vm1278, %v1527, -inf
        %1534 = vmax.xlane.f32.xlu0 %v1533
        %v1535 = vpop.xlane.xlu0 %1534
        %v1536 = vsel %vm1278, %v1530, -inf
        %1537 = vmax.xlane.f32.xlu0 %v1536
        %v1538 = vpop.xlane.xlu0 %1537
        %v1539 = vsub.f32 %v1527, %v1535
        %v1540 = vsub.f32 %v1530, %v1538
        %v1541 = vmul.f32 %v1539, 1.442695
        %v1542 = vpow.pop %v1541
        %v1543 = vmul.f32 %v1540, 1.442695
        %v1544 = vpow.pop %v1543
        %v1545 = vsel %vm1278, %v1542, 0.0
        %1546 = vadd.xlane.f32.xlu0 %v1545
        %v1547 = vpop.xlane.xlu0 %1546
        %v1548 = vsel %vm1278, %v1544, 0.0
        %1549 = vadd.xlane.f32.xlu0 %v1548
        %v1550 = vpop.xlane.xlu0 %1549
        %v1551 = vrcp.pop %v1547
        %v1552 = vrcp.pop %v1550
        %v1553 = vpack.c.bf16 %v1544, %v1542
        %v1555 = vsel %vm1278, %v1553, 0
        %1557 = vmatprep.subr.bf16.mxu0 0
        %1558 = vmatpush1.bf16.msra.mxu0 0
        %1559 = vmatprep.subr.bf16.mxu0 0
        %1560 = vmatpush1.bf16.msra.mxu0 0
        %1561 = vmatprep.subr.bf16.mxu0 0
        %1562 = vmatpush1.bf16.msra.mxu0 0
        %1563 = vmatprep.subr.bf16.mxu0 0
        %1564 = vmatpush1.bf16.msra.mxu0 0
        %1565 = vmatprep.subr.bf16.mxu0 0
        %1566 = vmatpush1.bf16.msra.mxu0 0
        %1567 = vmatprep.subr.bf16.mxu0 0
        %1568 = vmatpush1.bf16.msra.mxu0 0
        %1569 = vmatprep.subr.bf16.mxu0 0
        %1570 = vmatpush1.bf16.msra.mxu0 0
        %1571 = vmatprep.subr.bf16.mxu0 0
        %1572 = vmatpush1.bf16.msra.mxu0 %v1485
        %1573 = vmatprep.subr.bf16.mxu0 0
        %1574 = vmatpush2.bf16.msra.mxu0 0
        %1575 = vmatprep.subr.bf16.mxu0 0
        %1576 = vmatpush2.bf16.msra.mxu0 0
        %1577 = vmatprep.subr.bf16.mxu0 0
        %1578 = vmatpush2.bf16.msra.mxu0 0
        %1579 = vmatprep.subr.bf16.mxu0 0
        %1580 = vmatpush2.bf16.msra.mxu0 0
        %1581 = vmatprep.subr.bf16.mxu0 0
        %1582 = vmatpush2.bf16.msra.mxu0 0
        %1583 = vmatprep.subr.bf16.mxu0 0
        %1584 = vmatpush2.bf16.msra.mxu0 0
        %1585 = vmatprep.subr.bf16.mxu0 0
        %1586 = vmatpush2.bf16.msra.mxu0 0
        %1587 = vmatprep.subr.bf16.mxu0 0
        %1588 = vmatpush2.bf16.msra.mxu0 0
        %1589 = vmatprep.mubr.bf16.mxu0 0
        %1590 = vmatmul.mubr.bf16.gmra.mxu0 %v1555
        %v1591 = vpop.f32.mrf.mxu0
        %v1592 = vadd.f32 0.0, %v1591
        %v1593 = vpop.f32.mrf.mxu0
        %v1594 = vpop.f32.mrf.mxu0
        %v1595 = vadd.f32 0.0, %v1594
        %v1596 = vpop.f32.mrf.mxu0
        %1597 = vdwg.mxu0
        %v1598 = vmul.f32 %v1592, %v1551
        %v1599 = vmul.f32 %v1595, %v1552
        %1600 = vst.msk [vmem:[#allocation3 + $0x10] sm:$0xff] %vm1230, %v1598
        %1601 = vst.msk [vmem:[#allocation3 + $0x18] sm:$0xff] %vm1230, %v1599
        %1603 = vrot.lane.b32.xlu0 %v1483, 64
        %v1604 = vpop.permute.xlu0 %1603
        %1606 = vrot.lane.b32.xlu0 %v1484, 64
        %v1607 = vpop.permute.xlu0 %1606
        %v1609 = vsel %vm1230, %v1604, 0
        %v1612 = vsel %vm1230, %v1607, 0
        %1614 = vmatprep.subr.bf16.mxu0 0
        %1615 = vmatpush1.bf16.xpose.msra.mxu0 0
        %1616 = vmatprep.subr.bf16.mxu0 0
        %1617 = vmatpush1.bf16.xpose.msra.mxu0 0
        %1618 = vmatprep.subr.bf16.mxu0 0
        %1619 = vmatpush1.bf16.xpose.msra.mxu0 0
        %1620 = vmatprep.subr.bf16.mxu0 0
        %1621 = vmatpush1.bf16.xpose.msra.mxu0 0
        %1622 = vmatprep.subr.bf16.mxu0 0
        %1623 = vmatpush1.bf16.xpose.msra.mxu0 0
        %1624 = vmatprep.subr.bf16.mxu0 0
        %1625 = vmatpush1.bf16.xpose.msra.mxu0 0
        %1626 = vmatprep.subr.bf16.mxu0 0
        %1627 = vmatpush1.bf16.xpose.msra.mxu0 0
        %1628 = vmatprep.subr.bf16.mxu0 0
        %1629 = vmatpush1.bf16.xpose.msra.mxu0 %v1612
        %1630 = vmatprep.subr.bf16.mxu0 0
        %1631 = vmatpush2.bf16.xpose.msra.mxu0 0
        %1632 = vmatprep.subr.bf16.mxu0 0
        %1633 = vmatpush2.bf16.xpose.msra.mxu0 0
        %1634 = vmatprep.subr.bf16.mxu0 0
        %1635 = vmatpush2.bf16.xpose.msra.mxu0 0
        %1636 = vmatprep.subr.bf16.mxu0 0
        %1637 = vmatpush2.bf16.xpose.msra.mxu0 0
        %1638 = vmatprep.subr.bf16.mxu0 0
        %1639 = vmatpush2.bf16.xpose.msra.mxu0 0
        %1640 = vmatprep.subr.bf16.mxu0 0
        %1641 = vmatpush2.bf16.xpose.msra.mxu0 0
        %1642 = vmatprep.subr.bf16.mxu0 0
        %1643 = vmatpush2.bf16.xpose.msra.mxu0 0
        %1644 = vmatprep.subr.bf16.mxu0 0
        %1645 = vmatpush2.bf16.xpose.msra.mxu0 0
        %1646 = vmatprep.mubr.bf16.mxu0 0
        %1647 = vmatmul.mubr.bf16.gmra.mxu0 %v1609
        %v1648 = vpop.f32.mrf.mxu0
        %v1649 = vadd.f32 %v1225, %v1648
        %v1650 = vpop.f32.mrf.mxu0
        %v1651 = vpop.f32.mrf.mxu0
        %v1652 = vadd.f32 %v1226, %v1651
        %v1653 = vpop.f32.mrf.mxu0
        %1654 = vdwg.mxu0
        %v1655 = vsel %vm1278, %v1649, -inf
        %1656 = vmax.xlane.f32.xlu0 %v1655
        %v1657 = vpop.xlane.xlu0 %1656
        %v1658 = vsel %vm1278, %v1652, -inf
        %1659 = vmax.xlane.f32.xlu0 %v1658
        %v1660 = vpop.xlane.xlu0 %1659
        %v1661 = vsub.f32 %v1649, %v1657
        %v1662 = vsub.f32 %v1652, %v1660
        %v1663 = vmul.f32 %v1661, 1.442695
        %v1664 = vpow.pop %v1663
        %v1665 = vmul.f32 %v1662, 1.442695
        %v1666 = vpow.pop %v1665
        %v1667 = vsel %vm1278, %v1664, 0.0
        %1668 = vadd.xlane.f32.xlu0 %v1667
        %v1669 = vpop.xlane.xlu0 %1668
        %v1670 = vsel %vm1278, %v1666, 0.0
        %1671 = vadd.xlane.f32.xlu0 %v1670
        %v1672 = vpop.xlane.xlu0 %1671
        %v1673 = vrcp.pop %v1669
        %v1674 = vrcp.pop %v1672
        %v1675 = vpack.c.bf16 %v1666, %v1664
        %1677 = vrot.lane.b32.xlu0 %v1485, 64
        %v1678 = vpop.permute.xlu0 %1677
        %v1681 = vsel %vm1278, %v1675, 0
        %1683 = vmatprep.subr.bf16.mxu0 0
        %1684 = vmatpush1.bf16.msra.mxu0 0
        %1685 = vmatprep.subr.bf16.mxu0 0
        %1686 = vmatpush1.bf16.msra.mxu0 0
        %1687 = vmatprep.subr.bf16.mxu0 0
        %1688 = vmatpush1.bf16.msra.mxu0 0
        %1689 = vmatprep.subr.bf16.mxu0 0
        %1690 = vmatpush1.bf16.msra.mxu0 0
        %1691 = vmatprep.subr.bf16.mxu0 0
        %1692 = vmatpush1.bf16.msra.mxu0 0
        %1693 = vmatprep.subr.bf16.mxu0 0
        %1694 = vmatpush1.bf16.msra.mxu0 0
        %1695 = vmatprep.subr.bf16.mxu0 0
        %1696 = vmatpush1.bf16.msra.mxu0 0
        %1697 = vmatprep.subr.bf16.mxu0 0
        %1698 = vmatpush1.bf16.msra.mxu0 %v1678
        %1699 = vmatprep.subr.bf16.mxu0 0
        %1700 = vmatpush2.bf16.msra.mxu0 0
        %1701 = vmatprep.subr.bf16.mxu0 0
        %1702 = vmatpush2.bf16.msra.mxu0 0
        %1703 = vmatprep.subr.bf16.mxu0 0
        %1704 = vmatpush2.bf16.msra.mxu0 0
        %1705 = vmatprep.subr.bf16.mxu0 0
        %1706 = vmatpush2.bf16.msra.mxu0 0
        %1707 = vmatprep.subr.bf16.mxu0 0
        %1708 = vmatpush2.bf16.msra.mxu0 0
        %1709 = vmatprep.subr.bf16.mxu0 0
        %1710 = vmatpush2.bf16.msra.mxu0 0
        %1711 = vmatprep.subr.bf16.mxu0 0
        %1712 = vmatpush2.bf16.msra.mxu0 0
        %1713 = vmatprep.subr.bf16.mxu0 0
        %1714 = vmatpush2.bf16.msra.mxu0 0
        %1715 = vmatprep.mubr.bf16.mxu0 0
        %1716 = vmatmul.mubr.bf16.gmra.mxu0 %v1681
        %v1717 = vpop.f32.mrf.mxu0
        %v1718 = vadd.f32 0.0, %v1717
        %v1719 = vpop.f32.mrf.mxu0
        %v1720 = vpop.f32.mrf.mxu0
        %v1721 = vadd.f32 0.0, %v1720
        %v1722 = vpop.f32.mrf.mxu0
        %1723 = vdwg.mxu0
        %v1724 = vmul.f32 %v1718, %v1673
        %v1725 = vmul.f32 %v1721, %v1674
        %1728 = vrot.lane.b32.xlu0 %v1724, 64
        %v1729 = vpop.permute.xlu0 %1728
        %1730 = vrot.lane.b32.xlu0 %v1725, 64
        %v1731 = vpop.permute.xlu0 %1730
        %1734 = vst.msk [vmem:[#allocation3 + $0x10] sm:$0xff] %vm1480, %v1729
        %1735 = vst.msk [vmem:[#allocation3 + $0x18] sm:$0xff] %vm1480, %v1731
        %v1736 = vld [vmem:[#allocation3] sm:$0xff]
        %v1737 = vld [vmem:[#allocation3 + $0x8] sm:$0xff]
        %v1738 = vld [vmem:[#allocation3 + $0x10] sm:$0xff]
        %v1739 = vld [vmem:[#allocation3 + $0x18] sm:$0xff]
        %v1740 = vpack.c.bf16 %v1737, %v1736
        %v1741 = vpack.c.bf16 %v1739, %v1738
        %v1742 = vld [vmem:[%s717] sm:$0xf]
        %v1743 = vld [vmem:[%s717 + $0x4] sm:$0xf]
        %v1744 = vld [vmem:[%s717 + $0x8] sm:$0xf]
        %v1745 = vld [vmem:[%s717 + $0xc] sm:$0xf]
        %v1746 = vld [vmem:[%s717 + $0x10] sm:$0xf]
        %v1747 = vld [vmem:[%s717 + $0x14] sm:$0xf]
        %v1748 = vld [vmem:[%s717 + $0x18] sm:$0xf]
        %v1749 = vld [vmem:[%s717 + $0x1c] sm:$0xf]
        %v1750 = vld [vmem:[%s717 + $0x20] sm:$0xf]
        %v1751 = vld [vmem:[%s717 + $0x24] sm:$0xf]
        %v1752 = vld [vmem:[%s717 + $0x28] sm:$0xf]
        %v1753 = vld [vmem:[%s717 + $0x2c] sm:$0xf]
        %v1754 = vld [vmem:[%s717 + $0x30] sm:$0xf]
        %v1755 = vld [vmem:[%s717 + $0x34] sm:$0xf]
        %v1756 = vld [vmem:[%s717 + $0x38] sm:$0xf]
        %v1757 = vld [vmem:[%s717 + $0x3c] sm:$0xf]
        %v1758 = vld [vmem:[%s845] sm:$0x1]
        %v1760 = vlaneseq
        %v1761 = vshrl.u32 %v1760, 7
        %v1762 = vsub.s32 0, %v1761
        %v1763 = vrot.slane %v1758, %v1762
        %v1781 = vunpack.c.l.b16 %v1742
        %v1782 = vunpack.c.l.b16 %v1743
        %v1783 = vunpack.c.l.b16 %v1744
        %v1784 = vunpack.c.l.b16 %v1745
        %v1785 = vunpack.c.l.b16 %v1746
        %v1786 = vunpack.c.l.b16 %v1747
        %v1787 = vunpack.c.l.b16 %v1748
        %v1788 = vunpack.c.l.b16 %v1749
        %v1789 = vunpack.c.l.b16 %v1750
        %v1790 = vunpack.c.l.b16 %v1751
        %v1791 = vunpack.c.l.b16 %v1752
        %v1792 = vunpack.c.l.b16 %v1753
        %v1793 = vunpack.c.l.b16 %v1754
        %v1794 = vunpack.c.l.b16 %v1755
        %v1795 = vunpack.c.l.b16 %v1756
        %v1796 = vunpack.c.l.b16 %v1757
        %v1797 = vpack.c.b16 %v1782, %v1781
        %v1798 = vpack.c.b16 %v1784, %v1783
        %v1799 = vpack.c.b16 %v1786, %v1785
        %v1800 = vpack.c.b16 %v1788, %v1787
        %v1801 = vpack.c.b16 %v1790, %v1789
        %v1802 = vpack.c.b16 %v1792, %v1791
        %v1803 = vpack.c.b16 %v1794, %v1793
        %v1804 = vpack.c.b16 %v1796, %v1795
        %1813 = vmatprep.subr.bf16.mxu0 0
        %1814 = vmatpush1.bf16.msra.mxu0 %v1804
        %1815 = vmatprep.subr.bf16.mxu0 0
        %1816 = vmatpush1.bf16.msra.mxu0 %v1803
        %1817 = vmatprep.subr.bf16.mxu0 0
        %1818 = vmatpush1.bf16.msra.mxu0 %v1802
        %1819 = vmatprep.subr.bf16.mxu0 0
        %1820 = vmatpush1.bf16.msra.mxu0 %v1801
        %1821 = vmatprep.subr.bf16.mxu0 0
        %1822 = vmatpush1.bf16.msra.mxu0 %v1800
        %1823 = vmatprep.subr.bf16.mxu0 0
        %1824 = vmatpush1.bf16.msra.mxu0 %v1799
        %1825 = vmatprep.subr.bf16.mxu0 0
        %1826 = vmatpush1.bf16.msra.mxu0 %v1798
        %1827 = vmatprep.subr.bf16.mxu0 0
        %1828 = vmatpush1.bf16.msra.mxu0 %v1797
        %1829 = vmatprep.subr.bf16.mxu0 0
        %1830 = vmatpush2.bf16.msra.mxu0 0
        %1831 = vmatprep.subr.bf16.mxu0 0
        %1832 = vmatpush2.bf16.msra.mxu0 0
        %1833 = vmatprep.subr.bf16.mxu0 0
        %1834 = vmatpush2.bf16.msra.mxu0 0
        %1835 = vmatprep.subr.bf16.mxu0 0
        %1836 = vmatpush2.bf16.msra.mxu0 0
        %1837 = vmatprep.subr.bf16.mxu0 0
        %1838 = vmatpush2.bf16.msra.mxu0 0
        %1839 = vmatprep.subr.bf16.mxu0 0
        %1840 = vmatpush2.bf16.msra.mxu0 0
        %1841 = vmatprep.subr.bf16.mxu0 0
        %1842 = vmatpush2.bf16.msra.mxu0 0
        %1843 = vmatprep.subr.bf16.mxu0 0
        %1844 = vmatpush2.bf16.msra.mxu0 0
        %1845 = vmatprep.mubr.bf16.mxu0 0
        %1846 = vmatmul.mubr.bf16.gmra.mxu0 %v1740
        %v1847 = vpop.f32.mrf.mxu0
        %v1848 = vadd.f32 %v1763, %v1847
        %v1849 = vpop.f32.mrf.mxu0
        %v1850 = vpop.f32.mrf.mxu0
        %v1851 = vadd.f32 %v1763, %v1850
        %v1852 = vpop.f32.mrf.mxu0
        %1853 = vmatprep.mubr.bf16.mxu0 0
        %1854 = vmatmul.mubr.bf16.gmra.mxu0 %v1741
        %v1855 = vpop.f32.mrf.mxu0
        %v1856 = vadd.f32 %v1763, %v1855
        %v1857 = vpop.f32.mrf.mxu0
        %v1858 = vpop.f32.mrf.mxu0
        %v1859 = vadd.f32 %v1763, %v1858
        %v1860 = vpop.f32.mrf.mxu0
        %1861 = vdwg.mxu0
        %v1862 = vadd.f32 %v866, %v1848
        %v1863 = vadd.f32 %v867, %v1851
        %v1864 = vadd.f32 %v868, %v1856
        %v1865 = vadd.f32 %v869, %v1859
        %v1866 = vld [vmem:[%s725] sm:$0x1]
        %v1867 = vld [vmem:[%s733] sm:$0x1]
        %1868 = vadd.xlane.f32.xlu0 %v1862
        %v1869 = vpop.xlane.xlu0 %1868
        %1870 = vadd.xlane.f32.xlu0 %v1863
        %v1871 = vpop.xlane.xlu0 %1870
        %1872 = vadd.xlane.f32.xlu0 %v1864
        %v1873 = vpop.xlane.xlu0 %1872
        %1874 = vadd.xlane.f32.xlu0 %v1865
        %v1875 = vpop.xlane.xlu0 %1874
        %v1876 = vmul.f32 %v1862, %v1862
        %v1877 = vmul.f32 %v1863, %v1863
        %v1878 = vmul.f32 %v1864, %v1864
        %v1879 = vmul.f32 %v1865, %v1865
        %1880 = vadd.xlane.f32.xlu0 %v1876
        %v1881 = vpop.xlane.xlu0 %1880
        %1882 = vadd.xlane.f32.xlu0 %v1877
        %v1883 = vpop.xlane.xlu0 %1882
        %1884 = vadd.xlane.f32.xlu0 %v1878
        %v1885 = vpop.xlane.xlu0 %1884
        %1886 = vadd.xlane.f32.xlu0 %v1879
        %v1887 = vpop.xlane.xlu0 %1886
        %v1888 = vmul.f32 %v1869, 0.0078125
        %v1889 = vmul.f32 %v1871, 0.0078125
        %v1890 = vmul.f32 %v1873, 0.0078125
        %v1891 = vmul.f32 %v1875, 0.0078125
        %v1892 = vmul.f32 %v1881, 0.0078125
        %v1893 = vmul.f32 %v1883, 0.0078125
        %v1894 = vmul.f32 %v1885, 0.0078125
        %v1895 = vmul.f32 %v1887, 0.0078125
        %v1896 = vmul.f32 %v1888, %v1888
        %v1897 = vmul.f32 %v1889, %v1889
        %v1898 = vmul.f32 %v1890, %v1890
        %v1899 = vmul.f32 %v1891, %v1891
        %v1900 = vsub.f32 %v1892, %v1896
        %v1901 = vsub.f32 %v1893, %v1897
        %v1902 = vsub.f32 %v1894, %v1898
        %v1903 = vsub.f32 %v1895, %v1899
        %v1904 = vsub.f32 %v1862, %v1888
        %v1905 = vsub.f32 %v1863, %v1889
        %v1906 = vsub.f32 %v1864, %v1890
        %v1907 = vsub.f32 %v1865, %v1891
        %v1908 = vadd.f32 %v1900, 1e-05
        %v1909 = vadd.f32 %v1901, 1e-05
        %v1910 = vadd.f32 %v1902, 1e-05
        %v1911 = vadd.f32 %v1903, 1e-05
        %v1912 = vrsqrt.pop %v1908
        %v1913 = vrsqrt.pop %v1909
        %v1914 = vrsqrt.pop %v1910
        %v1915 = vrsqrt.pop %v1911
        %v1916 = vmul.f32 %v1904, %v1912
        %v1917 = vmul.f32 %v1905, %v1913
        %v1918 = vmul.f32 %v1906, %v1914
        %v1919 = vmul.f32 %v1907, %v1915
        %v1921 = vlaneseq
        %v1922 = vshrl.u32 %v1921, 7
        %v1923 = vsub.s32 0, %v1922
        %v1924 = vrot.slane %v1866, %v1923
        %v1926 = vmul.f32 %v1916, %v1924
        %v1927 = vmul.f32 %v1917, %v1924
        %v1928 = vmul.f32 %v1918, %v1924
        %v1929 = vmul.f32 %v1919, %v1924
        %v1931 = vlaneseq
        %v1932 = vshrl.u32 %v1931, 7
        %v1933 = vsub.s32 0, %v1932
        %v1934 = vrot.slane %v1867, %v1933
        %v1936 = vadd.f32 %v1926, %v1934
        %v1937 = vadd.f32 %v1927, %v1934
        %v1938 = vadd.f32 %v1928, %v1934
        %v1939 = vadd.f32 %v1929, %v1934
        %v1940 = vpack.c.bf16 %v1937, %v1936
        %v1941 = vpack.c.bf16 %v1939, %v1938
        %v1942 = vld [vmem:[%s742] sm:$0xff]
        %v1943 = vld [vmem:[%s742 + $0x8] sm:$0xff]
        %v1944 = vld [vmem:[%s742 + $0x10] sm:$0xff]
        %v1945 = vld [vmem:[%s742 + $0x18] sm:$0xff]
        %v1946 = vld [vmem:[%s742 + $0x20] sm:$0xff]
        %v1947 = vld [vmem:[%s742 + $0x28] sm:$0xff]
        %v1948 = vld [vmem:[%s742 + $0x30] sm:$0xff]
        %v1949 = vld [vmem:[%s742 + $0x38] sm:$0xff]
        %v1950 = vld [vmem:[%s742 + $0x40] sm:$0xff]
        %v1951 = vld [vmem:[%s742 + $0x48] sm:$0xff]
        %v1952 = vld [vmem:[%s742 + $0x50] sm:$0xff]
        %v1953 = vld [vmem:[%s742 + $0x58] sm:$0xff]
        %v1954 = vld [vmem:[%s742 + $0x60] sm:$0xff]
        %v1955 = vld [vmem:[%s742 + $0x68] sm:$0xff]
        %v1956 = vld [vmem:[%s742 + $0x70] sm:$0xff]
        %v1957 = vld [vmem:[%s742 + $0x78] sm:$0xff]
        %v1958 = vld [vmem:[%s742 + $0x80] sm:$0xff]
        %v1959 = vld [vmem:[%s742 + $0x88] sm:$0xff]
        %v1960 = vld [vmem:[%s742 + $0x90] sm:$0xff]
        %v1961 = vld [vmem:[%s742 + $0x98] sm:$0xff]
        %v1962 = vld [vmem:[%s742 + $0xa0] sm:$0xff]
        %v1963 = vld [vmem:[%s742 + $0xa8] sm:$0xff]
        %v1964 = vld [vmem:[%s742 + $0xb0] sm:$0xff]
        %v1965 = vld [vmem:[%s742 + $0xb8] sm:$0xff]
        %v1966 = vld [vmem:[%s742 + $0xc0] sm:$0xff]
        %v1967 = vld [vmem:[%s742 + $0xc8] sm:$0xff]
        %v1968 = vld [vmem:[%s742 + $0xd0] sm:$0xff]
        %v1969 = vld [vmem:[%s742 + $0xd8] sm:$0xff]
        %v1970 = vld [vmem:[%s742 + $0xe0] sm:$0xff]
        %v1971 = vld [vmem:[%s742 + $0xe8] sm:$0xff]
        %v1972 = vld [vmem:[%s742 + $0xf0] sm:$0xff]
        %v1973 = vld [vmem:[%s742 + $0xf8] sm:$0xff]
        %v1974 = vld [vmem:[%s849] sm:$0xf]
        %v1976 = vlaneseq
        %v1977 = vshrl.u32 %v1976, 7
        %v1978 = vsub.s32 0, %v1977
        %v1979 = vrot.slane %v1974, %v1978
        %v1980 = vlaneseq
        %v1981 = vshrl.u32 %v1980, 7
        %v1982 = vsub.s32 1, %v1981
        %v1983 = vrot.slane %v1974, %v1982
        %v1984 = vlaneseq
        %v1985 = vshrl.u32 %v1984, 7
        %v1986 = vsub.s32 2, %v1985
        %v1987 = vrot.slane %v1974, %v1986
        %v1988 = vlaneseq
        %v1989 = vshrl.u32 %v1988, 7
        %v1990 = vsub.s32 3, %v1989
        %v1991 = vrot.slane %v1974, %v1990
        %v2028 = vunpack.c.l.b16 %v1942
        %v2029 = vunpack.c.h.b16 %v1942
        %v2030 = vunpack.c.l.b16 %v1943
        %v2031 = vunpack.c.h.b16 %v1943
        %v2032 = vunpack.c.l.b16 %v1944
        %v2033 = vunpack.c.h.b16 %v1944
        %v2034 = vunpack.c.l.b16 %v1945
        %v2035 = vunpack.c.h.b16 %v1945
        %v2036 = vunpack.c.l.b16 %v1946
        %v2037 = vunpack.c.h.b16 %v1946
        %v2038 = vunpack.c.l.b16 %v1947
        %v2039 = vunpack.c.h.b16 %v1947
        %v2040 = vunpack.c.l.b16 %v1948
        %v2041 = vunpack.c.h.b16 %v1948
        %v2042 = vunpack.c.l.b16 %v1949
        %v2043 = vunpack.c.h.b16 %v1949
        %v2044 = vunpack.c.l.b16 %v1950
        %v2045 = vunpack.c.h.b16 %v1950
        %v2046 = vunpack.c.l.b16 %v1951
        %v2047 = vunpack.c.h.b16 %v1951
        %v2048 = vunpack.c.l.b16 %v1952
        %v2049 = vunpack.c.h.b16 %v1952
        %v2050 = vunpack.c.l.b16 %v1953
        %v2051 = vunpack.c.h.b16 %v1953
        %v2052 = vunpack.c.l.b16 %v1954
        %v2053 = vunpack.c.h.b16 %v1954
        %v2054 = vunpack.c.l.b16 %v1955
        %v2055 = vunpack.c.h.b16 %v1955
        %v2056 = vunpack.c.l.b16 %v1956
        %v2057 = vunpack.c.h.b16 %v1956
        %v2058 = vunpack.c.l.b16 %v1957
        %v2059 = vunpack.c.h.b16 %v1957
        %v2060 = vunpack.c.l.b16 %v1958
        %v2061 = vunpack.c.h.b16 %v1958
        %v2062 = vunpack.c.l.b16 %v1959
        %v2063 = vunpack.c.h.b16 %v1959
        %v2064 = vunpack.c.l.b16 %v1960
        %v2065 = vunpack.c.h.b16 %v1960
        %v2066 = vunpack.c.l.b16 %v1961
        %v2067 = vunpack.c.h.b16 %v1961
        %v2068 = vunpack.c.l.b16 %v1962
        %v2069 = vunpack.c.h.b16 %v1962
        %v2070 = vunpack.c.l.b16 %v1963
        %v2071 = vunpack.c.h.b16 %v1963
        %v2072 = vunpack.c.l.b16 %v1964
        %v2073 = vunpack.c.h.b16 %v1964
        %v2074 = vunpack.c.l.b16 %v1965
        %v2075 = vunpack.c.h.b16 %v1965
        %v2076 = vunpack.c.l.b16 %v1966
        %v2077 = vunpack.c.h.b16 %v1966
        %v2078 = vunpack.c.l.b16 %v1967
        %v2079 = vunpack.c.h.b16 %v1967
        %v2080 = vunpack.c.l.b16 %v1968
        %v2081 = vunpack.c.h.b16 %v1968
        %v2082 = vunpack.c.l.b16 %v1969
        %v2083 = vunpack.c.h.b16 %v1969
        %v2084 = vunpack.c.l.b16 %v1970
        %v2085 = vunpack.c.h.b16 %v1970
        %v2086 = vunpack.c.l.b16 %v1971
        %v2087 = vunpack.c.h.b16 %v1971
        %v2088 = vunpack.c.l.b16 %v1972
        %v2089 = vunpack.c.h.b16 %v1972
        %v2090 = vunpack.c.l.b16 %v1973
        %v2091 = vunpack.c.h.b16 %v1973
        %v2092 = vpack.c.b16 %v2032, %v2028
        %v2093 = vpack.c.b16 %v2033, %v2029
        %v2094 = vpack.c.b16 %v2034, %v2030
        %v2095 = vpack.c.b16 %v2035, %v2031
        %v2096 = vpack.c.b16 %v2040, %v2036
        %v2097 = vpack.c.b16 %v2041, %v2037
        %v2098 = vpack.c.b16 %v2042, %v2038
        %v2099 = vpack.c.b16 %v2043, %v2039
        %v2100 = vpack.c.b16 %v2048, %v2044
        %v2101 = vpack.c.b16 %v2049, %v2045
        %v2102 = vpack.c.b16 %v2050, %v2046
        %v2103 = vpack.c.b16 %v2051, %v2047
        %v2104 = vpack.c.b16 %v2056, %v2052
        %v2105 = vpack.c.b16 %v2057, %v2053
        %v2106 = vpack.c.b16 %v2058, %v2054
        %v2107 = vpack.c.b16 %v2059, %v2055
        %v2108 = vpack.c.b16 %v2064, %v2060
        %v2109 = vpack.c.b16 %v2065, %v2061
        %v2110 = vpack.c.b16 %v2066, %v2062
        %v2111 = vpack.c.b16 %v2067, %v2063
        %v2112 = vpack.c.b16 %v2072, %v2068
        %v2113 = vpack.c.b16 %v2073, %v2069
        %v2114 = vpack.c.b16 %v2074, %v2070
        %v2115 = vpack.c.b16 %v2075, %v2071
        %v2116 = vpack.c.b16 %v2080, %v2076
        %v2117 = vpack.c.b16 %v2081, %v2077
        %v2118 = vpack.c.b16 %v2082, %v2078
        %v2119 = vpack.c.b16 %v2083, %v2079
        %v2120 = vpack.c.b16 %v2088, %v2084
        %v2121 = vpack.c.b16 %v2089, %v2085
        %v2122 = vpack.c.b16 %v2090, %v2086
        %v2123 = vpack.c.b16 %v2091, %v2087
        %2156 = vmatprep.subr.bf16.mxu0 %v2121
        %2157 = vmatpush1.bf16.msra.mxu0 %v2120
        %2158 = vmatprep.subr.bf16.mxu0 %v2117
        %2159 = vmatpush1.bf16.msra.mxu0 %v2116
        %2160 = vmatprep.subr.bf16.mxu0 %v2113
        %2161 = vmatpush1.bf16.msra.mxu0 %v2112
        %2162 = vmatprep.subr.bf16.mxu0 %v2109
        %2163 = vmatpush1.bf16.msra.mxu0 %v2108
        %2164 = vmatprep.subr.bf16.mxu0 %v2105
        %2165 = vmatpush1.bf16.msra.mxu0 %v2104
        %2166 = vmatprep.subr.bf16.mxu0 %v2101
        %2167 = vmatpush1.bf16.msra.mxu0 %v2100
        %2168 = vmatprep.subr.bf16.mxu0 %v2097
        %2169 = vmatpush1.bf16.msra.mxu0 %v2096
        %2170 = vmatprep.subr.bf16.mxu0 %v2093
        %2171 = vmatpush1.bf16.msra.mxu0 %v2092
        %2172 = vmatprep.subr.bf16.mxu0 0
        %2173 = vmatpush2.bf16.msra.mxu0 0
        %2174 = vmatprep.subr.bf16.mxu0 0
        %2175 = vmatpush2.bf16.msra.mxu0 0
        %2176 = vmatprep.subr.bf16.mxu0 0
        %2177 = vmatpush2.bf16.msra.mxu0 0
        %2178 = vmatprep.subr.bf16.mxu0 0
        %2179 = vmatpush2.bf16.msra.mxu0 0
        %2180 = vmatprep.subr.bf16.mxu0 0
        %2181 = vmatpush2.bf16.msra.mxu0 0
        %2182 = vmatprep.subr.bf16.mxu0 0
        %2183 = vmatpush2.bf16.msra.mxu0 0
        %2184 = vmatprep.subr.bf16.mxu0 0
        %2185 = vmatpush2.bf16.msra.mxu0 0
        %2186 = vmatprep.subr.bf16.mxu0 0
        %2187 = vmatpush2.bf16.msra.mxu0 0
        %2188 = vmatprep.mubr.bf16.mxu0 0
        %2189 = vmatmul.mubr.bf16.gmra.mxu0 %v1940
        %v2190 = vpop.f32.mrf.mxu0
        %v2191 = vadd.f32 %v1979, %v2190
        %v2192 = vpop.f32.mrf.mxu0
        %v2193 = vadd.f32 %v1983, %v2192
        %v2194 = vpop.f32.mrf.mxu0
        %v2195 = vadd.f32 %v1979, %v2194
        %v2196 = vpop.f32.mrf.mxu0
        %v2197 = vadd.f32 %v1983, %v2196
        %2198 = vmatprep.mubr.bf16.mxu0 0
        %2199 = vmatmul.mubr.bf16.gmra.mxu0 %v1941
        %v2200 = vpop.f32.mrf.mxu0
        %v2201 = vadd.f32 %v1979, %v2200
        %v2202 = vpop.f32.mrf.mxu0
        %v2203 = vadd.f32 %v1983, %v2202
        %v2204 = vpop.f32.mrf.mxu0
        %v2205 = vadd.f32 %v1979, %v2204
        %v2206 = vpop.f32.mrf.mxu0
        %v2207 = vadd.f32 %v1983, %v2206
        %2208 = vdwg.mxu0
        %2209 = vmatprep.subr.bf16.mxu0 %v2123
        %2210 = vmatpush1.bf16.msra.mxu0 %v2122
        %2211 = vmatprep.subr.bf16.mxu0 %v2119
        %2212 = vmatpush1.bf16.msra.mxu0 %v2118
        %2213 = vmatprep.subr.bf16.mxu0 %v2115
        %2214 = vmatpush1.bf16.msra.mxu0 %v2114
        %2215 = vmatprep.subr.bf16.mxu0 %v2111
        %2216 = vmatpush1.bf16.msra.mxu0 %v2110
        %2217 = vmatprep.subr.bf16.mxu0 %v2107
        %2218 = vmatpush1.bf16.msra.mxu0 %v2106
        %2219 = vmatprep.subr.bf16.mxu0 %v2103
        %2220 = vmatpush1.bf16.msra.mxu0 %v2102
        %2221 = vmatprep.subr.bf16.mxu0 %v2099
        %2222 = vmatpush1.bf16.msra.mxu0 %v2098
        %2223 = vmatprep.subr.bf16.mxu0 %v2095
        %2224 = vmatpush1.bf16.msra.mxu0 %v2094
        %2225 = vmatprep.subr.bf16.mxu0 0
        %2226 = vmatpush2.bf16.msra.mxu0 0
        %2227 = vmatprep.subr.bf16.mxu0 0
        %2228 = vmatpush2.bf16.msra.mxu0 0
        %2229 = vmatprep.subr.bf16.mxu0 0
        %2230 = vmatpush2.bf16.msra.mxu0 0
        %2231 = vmatprep.subr.bf16.mxu0 0
        %2232 = vmatpush2.bf16.msra.mxu0 0
        %2233 = vmatprep.subr.bf16.mxu0 0
        %2234 = vmatpush2.bf16.msra.mxu0 0
        %2235 = vmatprep.subr.bf16.mxu0 0
        %2236 = vmatpush2.bf16.msra.mxu0 0
        %2237 = vmatprep.subr.bf16.mxu0 0
        %2238 = vmatpush2.bf16.msra.mxu0 0
        %2239 = vmatprep.subr.bf16.mxu0 0
        %2240 = vmatpush2.bf16.msra.mxu0 0
        %2241 = vmatprep.mubr.bf16.mxu0 0
        %2242 = vmatmul.mubr.bf16.gmra.mxu0 %v1940
        %v2243 = vpop.f32.mrf.mxu0
        %v2244 = vadd.f32 %v1987, %v2243
        %v2245 = vpop.f32.mrf.mxu0
        %v2246 = vadd.f32 %v1991, %v2245
        %v2247 = vpop.f32.mrf.mxu0
        %v2248 = vadd.f32 %v1987, %v2247
        %v2249 = vpop.f32.mrf.mxu0
        %v2250 = vadd.f32 %v1991, %v2249
        %2251 = vmatprep.mubr.bf16.mxu0 0
        %2252 = vmatmul.mubr.bf16.gmra.mxu0 %v1941
        %v2253 = vpop.f32.mrf.mxu0
        %v2254 = vadd.f32 %v1987, %v2253
        %v2255 = vpop.f32.mrf.mxu0
        %v2256 = vadd.f32 %v1991, %v2255
        %v2257 = vpop.f32.mrf.mxu0
        %v2258 = vadd.f32 %v1987, %v2257
        %v2259 = vpop.f32.mrf.mxu0
        %v2260 = vadd.f32 %v1991, %v2259
        %2261 = vdwg.mxu0
        %v2262 = vmul.f32 %v2191, 0.5
        %v2263 = vmul.f32 %v2193, 0.5
        %v2264 = vmul.f32 %v2244, 0.5
        %v2265 = vmul.f32 %v2246, 0.5
        %v2266 = vmul.f32 %v2195, 0.5
        %v2267 = vmul.f32 %v2197, 0.5
        %v2268 = vmul.f32 %v2248, 0.5
        %v2269 = vmul.f32 %v2250, 0.5
        %v2270 = vmul.f32 %v2201, 0.5
        %v2271 = vmul.f32 %v2203, 0.5
        %v2272 = vmul.f32 %v2254, 0.5
        %v2273 = vmul.f32 %v2256, 0.5
        %v2274 = vmul.f32 %v2205, 0.5
        %v2275 = vmul.f32 %v2207, 0.5
        %v2276 = vmul.f32 %v2258, 0.5
        %v2277 = vmul.f32 %v2260, 0.5
        %v2278 = vmul.f32 %v2191, 0.70710677
        %v2279 = vmul.f32 %v2193, 0.70710677
        %v2280 = vmul.f32 %v2244, 0.70710677
        %v2281 = vmul.f32 %v2246, 0.70710677
        %v2282 = vmul.f32 %v2195, 0.70710677
        %v2283 = vmul.f32 %v2197, 0.70710677
        %v2284 = vmul.f32 %v2248, 0.70710677
        %v2285 = vmul.f32 %v2250, 0.70710677
        %v2286 = vmul.f32 %v2201, 0.70710677
        %v2287 = vmul.f32 %v2203, 0.70710677
        %v2288 = vmul.f32 %v2254, 0.70710677
        %v2289 = vmul.f32 %v2256, 0.70710677
        %v2290 = vmul.f32 %v2205, 0.70710677
        %v2291 = vmul.f32 %v2207, 0.70710677
        %v2292 = vmul.f32 %v2258, 0.70710677
        %v2293 = vmul.f32 %v2260, 0.70710677
        %v2294 = verf.f32.pop %v2278
        %v2295 = verf.f32.pop %v2279
        %v2296 = verf.f32.pop %v2280
        %v2297 = verf.f32.pop %v2281
        %v2298 = verf.f32.pop %v2282
        %v2299 = verf.f32.pop %v2283
        %v2300 = verf.f32.pop %v2284
        %v2301 = verf.f32.pop %v2285
        %v2302 = verf.f32.pop %v2286
        %v2303 = verf.f32.pop %v2287
        %v2304 = verf.f32.pop %v2288
        %v2305 = verf.f32.pop %v2289
        %v2306 = verf.f32.pop %v2290
        %v2307 = verf.f32.pop %v2291
        %v2308 = verf.f32.pop %v2292
        %v2309 = verf.f32.pop %v2293
        %v2310 = vadd.f32 %v2294, 1.0
        %v2311 = vadd.f32 %v2295, 1.0
        %v2312 = vadd.f32 %v2296, 1.0
        %v2313 = vadd.f32 %v2297, 1.0
        %v2314 = vadd.f32 %v2298, 1.0
        %v2315 = vadd.f32 %v2299, 1.0
        %v2316 = vadd.f32 %v2300, 1.0
        %v2317 = vadd.f32 %v2301, 1.0
        %v2318 = vadd.f32 %v2302, 1.0
        %v2319 = vadd.f32 %v2303, 1.0
        %v2320 = vadd.f32 %v2304, 1.0
        %v2321 = vadd.f32 %v2305, 1.0
        %v2322 = vadd.f32 %v2306, 1.0
        %v2323 = vadd.f32 %v2307, 1.0
        %v2324 = vadd.f32 %v2308, 1.0
        %v2325 = vadd.f32 %v2309, 1.0
        %v2326 = vmul.f32 %v2262, %v2310
        %v2327 = vmul.f32 %v2263, %v2311
        %v2328 = vmul.f32 %v2264, %v2312
        %v2329 = vmul.f32 %v2265, %v2313
        %v2330 = vmul.f32 %v2266, %v2314
        %v2331 = vmul.f32 %v2267, %v2315
        %v2332 = vmul.f32 %v2268, %v2316
        %v2333 = vmul.f32 %v2269, %v2317
        %v2334 = vmul.f32 %v2270, %v2318
        %v2335 = vmul.f32 %v2271, %v2319
        %v2336 = vmul.f32 %v2272, %v2320
        %v2337 = vmul.f32 %v2273, %v2321
        %v2338 = vmul.f32 %v2274, %v2322
        %v2339 = vmul.f32 %v2275, %v2323
        %v2340 = vmul.f32 %v2276, %v2324
        %v2341 = vmul.f32 %v2277, %v2325
        %v2342 = vpack.c.bf16 %v2330, %v2326
        %v2343 = vpack.c.bf16 %v2331, %v2327
        %v2344 = vpack.c.bf16 %v2332, %v2328
        %v2345 = vpack.c.bf16 %v2333, %v2329
        %v2346 = vpack.c.bf16 %v2338, %v2334
        %v2347 = vpack.c.bf16 %v2339, %v2335
        %v2348 = vpack.c.bf16 %v2340, %v2336
        %v2349 = vpack.c.bf16 %v2341, %v2337
        %v2350 = vld [vmem:[%s751] sm:$0xf]
        %v2351 = vld [vmem:[%s751 + $0x4] sm:$0xf]
        %v2352 = vld [vmem:[%s751 + $0x8] sm:$0xf]
        %v2353 = vld [vmem:[%s751 + $0xc] sm:$0xf]
        %v2354 = vld [vmem:[%s751 + $0x10] sm:$0xf]
        %v2355 = vld [vmem:[%s751 + $0x14] sm:$0xf]
        %v2356 = vld [vmem:[%s751 + $0x18] sm:$0xf]
        %v2357 = vld [vmem:[%s751 + $0x1c] sm:$0xf]
        %v2358 = vld [vmem:[%s751 + $0x20] sm:$0xf]
        %v2359 = vld [vmem:[%s751 + $0x24] sm:$0xf]
        %v2360 = vld [vmem:[%s751 + $0x28] sm:$0xf]
        %v2361 = vld [vmem:[%s751 + $0x2c] sm:$0xf]
        %v2362 = vld [vmem:[%s751 + $0x30] sm:$0xf]
        %v2363 = vld [vmem:[%s751 + $0x34] sm:$0xf]
        %v2364 = vld [vmem:[%s751 + $0x38] sm:$0xf]
        %v2365 = vld [vmem:[%s751 + $0x3c] sm:$0xf]
        %v2366 = vld [vmem:[%s751 + $0x40] sm:$0xf]
        %v2367 = vld [vmem:[%s751 + $0x44] sm:$0xf]
        %v2368 = vld [vmem:[%s751 + $0x48] sm:$0xf]
        %v2369 = vld [vmem:[%s751 + $0x4c] sm:$0xf]
        %v2370 = vld [vmem:[%s751 + $0x50] sm:$0xf]
        %v2371 = vld [vmem:[%s751 + $0x54] sm:$0xf]
        %v2372 = vld [vmem:[%s751 + $0x58] sm:$0xf]
        %v2373 = vld [vmem:[%s751 + $0x5c] sm:$0xf]
        %v2374 = vld [vmem:[%s751 + $0x60] sm:$0xf]
        %v2375 = vld [vmem:[%s751 + $0x64] sm:$0xf]
        %v2376 = vld [vmem:[%s751 + $0x68] sm:$0xf]
        %v2377 = vld [vmem:[%s751 + $0x6c] sm:$0xf]
        %v2378 = vld [vmem:[%s751 + $0x70] sm:$0xf]
        %v2379 = vld [vmem:[%s751 + $0x74] sm:$0xf]
        %v2380 = vld [vmem:[%s751 + $0x78] sm:$0xf]
        %v2381 = vld [vmem:[%s751 + $0x7c] sm:$0xf]
        %v2382 = vld [vmem:[%s751 + $0x80] sm:$0xf]
        %v2383 = vld [vmem:[%s751 + $0x84] sm:$0xf]
        %v2384 = vld [vmem:[%s751 + $0x88] sm:$0xf]
        %v2385 = vld [vmem:[%s751 + $0x8c] sm:$0xf]
        %v2386 = vld [vmem:[%s751 + $0x90] sm:$0xf]
        %v2387 = vld [vmem:[%s751 + $0x94] sm:$0xf]
        %v2388 = vld [vmem:[%s751 + $0x98] sm:$0xf]
        %v2389 = vld [vmem:[%s751 + $0x9c] sm:$0xf]
        %v2390 = vld [vmem:[%s751 + $0xa0] sm:$0xf]
        %v2391 = vld [vmem:[%s751 + $0xa4] sm:$0xf]
        %v2392 = vld [vmem:[%s751 + $0xa8] sm:$0xf]
        %v2393 = vld [vmem:[%s751 + $0xac] sm:$0xf]
        %v2394 = vld [vmem:[%s751 + $0xb0] sm:$0xf]
        %v2395 = vld [vmem:[%s751 + $0xb4] sm:$0xf]
        %v2396 = vld [vmem:[%s751 + $0xb8] sm:$0xf]
        %v2397 = vld [vmem:[%s751 + $0xbc] sm:$0xf]
        %v2398 = vld [vmem:[%s751 + $0xc0] sm:$0xf]
        %v2399 = vld [vmem:[%s751 + $0xc4] sm:$0xf]
        %v2400 = vld [vmem:[%s751 + $0xc8] sm:$0xf]
        %v2401 = vld [vmem:[%s751 + $0xcc] sm:$0xf]
        %v2402 = vld [vmem:[%s751 + $0xd0] sm:$0xf]
        %v2403 = vld [vmem:[%s751 + $0xd4] sm:$0xf]
        %v2404 = vld [vmem:[%s751 + $0xd8] sm:$0xf]
        %v2405 = vld [vmem:[%s751 + $0xdc] sm:$0xf]
        %v2406 = vld [vmem:[%s751 + $0xe0] sm:$0xf]
        %v2407 = vld [vmem:[%s751 + $0xe4] sm:$0xf]
        %v2408 = vld [vmem:[%s751 + $0xe8] sm:$0xf]
        %v2409 = vld [vmem:[%s751 + $0xec] sm:$0xf]
        %v2410 = vld [vmem:[%s751 + $0xf0] sm:$0xf]
        %v2411 = vld [vmem:[%s751 + $0xf4] sm:$0xf]
        %v2412 = vld [vmem:[%s751 + $0xf8] sm:$0xf]
        %v2413 = vld [vmem:[%s751 + $0xfc] sm:$0xf]
        %v2414 = vld [vmem:[%s852] sm:$0x1]
        %v2416 = vlaneseq
        %v2417 = vshrl.u32 %v2416, 7
        %v2418 = vsub.s32 0, %v2417
        %v2419 = vrot.slane %v2414, %v2418
        %v2485 = vunpack.c.l.b16 %v2350
        %v2486 = vunpack.c.l.b16 %v2351
        %v2487 = vunpack.c.l.b16 %v2352
        %v2488 = vunpack.c.l.b16 %v2353
        %v2489 = vunpack.c.l.b16 %v2354
        %v2490 = vunpack.c.l.b16 %v2355
        %v2491 = vunpack.c.l.b16 %v2356
        %v2492 = vunpack.c.l.b16 %v2357
        %v2493 = vunpack.c.l.b16 %v2358
        %v2494 = vunpack.c.l.b16 %v2359
        %v2495 = vunpack.c.l.b16 %v2360
        %v2496 = vunpack.c.l.b16 %v2361
        %v2497 = vunpack.c.l.b16 %v2362
        %v2498 = vunpack.c.l.b16 %v2363
        %v2499 = vunpack.c.l.b16 %v2364
        %v2500 = vunpack.c.l.b16 %v2365
        %v2501 = vunpack.c.l.b16 %v2366
        %v2502 = vunpack.c.l.b16 %v2367
        %v2503 = vunpack.c.l.b16 %v2368
        %v2504 = vunpack.c.l.b16 %v2369
        %v2505 = vunpack.c.l.b16 %v2370
        %v2506 = vunpack.c.l.b16 %v2371
        %v2507 = vunpack.c.l.b16 %v2372
        %v2508 = vunpack.c.l.b16 %v2373
        %v2509 = vunpack.c.l.b16 %v2374
        %v2510 = vunpack.c.l.b16 %v2375
        %v2511 = vunpack.c.l.b16 %v2376
        %v2512 = vunpack.c.l.b16 %v2377
        %v2513 = vunpack.c.l.b16 %v2378
        %v2514 = vunpack.c.l.b16 %v2379
        %v2515 = vunpack.c.l.b16 %v2380
        %v2516 = vunpack.c.l.b16 %v2381
        %v2517 = vunpack.c.l.b16 %v2382
        %v2518 = vunpack.c.l.b16 %v2383
        %v2519 = vunpack.c.l.b16 %v2384
        %v2520 = vunpack.c.l.b16 %v2385
        %v2521 = vunpack.c.l.b16 %v2386
        %v2522 = vunpack.c.l.b16 %v2387
        %v2523 = vunpack.c.l.b16 %v2388
        %v2524 = vunpack.c.l.b16 %v2389
        %v2525 = vunpack.c.l.b16 %v2390
        %v2526 = vunpack.c.l.b16 %v2391
        %v2527 = vunpack.c.l.b16 %v2392
        %v2528 = vunpack.c.l.b16 %v2393
        %v2529 = vunpack.c.l.b16 %v2394
        %v2530 = vunpack.c.l.b16 %v2395
        %v2531 = vunpack.c.l.b16 %v2396
        %v2532 = vunpack.c.l.b16 %v2397
        %v2533 = vunpack.c.l.b16 %v2398
        %v2534 = vunpack.c.l.b16 %v2399
        %v2535 = vunpack.c.l.b16 %v2400
        %v2536 = vunpack.c.l.b16 %v2401
        %v2537 = vunpack.c.l.b16 %v2402
        %v2538 = vunpack.c.l.b16 %v2403
        %v2539 = vunpack.c.l.b16 %v2404
        %v2540 = vunpack.c.l.b16 %v2405
        %v2541 = vunpack.c.l.b16 %v2406
        %v2542 = vunpack.c.l.b16 %v2407
        %v2543 = vunpack.c.l.b16 %v2408
        %v2544 = vunpack.c.l.b16 %v2409
        %v2545 = vunpack.c.l.b16 %v2410
        %v2546 = vunpack.c.l.b16 %v2411
        %v2547 = vunpack.c.l.b16 %v2412
        %v2548 = vunpack.c.l.b16 %v2413
        %v2549 = vpack.c.b16 %v2486, %v2485
        %v2550 = vpack.c.b16 %v2488, %v2487
        %v2551 = vpack.c.b16 %v2490, %v2489
        %v2552 = vpack.c.b16 %v2492, %v2491
        %v2553 = vpack.c.b16 %v2494, %v2493
        %v2554 = vpack.c.b16 %v2496, %v2495
        %v2555 = vpack.c.b16 %v2498, %v2497
        %v2556 = vpack.c.b16 %v2500, %v2499
        %v2557 = vpack.c.b16 %v2502, %v2501
        %v2558 = vpack.c.b16 %v2504, %v2503
        %v2559 = vpack.c.b16 %v2506, %v2505
        %v2560 = vpack.c.b16 %v2508, %v2507
        %v2561 = vpack.c.b16 %v2510, %v2509
        %v2562 = vpack.c.b16 %v2512, %v2511
        %v2563 = vpack.c.b16 %v2514, %v2513
        %v2564 = vpack.c.b16 %v2516, %v2515
        %v2565 = vpack.c.b16 %v2518, %v2517
        %v2566 = vpack.c.b16 %v2520, %v2519
        %v2567 = vpack.c.b16 %v2522, %v2521
        %v2568 = vpack.c.b16 %v2524, %v2523
        %v2569 = vpack.c.b16 %v2526, %v2525
        %v2570 = vpack.c.b16 %v2528, %v2527
        %v2571 = vpack.c.b16 %v2530, %v2529
        %v2572 = vpack.c.b16 %v2532, %v2531
        %v2573 = vpack.c.b16 %v2534, %v2533
        %v2574 = vpack.c.b16 %v2536, %v2535
        %v2575 = vpack.c.b16 %v2538, %v2537
        %v2576 = vpack.c.b16 %v2540, %v2539
        %v2577 = vpack.c.b16 %v2542, %v2541
        %v2578 = vpack.c.b16 %v2544, %v2543
        %v2579 = vpack.c.b16 %v2546, %v2545
        %v2580 = vpack.c.b16 %v2548, %v2547
        %2613 = vmatprep.subr.bf16.mxu0 0
        %2614 = vmatpush1.bf16.msra.mxu0 %v2556
        %2615 = vmatprep.subr.bf16.mxu0 0
        %2616 = vmatpush1.bf16.msra.mxu0 %v2555
        %2617 = vmatprep.subr.bf16.mxu0 0
        %2618 = vmatpush1.bf16.msra.mxu0 %v2554
        %2619 = vmatprep.subr.bf16.mxu0 0
        %2620 = vmatpush1.bf16.msra.mxu0 %v2553
        %2621 = vmatprep.subr.bf16.mxu0 0
        %2622 = vmatpush1.bf16.msra.mxu0 %v2552
        %2623 = vmatprep.subr.bf16.mxu0 0
        %2624 = vmatpush1.bf16.msra.mxu0 %v2551
        %2625 = vmatprep.subr.bf16.mxu0 0
        %2626 = vmatpush1.bf16.msra.mxu0 %v2550
        %2627 = vmatprep.subr.bf16.mxu0 0
        %2628 = vmatpush1.bf16.msra.mxu0 %v2549
        %2629 = vmatprep.subr.bf16.mxu0 0
        %2630 = vmatpush2.bf16.msra.mxu0 %v2564
        %2631 = vmatprep.subr.bf16.mxu0 0
        %2632 = vmatpush2.bf16.msra.mxu0 %v2563
        %2633 = vmatprep.subr.bf16.mxu0 0
        %2634 = vmatpush2.bf16.msra.mxu0 %v2562
        %2635 = vmatprep.subr.bf16.mxu0 0
        %2636 = vmatpush2.bf16.msra.mxu0 %v2561
        %2637 = vmatprep.subr.bf16.mxu0 0
        %2638 = vmatpush2.bf16.msra.mxu0 %v2560
        %2639 = vmatprep.subr.bf16.mxu0 0
        %2640 = vmatpush2.bf16.msra.mxu0 %v2559
        %2641 = vmatprep.subr.bf16.mxu0 0
        %2642 = vmatpush2.bf16.msra.mxu0 %v2558
        %2643 = vmatprep.subr.bf16.mxu0 0
        %2644 = vmatpush2.bf16.msra.mxu0 %v2557
        %2645 = vmatprep.mubr.bf16.mxu0 %v2343
        %2646 = vmatmul.mubr.bf16.gmra.mxu0 %v2342
        %v2647 = vpop.f32.mrf.mxu0
        %v2648 = vadd.f32 %v2419, %v2647
        %v2649 = vpop.f32.mrf.mxu0
        %v2650 = vpop.f32.mrf.mxu0
        %v2651 = vadd.f32 %v2419, %v2650
        %v2652 = vpop.f32.mrf.mxu0
        %2653 = vmatprep.mubr.bf16.mxu0 %v2347
        %2654 = vmatmul.mubr.bf16.gmra.mxu0 %v2346
        %v2655 = vpop.f32.mrf.mxu0
        %v2656 = vadd.f32 %v2419, %v2655
        %v2657 = vpop.f32.mrf.mxu0
        %v2658 = vpop.f32.mrf.mxu0
        %v2659 = vadd.f32 %v2419, %v2658
        %v2660 = vpop.f32.mrf.mxu0
        %2661 = vdwg.mxu0
        %2662 = vmatprep.subr.bf16.mxu0 0
        %2663 = vmatpush1.bf16.msra.mxu0 %v2572
        %2664 = vmatprep.subr.bf16.mxu0 0
        %2665 = vmatpush1.bf16.msra.mxu0 %v2571
        %2666 = vmatprep.subr.bf16.mxu0 0
        %2667 = vmatpush1.bf16.msra.mxu0 %v2570
        %2668 = vmatprep.subr.bf16.mxu0 0
        %2669 = vmatpush1.bf16.msra.mxu0 %v2569
        %2670 = vmatprep.subr.bf16.mxu0 0
        %2671 = vmatpush1.bf16.msra.mxu0 %v2568
        %2672 = vmatprep.subr.bf16.mxu0 0
        %2673 = vmatpush1.bf16.msra.mxu0 %v2567
        %2674 = vmatprep.subr.bf16.mxu0 0
        %2675 = vmatpush1.bf16.msra.mxu0 %v2566
        %2676 = vmatprep.subr.bf16.mxu0 0
        %2677 = vmatpush1.bf16.msra.mxu0 %v2565
        %2678 = vmatprep.subr.bf16.mxu0 0
        %2679 = vmatpush2.bf16.msra.mxu0 %v2580
        %2680 = vmatprep.subr.bf16.mxu0 0
        %2681 = vmatpush2.bf16.msra.mxu0 %v2579
        %2682 = vmatprep.subr.bf16.mxu0 0
        %2683 = vmatpush2.bf16.msra.mxu0 %v2578
        %2684 = vmatprep.subr.bf16.mxu0 0
        %2685 = vmatpush2.bf16.msra.mxu0 %v2577
        %2686 = vmatprep.subr.bf16.mxu0 0
        %2687 = vmatpush2.bf16.msra.mxu0 %v2576
        %2688 = vmatprep.subr.bf16.mxu0 0
        %2689 = vmatpush2.bf16.msra.mxu0 %v2575
        %2690 = vmatprep.subr.bf16.mxu0 0
        %2691 = vmatpush2.bf16.msra.mxu0 %v2574
        %2692 = vmatprep.subr.bf16.mxu0 0
        %2693 = vmatpush2.bf16.msra.mxu0 %v2573
        %2694 = vmatprep.mubr.bf16.mxu0 %v2345
        %2695 = vmatmul.mubr.bf16.gmra.mxu0 %v2344
        %v2696 = vpop.f32.mrf.mxu0
        %v2697 = vadd.f32 %v2648, %v2696
        %v2698 = vpop.f32.mrf.mxu0
        %v2699 = vpop.f32.mrf.mxu0
        %v2700 = vadd.f32 %v2651, %v2699
        %v2701 = vpop.f32.mrf.mxu0
        %2702 = vmatprep.mubr.bf16.mxu0 %v2349
        %2703 = vmatmul.mubr.bf16.gmra.mxu0 %v2348
        %v2704 = vpop.f32.mrf.mxu0
        %v2705 = vadd.f32 %v2656, %v2704
        %v2706 = vpop.f32.mrf.mxu0
        %v2707 = vpop.f32.mrf.mxu0
        %v2708 = vadd.f32 %v2659, %v2707
        %v2709 = vpop.f32.mrf.mxu0
        %2710 = vdwg.mxu0
        %v2711 = vadd.f32 %v1862, %v2697
        %v2712 = vadd.f32 %v1863, %v2700
        %v2713 = vadd.f32 %v1864, %v2705
        %v2714 = vadd.f32 %v1865, %v2708
        %2715 = vst [vmem:[#allocation2] sm:$0xff] %v2711
        %2716 = vst [vmem:[#allocation2 + $0x8] sm:$0xff] %v2712
        %2717 = vst [vmem:[#allocation2 + $0x10] sm:$0xff] %v2713
        %2718 = vst [vmem:[#allocation2 + $0x18] sm:$0xff] %v2714
        %p2719 = scmp.eq.s32.totalorder %s30, 2
        // Predicated region
        $region129: #{tpu_custom_call.1} parent=83 // pred_check
          %p2720 = pneg %p2719
        $region130: #{tpu_custom_call.1} parent=83 // pred_check_branch
          %2722 = sbr.rel (%p2720) target = $region132
        $region131: #{tpu_custom_call.1} parent=83 // pred_region
          %v2723 = vld [vmem:[%s14] sm:$0x1]
          %v2724 = vld [vmem:[%s15] sm:$0x1]
          %2725 = vadd.xlane.f32.xlu0 %v2711
          %v2726 = vpop.xlane.xlu0 %2725
          %2727 = vadd.xlane.f32.xlu0 %v2712
          %v2728 = vpop.xlane.xlu0 %2727
          %2729 = vadd.xlane.f32.xlu0 %v2713
          %v2730 = vpop.xlane.xlu0 %2729
          %2731 = vadd.xlane.f32.xlu0 %v2714
          %v2732 = vpop.xlane.xlu0 %2731
          %v2733 = vmul.f32 %v2711, %v2711
          %v2734 = vmul.f32 %v2712, %v2712
          %v2735 = vmul.f32 %v2713, %v2713
          %v2736 = vmul.f32 %v2714, %v2714
          %2737 = vadd.xlane.f32.xlu0 %v2733
          %v2738 = vpop.xlane.xlu0 %2737
          %2739 = vadd.xlane.f32.xlu0 %v2734
          %v2740 = vpop.xlane.xlu0 %2739
          %2741 = vadd.xlane.f32.xlu0 %v2735
          %v2742 = vpop.xlane.xlu0 %2741
          %2743 = vadd.xlane.f32.xlu0 %v2736
          %v2744 = vpop.xlane.xlu0 %2743
          %v2745 = vmul.f32 %v2726, 0.0078125
          %v2746 = vmul.f32 %v2728, 0.0078125
          %v2747 = vmul.f32 %v2730, 0.0078125
          %v2748 = vmul.f32 %v2732, 0.0078125
          %v2749 = vmul.f32 %v2738, 0.0078125
          %v2750 = vmul.f32 %v2740, 0.0078125
          %v2751 = vmul.f32 %v2742, 0.0078125
          %v2752 = vmul.f32 %v2744, 0.0078125
          %v2753 = vmul.f32 %v2745, %v2745
          %v2754 = vmul.f32 %v2746, %v2746
          %v2755 = vmul.f32 %v2747, %v2747
          %v2756 = vmul.f32 %v2748, %v2748
          %v2757 = vsub.f32 %v2749, %v2753
          %v2758 = vsub.f32 %v2750, %v2754
          %v2759 = vsub.f32 %v2751, %v2755
          %v2760 = vsub.f32 %v2752, %v2756
          %v2761 = vsub.f32 %v2711, %v2745
          %v2762 = vsub.f32 %v2712, %v2746
          %v2763 = vsub.f32 %v2713, %v2747
          %v2764 = vsub.f32 %v2714, %v2748
          %v2765 = vadd.f32 %v2757, 1e-05
          %v2766 = vadd.f32 %v2758, 1e-05
          %v2767 = vadd.f32 %v2759, 1e-05
          %v2768 = vadd.f32 %v2760, 1e-05
          %v2769 = vrsqrt.pop %v2765
          %v2770 = vrsqrt.pop %v2766
          %v2771 = vrsqrt.pop %v2767
          %v2772 = vrsqrt.pop %v2768
          %v2773 = vmul.f32 %v2761, %v2769
          %v2774 = vmul.f32 %v2762, %v2770
          %v2775 = vmul.f32 %v2763, %v2771
          %v2776 = vmul.f32 %v2764, %v2772
          %v2778 = vlaneseq
          %v2779 = vshrl.u32 %v2778, 7
          %v2780 = vsub.s32 0, %v2779
          %v2781 = vrot.slane %v2723, %v2780
          %v2783 = vmul.f32 %v2773, %v2781
          %v2784 = vmul.f32 %v2774, %v2781
          %v2785 = vmul.f32 %v2775, %v2781
          %v2786 = vmul.f32 %v2776, %v2781
          %v2788 = vlaneseq
          %v2789 = vshrl.u32 %v2788, 7
          %v2790 = vsub.s32 0, %v2789
          %v2791 = vrot.slane %v2724, %v2790
          %v2793 = vadd.f32 %v2783, %v2791
          %v2794 = vadd.f32 %v2784, %v2791
          %v2795 = vadd.f32 %v2785, %v2791
          %v2796 = vadd.f32 %v2786, %v2791
          %2797 = vst [vmem:[#allocation17] sm:$0xff] %v2793
          %2798 = vst [vmem:[#allocation17 + $0x8] sm:$0xff] %v2794
          %2799 = vst [vmem:[#allocation17 + $0x10] sm:$0xff] %v2795
          %2800 = vst [vmem:[#allocation17 + $0x18] sm:$0xff] %v2796
        $region132: #{tpu_custom_call.1} parent=83 // pred_fallthru
          _
        // Predicated region
        $region133: #{tpu_custom_call.1} parent=83 // pred_check
          %p2801 = pneg %p439
        $region134: #{tpu_custom_call.1} parent=83 // pred_check_branch
          %2803 = sbr.rel (%p2801) target = $region136
        $region135: #{tpu_custom_call.1} parent=83 // pred_region
          %s2805 = ssub.s32 512, 512
          %2806 = vsyncadd [#allocation6], %s2805
          %s2807 = sshll.u32 [#allocation17], 4
          %s2808 = int_to_ptr.vmem [resolvable:$true] %s2807
          %2813 = dma.vmem_to_hbm [thread:$0]  %s2808, 512, %s16, [#allocation6], 128, 128, 8
        $region136: #{tpu_custom_call.1} parent=83 // pred_fallthru
          _
        // Predicated region
        $region137: #{tpu_custom_call.1} parent=83 // pred_check
          %p2814 = pneg %p439
        $region138: #{tpu_custom_call.1} parent=83 // pred_check_branch
          %2816 = sbr.rel (%p2814) target = $region140
        $region139: #{tpu_custom_call.1} parent=83 // pred_region
          %2817 = dma.done [#allocation6], 512
        $region140: #{tpu_custom_call.1} parent=83 // pred_fallthru
          _
      $region84: #{tpu_custom_call.1} parent=5 // pred_fallthru
        _
      %p2818 = scmp.le.s32.totalorder 2, %s25
      // Predicated region
      $region141: #{tpu_custom_call.1} parent=5 // pred_check
        %p2819 = pneg %p2818
      $region142: #{tpu_custom_call.1} parent=5 // pred_check_branch
        %2821 = sbr.rel (%p2819) target = $region144
      $region143: #{tpu_custom_call.1} parent=5 // pred_region
        %s2822 = ssub.s32 %s25, 2
      $region144: #{tpu_custom_call.1} parent=5 // pred_fallthru
        _
    $region6: #{tpu_custom_call.1} parent=1 // loop_footer
      %s29 = sadd.s32 1, %s25
    $region7: #{tpu_custom_call.1} parent=1 // loop_footer_branch
      %24 = sbr.rel target = $region3
    $region8: #{tpu_custom_call.1} parent=1 // loop_exit
      _
    %2823 = vsyncpa [#allocation5], 1
    %s2824 = scalar_lea.sflag [#allocation5], 1
    %2825 = vsyncpa %s2824, 1
    %2826 = vsyncpa [#allocation8], 1
    %2827 = vsyncpa [#allocation6], 1
    %s2828 = scalar_lea.sflag [#allocation6], 1
    %2829 = vsyncpa %s2828, 1

</llo_original>
